<compile_context>
chip_gen: v6e
topology: v6e:2x2x1
jax: 0.10.0
libtpu: 0.0.40
codegen_flags: <defaults>
</compile_context>

<pallas_src>
import numpy as np
import jax
import jax.numpy as jnp
from jax import lax
from jax.experimental import pallas as pl
from jax.experimental.pallas import tpu as pltpu

L_IN = 104          # chosen so the last conv output has length 7 (fc expects 7 features)
L_PAD = 128         # lane-padded input width
OUT_PAD = 128       # lane-padded output width (only column 0 is live)
TILE_M = 256        # batch rows per grid step (256-multiple suits v6e/v7x MXU; 128-mult on v5e)
NEG_SLOPE = 0.01    # PyTorch LeakyReLU default
EPS = 1e-5          # PyTorch BatchNorm default

# (Cin, Cout, K, stride, pad) for the four conv layers
CONV_CFG = [
    (1, 5, 10, 2, 4),
    (5, 10, 10, 2, 4),
    (10, 5, 5, 2, 2),
    (5, 1, 5, 2, 2),
]


def round_up(a, b):
    return ((a + b - 1) // b) * b


def conv_out_len(L, K, stride, pad):
    return (L + 2 * pad - K) // stride + 1


def conv_to_matrix(w, Lin, stride, pad):
    """Dense matrix M with flatten_cl(conv1d(x)) == flatten_cl(x) @ M.

    flatten_cl maps (C, L) -> C*L with index c*L + l (channel-major), matching
    PyTorch's x.view(N, -1)."""
    Cout, Cin, K = w.shape
    Lout = conv_out_len(Lin, K, stride, pad)
    M = np.zeros((Cin * Lin, Cout * Lout), dtype=np.float32)
    for o in range(Cout):
        for c in range(Cin):
            for j in range(Lout):
                for k in range(K):
                    i = stride * j + k - pad
                    if 0 <= i < Lin:
                        M[c * Lin + i, o * Lout + j] += float(w[o, c, k])
    return M, Lout


def init_params(key):
    """Deterministic synthetic parameters (shapes per TemperatureTcn.__init__)."""
    keys = jax.random.split(key, 6 * len(CONV_CFG) + 2)
    ki = iter(keys)
    convs = []
    for (cin, cout, k, s, p) in CONV_CFG:
        bound = 1.0 / np.sqrt(cin * k)
        w = jax.random.uniform(next(ki), (cout, cin, k), jnp.float32, -bound, bound)
        gamma = jax.random.uniform(next(ki), (cout,), jnp.float32, 0.5, 1.5)
        beta = 0.1 * jax.random.normal(next(ki), (cout,), jnp.float32)
        rmean = 0.1 * jax.random.normal(next(ki), (cout,), jnp.float32)
        rvar = jax.random.uniform(next(ki), (cout,), jnp.float32, 0.5, 1.5)
        convs.append(dict(
            w=np.asarray(w), gamma=np.asarray(gamma), beta=np.asarray(beta),
            mean=np.asarray(rmean), var=np.asarray(rvar), stride=s, pad=p))
    bound = 1.0 / np.sqrt(7.0)
    fc_w = np.asarray(jax.random.uniform(next(ki), (1, 7), jnp.float32, -bound, bound))
    fc_b = np.asarray(jax.random.uniform(next(ki), (1,), jnp.float32, -bound, bound))
    return convs, fc_w, fc_b


def build_operands(convs, fc_w, fc_b, weights_dtype=jnp.bfloat16):
    """Host-side parameter prep: lane-padded, BN-folded conv matrices + shifts + fc."""
    Lin = L_IN
    in_pad = L_PAD
    mats, shifts = [], []
    last_live = None
    for layer in convs:
        M, Lout = conv_to_matrix(layer["w"], Lin, layer["stride"], layer["pad"])
        cin_lin, cout_lout = M.shape
        out_pad = round_up(cout_lout, 128)
        sc = layer["gamma"] / np.sqrt(layer["var"] + EPS)   # BN scale
        sh = layer["beta"] - layer["mean"] * sc             # BN shift
        sc_col = np.repeat(sc, Lout).astype(np.float32)
        sh_col = np.repeat(sh, Lout).astype(np.float32)
        Mp = np.zeros((in_pad, out_pad), np.float32)
        Mp[:cin_lin, :cout_lout] = M * sc_col[None, :]      # fold BN scale into conv matrix
        Bp = np.zeros((1, out_pad), np.float32)
        Bp[0, :cout_lout] = sh_col
        mats.append(jnp.asarray(Mp, dtype=weights_dtype))   # matmul operand (maybe bf16)
        shifts.append(jnp.asarray(Bp))                      # shift stays f32 (added to f32 acc)
        Lin, in_pad, last_live = Lout, out_pad, cout_lout
    assert last_live == 7, "final conv output must flatten to 7 features"

    wfc_p = np.zeros((in_pad, OUT_PAD), np.float32)         # only column 0 live
    wfc_p[:7, 0] = np.asarray(fc_w, np.float32).reshape(-1)
    bfc_p = np.zeros((1, OUT_PAD), np.float32)
    bfc_p[0, 0] = float(np.asarray(fc_b).reshape(-1)[0])
    return mats, shifts, jnp.asarray(wfc_p, dtype=weights_dtype), jnp.asarray(bfc_p)


# ----------------------------- Pallas kernel -------------------------------

def tcn_kernel(x_ref,
               m1_ref, b1_ref, m2_ref, b2_ref, m3_ref, b3_ref, m4_ref, b4_ref,
               wfc_ref, bfc_ref, out_ref):
    def conv_bn_lrelu(h, m_ref, b_ref):
        # conv1d + BN scale as one MXU matmul (scale pre-folded), f32 accumulate,
        # then BN shift + LeakyReLU on the VPU.
        y = jnp.dot(h.astype(m_ref.dtype), m_ref[...],
                    preferred_element_type=jnp.float32)
        y = y + b_ref[...]
        return jnp.where(y >= 0.0, y, NEG_SLOPE * y)

    h = x_ref[...]                                   # (TILE_M, 128)   f32
    h = conv_bn_lrelu(h, m1_ref, b1_ref)             # (TILE_M, 384)   live 260
    h = conv_bn_lrelu(h, m2_ref, b2_ref)             # (TILE_M, 384)   live 260
    h = conv_bn_lrelu(h, m3_ref, b3_ref)             # (TILE_M, 128)   live 65
    h = conv_bn_lrelu(h, m4_ref, b4_ref)             # (TILE_M, 128)   live 7
    z = jnp.dot(h.astype(wfc_ref.dtype), wfc_ref[...],
                preferred_element_type=jnp.float32) + bfc_ref[...]
    e = jnp.exp(-z)                                  # EUP
    out_ref[...] = pl.reciprocal(1.0 + e, approx=True)  # sigmoid, approx rcp on EUP


@jax.jit
def temperature_tcn_forward(x, mats, shifts, wfc, bfc):
    N = x.shape[0]
    x_flat = x.reshape(N, -1).astype(jnp.float32)    # (N, C*L), C=1
    n_pad = round_up(max(N, 1), TILE_M)
    x_pad = jnp.zeros((n_pad, L_PAD), jnp.float32)
    x_pad = x_pad.at[:N, :x_flat.shape[1]].set(x_flat)

    operands = [x_pad]
    in_specs = [pl.BlockSpec((TILE_M, L_PAD), lambda i: (i, 0))]
    for m, b in zip(mats, shifts):
        operands += [m, b]
        # Weights/shifts: same block every grid step -> DMA'd once, VMEM resident.
        in_specs += [pl.BlockSpec(m.shape, lambda i: (0, 0)),
                     pl.BlockSpec(b.shape, lambda i: (0, 0))]
    operands += [wfc, bfc]
    in_specs += [pl.BlockSpec(wfc.shape, lambda i: (0, 0)),
                 pl.BlockSpec(bfc.shape, lambda i: (0, 0))]

    out = pl.pallas_call(
        tcn_kernel,
        out_shape=jax.ShapeDtypeStruct((n_pad, OUT_PAD), jnp.float32),
        grid_spec=pltpu.PrefetchScalarGridSpec(
            num_scalar_prefetch=0,
            grid=(n_pad // TILE_M,),
            in_specs=in_specs,
            out_specs=pl.BlockSpec((TILE_M, OUT_PAD), lambda i: (i, 0)),
        ),
        compiler_params=pltpu.CompilerParams(
            dimension_semantics=("parallel",)),
    )(*operands)
    # Live rows and live output column only; matches torch's `.squeeze()`.
    return out[:N, :1].squeeze()


# --------------------------- pure-JAX reference ----------------------------

def ref_forward(x, convs, fc_w, fc_b):
    h = x
    for layer in convs:
        h = lax.conv_general_dilated(
            h, jnp.asarray(layer["w"]),
            window_strides=(layer["stride"],),
            padding=[(layer["pad"], layer["pad"])],
            dimension_numbers=("NCH", "OIH", "NCH"))
        sc = layer["gamma"] / np.sqrt(layer["var"] + EPS)
        sh = layer["beta"] - layer["mean"] * sc
        h = h * jnp.asarray(sc)[None, :, None] + jnp.asarray(sh)[None, :, None]
        h = jnp.where(h >= 0.0, h, NEG_SLOPE * h)
    h = h.reshape(h.shape[0], -1)
    z = h @ jnp.asarray(fc_w.T) + jnp.asarray(fc_b)
    return jax.nn.sigmoid(z).squeeze()


if __name__ == "__main__":
    key = jax.random.PRNGKey(0)
    pkey, xkey1, xkey2 = jax.random.split(key, 3)

    convs, fc_w, fc_b = init_params(pkey)

    # Check 1: f32 weights, small batch (N=2) — verifies the conv-as-matmul /
    # BN-fold / padding transform exactly (tolerance only covers the approx
    # EUP reciprocal in the sigmoid, ~1e-4 relative).
    N1 = 2
    x1 = jax.random.normal(xkey1, (N1, 1, L_IN), jnp.float32)   # NCW, like PyTorch
    mats32, shifts32, wfc32, bfc32 = build_operands(convs, fc_w, fc_b,
                                                    weights_dtype=jnp.float32)
    out1 = jax.block_until_ready(temperature_tcn_forward(x1, mats32, shifts32, wfc32, bfc32))
    ref1 = ref_forward(x1, convs, fc_w, fc_b)
    np.testing.assert_allclose(np.asarray(out1), np.asarray(ref1), rtol=1e-3, atol=1e-4)

    # Check 2: bf16 weights, batch spanning two grid steps (N=300 -> 2 tiles of 256)
    # — exercises the parallel batch grid, resident weights, and the bf16 MXU path
    # (f32 accumulation), hence the looser tolerance.
    N2 = 300
    x2 = jax.random.normal(xkey2, (N2, 1, L_IN), jnp.float32)
    mats16, shifts16, wfc16, bfc16 = build_operands(convs, fc_w, fc_b,
                                                    weights_dtype=jnp.bfloat16)
    out2 = jax.block_until_ready(temperature_tcn_forward(x2, mats16, shifts16, wfc16, bfc16))
    ref2 = ref_forward(x2, convs, fc_w, fc_b)
    np.testing.assert_allclose(np.asarray(out2), np.asarray(ref2), rtol=2e-2, atol=2e-2)

    print("KERNEL_OK")
</pallas_src>

<mosaic_0001>
module attributes {stable_mosaic.version = 11 : i64} {
  func.func @tcn_kernel(%arg0: i32, %arg1: memref<256x128xf32, #tpu.memory_space<vmem>>, %arg2: memref<128x384xf32, #tpu.memory_space<vmem>>, %arg3: memref<1x384xf32, #tpu.memory_space<vmem>>, %arg4: memref<384x384xf32, #tpu.memory_space<vmem>>, %arg5: memref<1x384xf32, #tpu.memory_space<vmem>>, %arg6: memref<384x128xf32, #tpu.memory_space<vmem>>, %arg7: memref<1x128xf32, #tpu.memory_space<vmem>>, %arg8: memref<128x128xf32, #tpu.memory_space<vmem>>, %arg9: memref<1x128xf32, #tpu.memory_space<vmem>>, %arg10: memref<128x128xf32, #tpu.memory_space<vmem>>, %arg11: memref<1x128xf32, #tpu.memory_space<vmem>>, %arg12: memref<256x128xf32, #tpu.memory_space<vmem>>) attributes {dimension_semantics = [#tpu.dimension_semantics<parallel>], iteration_bounds = array<i64: 1>, scalar_prefetch = 0 : i64, scratch_operands = 0 : i64, tpu.core_type = #tpu.core_type<tc>, window_params = [{transform_indices = @transform_0, window_bounds = array<i64: 256, 128>}, {pipeline_mode = #tpu.pipeline_mode<synchronous>, transform_indices = @transform_1, window_bounds = array<i64: 128, 384>}, {pipeline_mode = #tpu.pipeline_mode<synchronous>, transform_indices = @transform_2, window_bounds = array<i64: 1, 384>}, {pipeline_mode = #tpu.pipeline_mode<synchronous>, transform_indices = @transform_3, window_bounds = array<i64: 384, 384>}, {pipeline_mode = #tpu.pipeline_mode<synchronous>, transform_indices = @transform_4, window_bounds = array<i64: 1, 384>}, {pipeline_mode = #tpu.pipeline_mode<synchronous>, transform_indices = @transform_5, window_bounds = array<i64: 384, 128>}, {pipeline_mode = #tpu.pipeline_mode<synchronous>, transform_indices = @transform_6, window_bounds = array<i64: 1, 128>}, {pipeline_mode = #tpu.pipeline_mode<synchronous>, transform_indices = @transform_7, window_bounds = array<i64: 128, 128>}, {pipeline_mode = #tpu.pipeline_mode<synchronous>, transform_indices = @transform_8, window_bounds = array<i64: 1, 128>}, {pipeline_mode = #tpu.pipeline_mode<synchronous>, transform_indices = @transform_9, window_bounds = array<i64: 128, 128>}, {pipeline_mode = #tpu.pipeline_mode<synchronous>, transform_indices = @transform_10, window_bounds = array<i64: 1, 128>}, {transform_indices = @transform_11, window_bounds = array<i64: 256, 128>}]} {
    %c0 = arith.constant 0 : index
    %c0_0 = arith.constant 0 : index
    %0 = vector.load %arg1[%c0, %c0_0] : memref<256x128xf32, #tpu.memory_space<vmem>>, vector<256x128xf32>
    %c0_1 = arith.constant 0 : index
    %c0_2 = arith.constant 0 : index
    %1 = vector.load %arg2[%c0_1, %c0_2] : memref<128x384xf32, #tpu.memory_space<vmem>>, vector<128x384xf32>
    %cst = arith.constant dense<0.000000e+00> : vector<256x384xf32>
    %2 = tpu.matmul %0, %1, %cst {dimension_numbers = #tpu.dot_dimension_numbers<[1], [0], [0], [1], [0, 0, 1, 1], [], []>} : vector<256x128xf32>, vector<128x384xf32>, vector<256x384xf32> -> vector<256x384xf32>
    %c0_3 = arith.constant 0 : index
    %c0_4 = arith.constant 0 : index
    %3 = vector.load %arg3[%c0_3, %c0_4] : memref<1x384xf32, #tpu.memory_space<vmem>>, vector<1x384xf32>
    %4 = vector.broadcast %3 : vector<1x384xf32> to vector<256x384xf32>
    %5 = arith.addf %2, %4 : vector<256x384xf32>
    %cst_5 = arith.constant 0.000000e+00 : f32
    %6 = vector.broadcast %cst_5 : f32 to vector<256x384xf32>
    %7 = arith.cmpf oge, %5, %6 : vector<256x384xf32>
    %cst_6 = arith.constant 0.00999999977 : f32
    %8 = vector.broadcast %cst_6 : f32 to vector<256x384xf32>
    %9 = arith.mulf %8, %5 : vector<256x384xf32>
    %10 = arith.select %7, %5, %9 : vector<256x384xi1>, vector<256x384xf32>
    %c0_7 = arith.constant 0 : index
    %c0_8 = arith.constant 0 : index
    %11 = vector.load %arg4[%c0_7, %c0_8] : memref<384x384xf32, #tpu.memory_space<vmem>>, vector<384x384xf32>
    %cst_9 = arith.constant dense<0.000000e+00> : vector<256x384xf32>
    %12 = tpu.matmul %10, %11, %cst_9 {dimension_numbers = #tpu.dot_dimension_numbers<[1], [0], [0], [1], [0, 0, 1, 1], [], []>} : vector<256x384xf32>, vector<384x384xf32>, vector<256x384xf32> -> vector<256x384xf32>
    %c0_10 = arith.constant 0 : index
    %c0_11 = arith.constant 0 : index
    %13 = vector.load %arg5[%c0_10, %c0_11] : memref<1x384xf32, #tpu.memory_space<vmem>>, vector<1x384xf32>
    %14 = vector.broadcast %13 : vector<1x384xf32> to vector<256x384xf32>
    %15 = arith.addf %12, %14 : vector<256x384xf32>
    %cst_12 = arith.constant 0.000000e+00 : f32
    %16 = vector.broadcast %cst_12 : f32 to vector<256x384xf32>
    %17 = arith.cmpf oge, %15, %16 : vector<256x384xf32>
    %cst_13 = arith.constant 0.00999999977 : f32
    %18 = vector.broadcast %cst_13 : f32 to vector<256x384xf32>
    %19 = arith.mulf %18, %15 : vector<256x384xf32>
    %20 = arith.select %17, %15, %19 : vector<256x384xi1>, vector<256x384xf32>
    %c0_14 = arith.constant 0 : index
    %c0_15 = arith.constant 0 : index
    %21 = vector.load %arg6[%c0_14, %c0_15] : memref<384x128xf32, #tpu.memory_space<vmem>>, vector<384x128xf32>
    %cst_16 = arith.constant dense<0.000000e+00> : vector<256x128xf32>
    %22 = tpu.matmul %20, %21, %cst_16 {dimension_numbers = #tpu.dot_dimension_numbers<[1], [0], [0], [1], [0, 0, 1, 1], [], []>} : vector<256x384xf32>, vector<384x128xf32>, vector<256x128xf32> -> vector<256x128xf32>
    %c0_17 = arith.constant 0 : index
    %c0_18 = arith.constant 0 : index
    %23 = vector.load %arg7[%c0_17, %c0_18] : memref<1x128xf32, #tpu.memory_space<vmem>>, vector<1x128xf32>
    %24 = vector.broadcast %23 : vector<1x128xf32> to vector<256x128xf32>
    %25 = arith.addf %22, %24 : vector<256x128xf32>
    %cst_19 = arith.constant 0.000000e+00 : f32
    %26 = vector.broadcast %cst_19 : f32 to vector<256x128xf32>
    %27 = arith.cmpf oge, %25, %26 : vector<256x128xf32>
    %cst_20 = arith.constant 0.00999999977 : f32
    %28 = vector.broadcast %cst_20 : f32 to vector<256x128xf32>
    %29 = arith.mulf %28, %25 : vector<256x128xf32>
    %30 = arith.select %27, %25, %29 : vector<256x128xi1>, vector<256x128xf32>
    %c0_21 = arith.constant 0 : index
    %c0_22 = arith.constant 0 : index
    %31 = vector.load %arg8[%c0_21, %c0_22] : memref<128x128xf32, #tpu.memory_space<vmem>>, vector<128x128xf32>
    %cst_23 = arith.constant dense<0.000000e+00> : vector<256x128xf32>
    %32 = tpu.matmul %30, %31, %cst_23 {dimension_numbers = #tpu.dot_dimension_numbers<[1], [0], [0], [1], [0, 0, 1, 1], [], []>} : vector<256x128xf32>, vector<128x128xf32>, vector<256x128xf32> -> vector<256x128xf32>
    %c0_24 = arith.constant 0 : index
    %c0_25 = arith.constant 0 : index
    %33 = vector.load %arg9[%c0_24, %c0_25] : memref<1x128xf32, #tpu.memory_space<vmem>>, vector<1x128xf32>
    %34 = vector.broadcast %33 : vector<1x128xf32> to vector<256x128xf32>
    %35 = arith.addf %32, %34 : vector<256x128xf32>
    %cst_26 = arith.constant 0.000000e+00 : f32
    %36 = vector.broadcast %cst_26 : f32 to vector<256x128xf32>
    %37 = arith.cmpf oge, %35, %36 : vector<256x128xf32>
    %cst_27 = arith.constant 0.00999999977 : f32
    %38 = vector.broadcast %cst_27 : f32 to vector<256x128xf32>
    %39 = arith.mulf %38, %35 : vector<256x128xf32>
    %40 = arith.select %37, %35, %39 : vector<256x128xi1>, vector<256x128xf32>
    %c0_28 = arith.constant 0 : index
    %c0_29 = arith.constant 0 : index
    %41 = vector.load %arg10[%c0_28, %c0_29] : memref<128x128xf32, #tpu.memory_space<vmem>>, vector<128x128xf32>
    %cst_30 = arith.constant dense<0.000000e+00> : vector<256x128xf32>
    %42 = tpu.matmul %40, %41, %cst_30 {dimension_numbers = #tpu.dot_dimension_numbers<[1], [0], [0], [1], [0, 0, 1, 1], [], []>} : vector<256x128xf32>, vector<128x128xf32>, vector<256x128xf32> -> vector<256x128xf32>
    %c0_31 = arith.constant 0 : index
    %c0_32 = arith.constant 0 : index
    %43 = vector.load %arg11[%c0_31, %c0_32] : memref<1x128xf32, #tpu.memory_space<vmem>>, vector<1x128xf32>
    %44 = vector.broadcast %43 : vector<1x128xf32> to vector<256x128xf32>
    %45 = arith.addf %42, %44 : vector<256x128xf32>
    %cst_33 = arith.constant 0.000000e+00 : f32
    %46 = vector.broadcast %cst_33 : f32 to vector<256x128xf32>
    %47 = arith.subf %46, %45 : vector<256x128xf32>
    %48 = math.exp %47 : vector<256x128xf32>
    %cst_34 = arith.constant 1.000000e+00 : f32
    %49 = vector.broadcast %cst_34 : f32 to vector<256x128xf32>
    %50 = arith.addf %49, %48 : vector<256x128xf32>
    %51 = tpu.reciprocal %50 {approx = true} : vector<256x128xf32> -> vector<256x128xf32>
    %c0_35 = arith.constant 0 : index
    %c0_36 = arith.constant 0 : index
    %52 = vector.load %arg12[%c0_35, %c0_36] : memref<256x128xf32, #tpu.memory_space<vmem>>, vector<256x128xf32>
    tpu.vector_store %arg12[%c0_35, %c0_36], %51 {strides = array<i32>} : memref<256x128xf32, #tpu.memory_space<vmem>>, vector<256x128xf32>,
    return
  }
  func.func @transform_0(%arg0: i32) -> (i32, i32) {
    %c0_i32 = arith.constant 0 : i32
    %c0_i32_0 = arith.constant 0 : i32
    return %arg0, %c0_i32 : i32, i32
  }
  func.func @transform_1(%arg0: i32) -> (i32, i32) {
    %c0_i32 = arith.constant 0 : i32
    %c0_i32_0 = arith.constant 0 : i32
    %c0_i32_1 = arith.constant 0 : i32
    return %c0_i32, %c0_i32_0 : i32, i32
  }
  func.func @transform_2(%arg0: i32) -> (i32, i32) {
    %c0_i32 = arith.constant 0 : i32
    %c0_i32_0 = arith.constant 0 : i32
    %c0_i32_1 = arith.constant 0 : i32
    return %c0_i32, %c0_i32_0 : i32, i32
  }
  func.func @transform_3(%arg0: i32) -> (i32, i32) {
    %c0_i32 = arith.constant 0 : i32
    %c0_i32_0 = arith.constant 0 : i32
    %c0_i32_1 = arith.constant 0 : i32
    return %c0_i32, %c0_i32_0 : i32, i32
  }
  func.func @transform_4(%arg0: i32) -> (i32, i32) {
    %c0_i32 = arith.constant 0 : i32
    %c0_i32_0 = arith.constant 0 : i32
    %c0_i32_1 = arith.constant 0 : i32
    return %c0_i32, %c0_i32_0 : i32, i32
  }
  func.func @transform_5(%arg0: i32) -> (i32, i32) {
    %c0_i32 = arith.constant 0 : i32
    %c0_i32_0 = arith.constant 0 : i32
    %c0_i32_1 = arith.constant 0 : i32
    return %c0_i32, %c0_i32_0 : i32, i32
  }
  func.func @transform_6(%arg0: i32) -> (i32, i32) {
    %c0_i32 = arith.constant 0 : i32
    %c0_i32_0 = arith.constant 0 : i32
    %c0_i32_1 = arith.constant 0 : i32
    return %c0_i32, %c0_i32_0 : i32, i32
  }
  func.func @transform_7(%arg0: i32) -> (i32, i32) {
    %c0_i32 = arith.constant 0 : i32
    %c0_i32_0 = arith.constant 0 : i32
    %c0_i32_1 = arith.constant 0 : i32
    return %c0_i32, %c0_i32_0 : i32, i32
  }
  func.func @transform_8(%arg0: i32) -> (i32, i32) {
    %c0_i32 = arith.constant 0 : i32
    %c0_i32_0 = arith.constant 0 : i32
    %c0_i32_1 = arith.constant 0 : i32
    return %c0_i32, %c0_i32_0 : i32, i32
  }
  func.func @transform_9(%arg0: i32) -> (i32, i32) {
    %c0_i32 = arith.constant 0 : i32
    %c0_i32_0 = arith.constant 0 : i32
    %c0_i32_1 = arith.constant 0 : i32
    return %c0_i32, %c0_i32_0 : i32, i32
  }
  func.func @transform_10(%arg0: i32) -> (i32, i32) {
    %c0_i32 = arith.constant 0 : i32
    %c0_i32_0 = arith.constant 0 : i32
    %c0_i32_1 = arith.constant 0 : i32
    return %c0_i32, %c0_i32_0 : i32, i32
  }
  func.func @transform_11(%arg0: i32) -> (i32, i32) {
    %c0_i32 = arith.constant 0 : i32
    %c0_i32_0 = arith.constant 0 : i32
    return %arg0, %c0_i32 : i32, i32
  }
}

</mosaic_0001>

<llo_original>
// kernel: temperature_tcn_forward.1
$region0: #{temperature_tcn_forward.1}
  #allocation0 [shape = 'u32[]', space=smem, size = 0x4, offset = 0x4, fixed_abs, tag = 'smem constant byte address 0x4 - core index']
  #allocation1 [shape = 'u32[144,128]{1,0:T(1,128)}', space=vmem, size = 0x12000, scoped, tag = 'internal scratch']
  %s0 = inlined_call_operand.vmem [shape: f32[256,128], index: 0, kind: input, shape index: {}]
  %s1 = inlined_call_operand.hbm [shape: f32[128,384], index: 1, kind: input, shape index: {}]
  %s2 = inlined_call_operand.vmem [shape: f32[1,384], index: 2, kind: input, shape index: {}]
  %s3 = inlined_call_operand.hbm [shape: f32[384,384], index: 3, kind: input, shape index: {}]
  %s4 = inlined_call_operand.vmem [shape: f32[1,384], index: 4, kind: input, shape index: {}]
  %s5 = inlined_call_operand.hbm [shape: f32[384,128], index: 5, kind: input, shape index: {}]
  %s6 = inlined_call_operand.vmem [shape: f32[1,128], index: 6, kind: input, shape index: {}]
  %s7 = inlined_call_operand.vmem [shape: f32[128,128], index: 7, kind: input, shape index: {}]
  %s8 = inlined_call_operand.vmem [shape: f32[1,128], index: 8, kind: input, shape index: {}]
  %s9 = inlined_call_operand.vmem [shape: f32[128,128], index: 9, kind: input, shape index: {}]
  %s10 = inlined_call_operand.vmem [shape: f32[1,128], index: 10, kind: input, shape index: {}]
  %s11 = inlined_call_operand.vmem [shape: f32[256,128], index: 11, kind: output, shape index: {}]
  %s12 = sld [smem:[#allocation0]]
  $region66: #{temperature_tcn_forward.1} parent=0
    _
  %s14 = ssub.s32 1, %s12
  %s15 = scalar_select 0, %s14, %s12
  $region1: #{temperature_tcn_forward.1} parent=0
    #allocation2 [shape = 'u8[196608]{0}', space=vmem, size = 0x30000, scoped, tag = 'input window, operand 1, single buffered']
    #allocation3 [shape = 's32[1]{0}', space=sflag, size = 0x4, scoped, tag = 'scoped memory for temperature_tcn_forward.1']
    #allocation4 [shape = 'u8[589824]{0}', space=vmem, size = 0x90000, scoped, tag = 'input window, operand 3, single buffered']
    #allocation5 [shape = 's32[1]{0}', space=sflag, size = 0x4, scoped, tag = 'scoped memory for temperature_tcn_forward.1']
    #allocation6 [shape = 'u8[196608]{0}', space=vmem, size = 0x30000, scoped, tag = 'input window, operand 5, single buffered']
    %16 = vsyncpa [#allocation3], 0
    %17 = vsyncpa [#allocation5], 0
    // Predicated region
    $region2: #{temperature_tcn_forward.1} parent=1 // pred_check
      _
    $region3: #{temperature_tcn_forward.1} parent=1 // pred_check_branch
      %19 = sbr.rel (0) target = $region5
    $region4: #{temperature_tcn_forward.1} parent=1 // pred_region
      _
    $region5: #{temperature_tcn_forward.1} parent=1 // pred_fallthru
      _
    // Predicated region
    $region6: #{temperature_tcn_forward.1} parent=1 // pred_check
      _
    $region7: #{temperature_tcn_forward.1} parent=1 // pred_check_branch
      %21 = sbr.rel (0) target = $region9
    $region8: #{temperature_tcn_forward.1} parent=1 // pred_region
      %s23 = ssub.s32 6144, 6144
      %24 = vsyncadd [#allocation3], %s23
      %s25 = sshll.u32 [#allocation2], 4
      %s26 = int_to_ptr.vmem [resolvable:$true] %s25
      %31 = dma.hbm_to_vmem [thread:$0]  %s1, 6144, %s26, [#allocation3], 384, 384, 24
    $region9: #{temperature_tcn_forward.1} parent=1 // pred_fallthru
      _
    // Predicated region
    $region10: #{temperature_tcn_forward.1} parent=1 // pred_check
      _
    $region11: #{temperature_tcn_forward.1} parent=1 // pred_check_branch
      %33 = sbr.rel (0) target = $region13
    $region12: #{temperature_tcn_forward.1} parent=1 // pred_region
      _
    $region13: #{temperature_tcn_forward.1} parent=1 // pred_fallthru
      _
    // Predicated region
    $region14: #{temperature_tcn_forward.1} parent=1 // pred_check
      _
    $region15: #{temperature_tcn_forward.1} parent=1 // pred_check_branch
      %35 = sbr.rel (0) target = $region17
    $region16: #{temperature_tcn_forward.1} parent=1 // pred_region
      %s37 = ssub.s32 18432, 18432
      %38 = vsyncadd [#allocation5], %s37
      %s39 = sshll.u32 [#allocation4], 4
      %s40 = int_to_ptr.vmem [resolvable:$true] %s39
      %45 = dma.hbm_to_vmem [thread:$0]  %s3, 18432, %s40, [#allocation5], 384, 384, 24
    $region17: #{temperature_tcn_forward.1} parent=1 // pred_fallthru
      _
    // Predicated region
    $region18: #{temperature_tcn_forward.1} parent=1 // pred_check
      _
    $region19: #{temperature_tcn_forward.1} parent=1 // pred_check_branch
      %47 = sbr.rel (0) target = $region21
    $region20: #{temperature_tcn_forward.1} parent=1 // pred_region
      _
    $region21: #{temperature_tcn_forward.1} parent=1 // pred_fallthru
      _
    // Predicated region
    $region22: #{temperature_tcn_forward.1} parent=1 // pred_check
      _
    $region23: #{temperature_tcn_forward.1} parent=1 // pred_check_branch
      %49 = sbr.rel (0) target = $region25
    $region24: #{temperature_tcn_forward.1} parent=1 // pred_region
      %s51 = ssub.s32 6144, 6144
      %52 = vsyncadd [#allocation5], %s51
      %s53 = sshll.u32 [#allocation6], 4
      %s54 = int_to_ptr.vmem [resolvable:$true] %s53
      %59 = dma.hbm_to_vmem [thread:$0]  %s5, 6144, %s54, [#allocation5], 128, 128, 8
    $region25: #{temperature_tcn_forward.1} parent=1 // pred_fallthru
      _
    // Predicated region
    $region26: #{temperature_tcn_forward.1} parent=1 // pred_check
      _
    $region27: #{temperature_tcn_forward.1} parent=1 // pred_check_branch
      %61 = sbr.rel (0) target = $region29
    $region28: #{temperature_tcn_forward.1} parent=1 // pred_region
      _
    $region29: #{temperature_tcn_forward.1} parent=1 // pred_fallthru
      _
    // Predicated region
    $region30: #{temperature_tcn_forward.1} parent=1 // pred_check
      _
    $region31: #{temperature_tcn_forward.1} parent=1 // pred_check_branch
      %63 = sbr.rel (0) target = $region33
    $region32: #{temperature_tcn_forward.1} parent=1 // pred_region
      _
    $region33: #{temperature_tcn_forward.1} parent=1 // pred_fallthru
      _
    // Predicated region
    $region34: #{temperature_tcn_forward.1} parent=1 // pred_check
      _
    $region35: #{temperature_tcn_forward.1} parent=1 // pred_check_branch
      %65 = sbr.rel (0) target = $region37
    $region36: #{temperature_tcn_forward.1} parent=1 // pred_region
      _
    $region37: #{temperature_tcn_forward.1} parent=1 // pred_fallthru
      _
    // Predicated region
    $region38: #{temperature_tcn_forward.1} parent=1 // pred_check
      _
    $region39: #{temperature_tcn_forward.1} parent=1 // pred_check_branch
      %67 = sbr.rel (0) target = $region41
    $region40: #{temperature_tcn_forward.1} parent=1 // pred_region
      _
    $region41: #{temperature_tcn_forward.1} parent=1 // pred_fallthru
      _
    // Predicated region
    $region42: #{temperature_tcn_forward.1} parent=1 // pred_check
      _
    $region43: #{temperature_tcn_forward.1} parent=1 // pred_check_branch
      %69 = sbr.rel (0) target = $region45
    $region44: #{temperature_tcn_forward.1} parent=1 // pred_region
      _
    $region45: #{temperature_tcn_forward.1} parent=1 // pred_fallthru
      _
    // Predicated region
    $region46: #{temperature_tcn_forward.1} parent=1 // pred_check
      _
    $region47: #{temperature_tcn_forward.1} parent=1 // pred_check_branch
      %71 = sbr.rel (0) target = $region49
    $region48: #{temperature_tcn_forward.1} parent=1 // pred_region
      %72 = dma.done [#allocation3], 6144
    $region49: #{temperature_tcn_forward.1} parent=1 // pred_fallthru
      _
    // Predicated region
    $region50: #{temperature_tcn_forward.1} parent=1 // pred_check
      _
    $region51: #{temperature_tcn_forward.1} parent=1 // pred_check_branch
      %74 = sbr.rel (0) target = $region53
    $region52: #{temperature_tcn_forward.1} parent=1 // pred_region
      %75 = dma.done [#allocation5], 18432
    $region53: #{temperature_tcn_forward.1} parent=1 // pred_fallthru
      _
    // Predicated region
    $region54: #{temperature_tcn_forward.1} parent=1 // pred_check
      _
    $region55: #{temperature_tcn_forward.1} parent=1 // pred_check_branch
      %77 = sbr.rel (0) target = $region57
    $region56: #{temperature_tcn_forward.1} parent=1 // pred_region
      %78 = dma.done [#allocation5], 6144
    $region57: #{temperature_tcn_forward.1} parent=1 // pred_fallthru
      _
    %v79 = vld [vmem:[%s0] sm:$0xff]
    %v80 = vld [vmem:[%s0 + $0x8] sm:$0xff]
    %v81 = vld [vmem:[%s0 + $0x10] sm:$0xff]
    %v82 = vld [vmem:[%s0 + $0x18] sm:$0xff]
    %v83 = vld [vmem:[%s0 + $0x20] sm:$0xff]
    %v84 = vld [vmem:[%s0 + $0x28] sm:$0xff]
    %v85 = vld [vmem:[%s0 + $0x30] sm:$0xff]
    %v86 = vld [vmem:[%s0 + $0x38] sm:$0xff]
    %v87 = vld [vmem:[%s0 + $0x40] sm:$0xff]
    %v88 = vld [vmem:[%s0 + $0x48] sm:$0xff]
    %v89 = vld [vmem:[%s0 + $0x50] sm:$0xff]
    %v90 = vld [vmem:[%s0 + $0x58] sm:$0xff]
    %v91 = vld [vmem:[%s0 + $0x60] sm:$0xff]
    %v92 = vld [vmem:[%s0 + $0x68] sm:$0xff]
    %v93 = vld [vmem:[%s0 + $0x70] sm:$0xff]
    %v94 = vld [vmem:[%s0 + $0x78] sm:$0xff]
    %v95 = vld [vmem:[%s0 + $0x80] sm:$0xff]
    %v96 = vld [vmem:[%s0 + $0x88] sm:$0xff]
    %v97 = vld [vmem:[%s0 + $0x90] sm:$0xff]
    %v98 = vld [vmem:[%s0 + $0x98] sm:$0xff]
    %v99 = vld [vmem:[%s0 + $0xa0] sm:$0xff]
    %v100 = vld [vmem:[%s0 + $0xa8] sm:$0xff]
    %v101 = vld [vmem:[%s0 + $0xb0] sm:$0xff]
    %v102 = vld [vmem:[%s0 + $0xb8] sm:$0xff]
    %v103 = vld [vmem:[%s0 + $0xc0] sm:$0xff]
    %v104 = vld [vmem:[%s0 + $0xc8] sm:$0xff]
    %v105 = vld [vmem:[%s0 + $0xd0] sm:$0xff]
    %v106 = vld [vmem:[%s0 + $0xd8] sm:$0xff]
    %v107 = vld [vmem:[%s0 + $0xe0] sm:$0xff]
    %v108 = vld [vmem:[%s0 + $0xe8] sm:$0xff]
    %v109 = vld [vmem:[%s0 + $0xf0] sm:$0xff]
    %v110 = vld [vmem:[%s0 + $0xf8] sm:$0xff]
    %v111 = vld [vmem:[#allocation2] sm:$0xff]
    %v112 = vld [vmem:[#allocation2 + $0x8] sm:$0xff]
    %v113 = vld [vmem:[#allocation2 + $0x10] sm:$0xff]
    %v114 = vld [vmem:[#allocation2 + $0x18] sm:$0xff]
    %v115 = vld [vmem:[#allocation2 + $0x20] sm:$0xff]
    %v116 = vld [vmem:[#allocation2 + $0x28] sm:$0xff]
    %v117 = vld [vmem:[#allocation2 + $0x30] sm:$0xff]
    %v118 = vld [vmem:[#allocation2 + $0x38] sm:$0xff]
    %v119 = vld [vmem:[#allocation2 + $0x40] sm:$0xff]
    %v120 = vld [vmem:[#allocation2 + $0x48] sm:$0xff]
    %v121 = vld [vmem:[#allocation2 + $0x50] sm:$0xff]
    %v122 = vld [vmem:[#allocation2 + $0x58] sm:$0xff]
    %v123 = vld [vmem:[#allocation2 + $0x60] sm:$0xff]
    %v124 = vld [vmem:[#allocation2 + $0x68] sm:$0xff]
    %v125 = vld [vmem:[#allocation2 + $0x70] sm:$0xff]
    %v126 = vld [vmem:[#allocation2 + $0x78] sm:$0xff]
    %v127 = vld [vmem:[#allocation2 + $0x80] sm:$0xff]
    %v128 = vld [vmem:[#allocation2 + $0x88] sm:$0xff]
    %v129 = vld [vmem:[#allocation2 + $0x90] sm:$0xff]
    %v130 = vld [vmem:[#allocation2 + $0x98] sm:$0xff]
    %v131 = vld [vmem:[#allocation2 + $0xa0] sm:$0xff]
    %v132 = vld [vmem:[#allocation2 + $0xa8] sm:$0xff]
    %v133 = vld [vmem:[#allocation2 + $0xb0] sm:$0xff]
    %v134 = vld [vmem:[#allocation2 + $0xb8] sm:$0xff]
    %v135 = vld [vmem:[#allocation2 + $0xc0] sm:$0xff]
    %v136 = vld [vmem:[#allocation2 + $0xc8] sm:$0xff]
    %v137 = vld [vmem:[#allocation2 + $0xd0] sm:$0xff]
    %v138 = vld [vmem:[#allocation2 + $0xd8] sm:$0xff]
    %v139 = vld [vmem:[#allocation2 + $0xe0] sm:$0xff]
    %v140 = vld [vmem:[#allocation2 + $0xe8] sm:$0xff]
    %v141 = vld [vmem:[#allocation2 + $0xf0] sm:$0xff]
    %v142 = vld [vmem:[#allocation2 + $0xf8] sm:$0xff]
    %v143 = vld [vmem:[#allocation2 + $0x100] sm:$0xff]
    %v144 = vld [vmem:[#allocation2 + $0x108] sm:$0xff]
    %v145 = vld [vmem:[#allocation2 + $0x110] sm:$0xff]
    %v146 = vld [vmem:[#allocation2 + $0x118] sm:$0xff]
    %v147 = vld [vmem:[#allocation2 + $0x120] sm:$0xff]
    %v148 = vld [vmem:[#allocation2 + $0x128] sm:$0xff]
    %v149 = vld [vmem:[#allocation2 + $0x130] sm:$0xff]
    %v150 = vld [vmem:[#allocation2 + $0x138] sm:$0xff]
    %v151 = vld [vmem:[#allocation2 + $0x140] sm:$0xff]
    %v152 = vld [vmem:[#allocation2 + $0x148] sm:$0xff]
    %v153 = vld [vmem:[#allocation2 + $0x150] sm:$0xff]
    %v154 = vld [vmem:[#allocation2 + $0x158] sm:$0xff]
    %v155 = vld [vmem:[#allocation2 + $0x160] sm:$0xff]
    %v156 = vld [vmem:[#allocation2 + $0x168] sm:$0xff]
    %v157 = vld [vmem:[#allocation2 + $0x170] sm:$0xff]
    %v158 = vld [vmem:[#allocation2 + $0x178] sm:$0xff]
    %v159 = vld [vmem:[%s2] sm:$0x7]
    %v161 = vlaneseq
    %v162 = vshrl.u32 %v161, 7
    %v163 = vsub.s32 0, %v162
    %v164 = vrot.slane %v159, %v163
    %v165 = vlaneseq
    %v166 = vshrl.u32 %v165, 7
    %v167 = vsub.s32 1, %v166
    %v168 = vrot.slane %v159, %v167
    %v169 = vlaneseq
    %v170 = vshrl.u32 %v169, 7
    %v171 = vsub.s32 2, %v170
    %v172 = vrot.slane %v159, %v171
    %176 = vmatprep.subr.mxu0 %v157
    %177 = vmatpush1.msra.mxu0 %v156
    %178 = vmatprep.subr.mxu0 %v154
    %179 = vmatpush1.msra.mxu0 %v153
    %180 = vmatprep.subr.mxu0 %v151
    %181 = vmatpush1.msra.mxu0 %v150
    %182 = vmatprep.subr.mxu0 %v148
    %183 = vmatpush1.msra.mxu0 %v147
    %184 = vmatprep.subr.mxu0 %v145
    %185 = vmatpush1.msra.mxu0 %v144
    %186 = vmatprep.subr.mxu0 %v142
    %187 = vmatpush1.msra.mxu0 %v141
    %188 = vmatprep.subr.mxu0 %v139
    %189 = vmatpush1.msra.mxu0 %v138
    %190 = vmatprep.subr.mxu0 %v136
    %191 = vmatpush1.msra.mxu0 %v135
    %192 = vmatprep.subr.mxu0 %v133
    %193 = vmatpush1.msra.mxu0 %v132
    %194 = vmatprep.subr.mxu0 %v130
    %195 = vmatpush1.msra.mxu0 %v129
    %196 = vmatprep.subr.mxu0 %v127
    %197 = vmatpush1.msra.mxu0 %v126
    %198 = vmatprep.subr.mxu0 %v124
    %199 = vmatpush1.msra.mxu0 %v123
    %200 = vmatprep.subr.mxu0 %v121
    %201 = vmatpush1.msra.mxu0 %v120
    %202 = vmatprep.subr.mxu0 %v118
    %203 = vmatpush1.msra.mxu0 %v117
    %204 = vmatprep.subr.mxu0 %v115
    %205 = vmatpush1.msra.mxu0 %v114
    %206 = vmatprep.subr.mxu0 %v112
    %207 = vmatpush1.msra.mxu0 %v111
    %208 = vmatprep.subr.mxu0 0.0
    %209 = vmatpush2.msra.mxu0 0.0
    %210 = vmatprep.subr.mxu0 0.0
    %211 = vmatpush2.msra.mxu0 0.0
    %212 = vmatprep.subr.mxu0 0.0
    %213 = vmatpush2.msra.mxu0 0.0
    %214 = vmatprep.subr.mxu0 0.0
    %215 = vmatpush2.msra.mxu0 0.0
    %216 = vmatprep.subr.mxu0 0.0
    %217 = vmatpush2.msra.mxu0 0.0
    %218 = vmatprep.subr.mxu0 0.0
    %219 = vmatpush2.msra.mxu0 0.0
    %220 = vmatprep.subr.mxu0 0.0
    %221 = vmatpush2.msra.mxu0 0.0
    %222 = vmatprep.subr.mxu0 0.0
    %223 = vmatpush2.msra.mxu0 0.0
    %224 = vmatprep.subr.mxu0 0.0
    %225 = vmatpush2.msra.mxu0 0.0
    %226 = vmatprep.subr.mxu0 0.0
    %227 = vmatpush2.msra.mxu0 0.0
    %228 = vmatprep.subr.mxu0 0.0
    %229 = vmatpush2.msra.mxu0 0.0
    %230 = vmatprep.subr.mxu0 0.0
    %231 = vmatpush2.msra.mxu0 0.0
    %232 = vmatprep.subr.mxu0 0.0
    %233 = vmatpush2.msra.mxu0 0.0
    %234 = vmatprep.subr.mxu0 0.0
    %235 = vmatpush2.msra.mxu0 0.0
    %236 = vmatprep.subr.mxu0 0.0
    %237 = vmatpush2.msra.mxu0 0.0
    %238 = vmatprep.subr.mxu0 0.0
    %239 = vmatpush2.msra.mxu0 0.0
    %240 = vmatprep.mubr.f32.mxu0 0.0
    %241 = vmatmul.mubr.f32.gmra.mxu0 %v79
    %v242 = vpop.f32.mrf.mxu0
    %v243 = vadd.f32 %v164, %v242
    %v244 = vpop.f32.mrf.mxu0
    %v245 = vadd.f32 %v168, %v244
    %246 = vmatprep.mubr.f32.mxu0 0.0
    %247 = vmatmul.mubr.f32.gmra.mxu0 %v80
    %v248 = vpop.f32.mrf.mxu0
    %v249 = vadd.f32 %v164, %v248
    %v250 = vpop.f32.mrf.mxu0
    %v251 = vadd.f32 %v168, %v250
    %252 = vmatprep.mubr.f32.mxu0 0.0
    %253 = vmatmul.mubr.f32.gmra.mxu0 %v81
    %v254 = vpop.f32.mrf.mxu0
    %v255 = vadd.f32 %v164, %v254
    %v256 = vpop.f32.mrf.mxu0
    %v257 = vadd.f32 %v168, %v256
    %258 = vmatprep.mubr.f32.mxu0 0.0
    %259 = vmatmul.mubr.f32.gmra.mxu0 %v82
    %v260 = vpop.f32.mrf.mxu0
    %v261 = vadd.f32 %v164, %v260
    %v262 = vpop.f32.mrf.mxu0
    %v263 = vadd.f32 %v168, %v262
    %264 = vmatprep.mubr.f32.mxu0 0.0
    %265 = vmatmul.mubr.f32.gmra.mxu0 %v83
    %v266 = vpop.f32.mrf.mxu0
    %v267 = vadd.f32 %v164, %v266
    %v268 = vpop.f32.mrf.mxu0
    %v269 = vadd.f32 %v168, %v268
    %270 = vmatprep.mubr.f32.mxu0 0.0
    %271 = vmatmul.mubr.f32.gmra.mxu0 %v84
    %v272 = vpop.f32.mrf.mxu0
    %v273 = vadd.f32 %v164, %v272
    %v274 = vpop.f32.mrf.mxu0
    %v275 = vadd.f32 %v168, %v274
    %276 = vmatprep.mubr.f32.mxu0 0.0
    %277 = vmatmul.mubr.f32.gmra.mxu0 %v85
    %v278 = vpop.f32.mrf.mxu0
    %v279 = vadd.f32 %v164, %v278
    %v280 = vpop.f32.mrf.mxu0
    %v281 = vadd.f32 %v168, %v280
    %282 = vmatprep.mubr.f32.mxu0 0.0
    %283 = vmatmul.mubr.f32.gmra.mxu0 %v86
    %v284 = vpop.f32.mrf.mxu0
    %v285 = vadd.f32 %v164, %v284
    %v286 = vpop.f32.mrf.mxu0
    %v287 = vadd.f32 %v168, %v286
    %288 = vmatprep.mubr.f32.mxu0 0.0
    %289 = vmatmul.mubr.f32.gmra.mxu0 %v87
    %v290 = vpop.f32.mrf.mxu0
    %v291 = vadd.f32 %v164, %v290
    %v292 = vpop.f32.mrf.mxu0
    %v293 = vadd.f32 %v168, %v292
    %294 = vmatprep.mubr.f32.mxu0 0.0
    %295 = vmatmul.mubr.f32.gmra.mxu0 %v88
    %v296 = vpop.f32.mrf.mxu0
    %v297 = vadd.f32 %v164, %v296
    %v298 = vpop.f32.mrf.mxu0
    %v299 = vadd.f32 %v168, %v298
    %300 = vmatprep.mubr.f32.mxu0 0.0
    %301 = vmatmul.mubr.f32.gmra.mxu0 %v89
    %v302 = vpop.f32.mrf.mxu0
    %v303 = vadd.f32 %v164, %v302
    %v304 = vpop.f32.mrf.mxu0
    %v305 = vadd.f32 %v168, %v304
    %306 = vmatprep.mubr.f32.mxu0 0.0
    %307 = vmatmul.mubr.f32.gmra.mxu0 %v90
    %v308 = vpop.f32.mrf.mxu0
    %v309 = vadd.f32 %v164, %v308
    %v310 = vpop.f32.mrf.mxu0
    %v311 = vadd.f32 %v168, %v310
    %312 = vmatprep.mubr.f32.mxu0 0.0
    %313 = vmatmul.mubr.f32.gmra.mxu0 %v91
    %v314 = vpop.f32.mrf.mxu0
    %v315 = vadd.f32 %v164, %v314
    %v316 = vpop.f32.mrf.mxu0
    %v317 = vadd.f32 %v168, %v316
    %318 = vmatprep.mubr.f32.mxu0 0.0
    %319 = vmatmul.mubr.f32.gmra.mxu0 %v92
    %v320 = vpop.f32.mrf.mxu0
    %v321 = vadd.f32 %v164, %v320
    %v322 = vpop.f32.mrf.mxu0
    %v323 = vadd.f32 %v168, %v322
    %324 = vmatprep.mubr.f32.mxu0 0.0
    %325 = vmatmul.mubr.f32.gmra.mxu0 %v93
    %v326 = vpop.f32.mrf.mxu0
    %v327 = vadd.f32 %v164, %v326
    %v328 = vpop.f32.mrf.mxu0
    %v329 = vadd.f32 %v168, %v328
    %330 = vmatprep.mubr.f32.mxu0 0.0
    %331 = vmatmul.mubr.f32.gmra.mxu0 %v94
    %v332 = vpop.f32.mrf.mxu0
    %v333 = vadd.f32 %v164, %v332
    %v334 = vpop.f32.mrf.mxu0
    %v335 = vadd.f32 %v168, %v334
    %336 = vmatprep.mubr.f32.mxu0 0.0
    %337 = vmatmul.mubr.f32.gmra.mxu0 %v95
    %v338 = vpop.f32.mrf.mxu0
    %v339 = vadd.f32 %v164, %v338
    %v340 = vpop.f32.mrf.mxu0
    %v341 = vadd.f32 %v168, %v340
    %342 = vmatprep.mubr.f32.mxu0 0.0
    %343 = vmatmul.mubr.f32.gmra.mxu0 %v96
    %v344 = vpop.f32.mrf.mxu0
    %v345 = vadd.f32 %v164, %v344
    %v346 = vpop.f32.mrf.mxu0
    %v347 = vadd.f32 %v168, %v346
    %348 = vmatprep.mubr.f32.mxu0 0.0
    %349 = vmatmul.mubr.f32.gmra.mxu0 %v97
    %v350 = vpop.f32.mrf.mxu0
    %v351 = vadd.f32 %v164, %v350
    %v352 = vpop.f32.mrf.mxu0
    %v353 = vadd.f32 %v168, %v352
    %354 = vmatprep.mubr.f32.mxu0 0.0
    %355 = vmatmul.mubr.f32.gmra.mxu0 %v98
    %v356 = vpop.f32.mrf.mxu0
    %v357 = vadd.f32 %v164, %v356
    %v358 = vpop.f32.mrf.mxu0
    %v359 = vadd.f32 %v168, %v358
    %360 = vmatprep.mubr.f32.mxu0 0.0
    %361 = vmatmul.mubr.f32.gmra.mxu0 %v99
    %v362 = vpop.f32.mrf.mxu0
    %v363 = vadd.f32 %v164, %v362
    %v364 = vpop.f32.mrf.mxu0
    %v365 = vadd.f32 %v168, %v364
    %366 = vmatprep.mubr.f32.mxu0 0.0
    %367 = vmatmul.mubr.f32.gmra.mxu0 %v100
    %v368 = vpop.f32.mrf.mxu0
    %v369 = vadd.f32 %v164, %v368
    %v370 = vpop.f32.mrf.mxu0
    %v371 = vadd.f32 %v168, %v370
    %372 = vmatprep.mubr.f32.mxu0 0.0
    %373 = vmatmul.mubr.f32.gmra.mxu0 %v101
    %v374 = vpop.f32.mrf.mxu0
    %v375 = vadd.f32 %v164, %v374
    %v376 = vpop.f32.mrf.mxu0
    %v377 = vadd.f32 %v168, %v376
    %378 = vmatprep.mubr.f32.mxu0 0.0
    %379 = vmatmul.mubr.f32.gmra.mxu0 %v102
    %v380 = vpop.f32.mrf.mxu0
    %v381 = vadd.f32 %v164, %v380
    %v382 = vpop.f32.mrf.mxu0
    %v383 = vadd.f32 %v168, %v382
    %384 = vmatprep.mubr.f32.mxu0 0.0
    %385 = vmatmul.mubr.f32.gmra.mxu0 %v103
    %v386 = vpop.f32.mrf.mxu0
    %v387 = vadd.f32 %v164, %v386
    %v388 = vpop.f32.mrf.mxu0
    %v389 = vadd.f32 %v168, %v388
    %390 = vmatprep.mubr.f32.mxu0 0.0
    %391 = vmatmul.mubr.f32.gmra.mxu0 %v104
    %v392 = vpop.f32.mrf.mxu0
    %v393 = vadd.f32 %v164, %v392
    %v394 = vpop.f32.mrf.mxu0
    %v395 = vadd.f32 %v168, %v394
    %396 = vmatprep.mubr.f32.mxu0 0.0
    %397 = vmatmul.mubr.f32.gmra.mxu0 %v105
    %v398 = vpop.f32.mrf.mxu0
    %v399 = vadd.f32 %v164, %v398
    %v400 = vpop.f32.mrf.mxu0
    %v401 = vadd.f32 %v168, %v400
    %402 = vmatprep.mubr.f32.mxu0 0.0
    %403 = vmatmul.mubr.f32.gmra.mxu0 %v106
    %v404 = vpop.f32.mrf.mxu0
    %v405 = vadd.f32 %v164, %v404
    %v406 = vpop.f32.mrf.mxu0
    %v407 = vadd.f32 %v168, %v406
    %408 = vmatprep.mubr.f32.mxu0 0.0
    %409 = vmatmul.mubr.f32.gmra.mxu0 %v107
    %v410 = vpop.f32.mrf.mxu0
    %v411 = vadd.f32 %v164, %v410
    %v412 = vpop.f32.mrf.mxu0
    %v413 = vadd.f32 %v168, %v412
    %414 = vmatprep.mubr.f32.mxu0 0.0
    %415 = vmatmul.mubr.f32.gmra.mxu0 %v108
    %v416 = vpop.f32.mrf.mxu0
    %v417 = vadd.f32 %v164, %v416
    %v418 = vpop.f32.mrf.mxu0
    %v419 = vadd.f32 %v168, %v418
    %420 = vmatprep.mubr.f32.mxu0 0.0
    %421 = vmatmul.mubr.f32.gmra.mxu0 %v109
    %v422 = vpop.f32.mrf.mxu0
    %v423 = vadd.f32 %v164, %v422
    %v424 = vpop.f32.mrf.mxu0
    %v425 = vadd.f32 %v168, %v424
    %426 = vmatprep.mubr.f32.mxu0 0.0
    %427 = vmatmul.mubr.f32.gmra.mxu0 %v110
    %v428 = vpop.f32.mrf.mxu0
    %v429 = vadd.f32 %v164, %v428
    %v430 = vpop.f32.mrf.mxu0
    %v431 = vadd.f32 %v168, %v430
    %432 = vdwg.mxu0
    %433 = vmatprep.subr.mxu0 0.0
    %434 = vmatpush1.msra.mxu0 %v158
    %435 = vmatprep.subr.mxu0 0.0
    %436 = vmatpush1.msra.mxu0 %v155
    %437 = vmatprep.subr.mxu0 0.0
    %438 = vmatpush1.msra.mxu0 %v152
    %439 = vmatprep.subr.mxu0 0.0
    %440 = vmatpush1.msra.mxu0 %v149
    %441 = vmatprep.subr.mxu0 0.0
    %442 = vmatpush1.msra.mxu0 %v146
    %443 = vmatprep.subr.mxu0 0.0
    %444 = vmatpush1.msra.mxu0 %v143
    %445 = vmatprep.subr.mxu0 0.0
    %446 = vmatpush1.msra.mxu0 %v140
    %447 = vmatprep.subr.mxu0 0.0
    %448 = vmatpush1.msra.mxu0 %v137
    %449 = vmatprep.subr.mxu0 0.0
    %450 = vmatpush1.msra.mxu0 %v134
    %451 = vmatprep.subr.mxu0 0.0
    %452 = vmatpush1.msra.mxu0 %v131
    %453 = vmatprep.subr.mxu0 0.0
    %454 = vmatpush1.msra.mxu0 %v128
    %455 = vmatprep.subr.mxu0 0.0
    %456 = vmatpush1.msra.mxu0 %v125
    %457 = vmatprep.subr.mxu0 0.0
    %458 = vmatpush1.msra.mxu0 %v122
    %459 = vmatprep.subr.mxu0 0.0
    %460 = vmatpush1.msra.mxu0 %v119
    %461 = vmatprep.subr.mxu0 0.0
    %462 = vmatpush1.msra.mxu0 %v116
    %463 = vmatprep.subr.mxu0 0.0
    %464 = vmatpush1.msra.mxu0 %v113
    %465 = vmatprep.subr.mxu0 0.0
    %466 = vmatpush2.msra.mxu0 0.0
    %467 = vmatprep.subr.mxu0 0.0
    %468 = vmatpush2.msra.mxu0 0.0
    %469 = vmatprep.subr.mxu0 0.0
    %470 = vmatpush2.msra.mxu0 0.0
    %471 = vmatprep.subr.mxu0 0.0
    %472 = vmatpush2.msra.mxu0 0.0
    %473 = vmatprep.subr.mxu0 0.0
    %474 = vmatpush2.msra.mxu0 0.0
    %475 = vmatprep.subr.mxu0 0.0
    %476 = vmatpush2.msra.mxu0 0.0
    %477 = vmatprep.subr.mxu0 0.0
    %478 = vmatpush2.msra.mxu0 0.0
    %479 = vmatprep.subr.mxu0 0.0
    %480 = vmatpush2.msra.mxu0 0.0
    %481 = vmatprep.subr.mxu0 0.0
    %482 = vmatpush2.msra.mxu0 0.0
    %483 = vmatprep.subr.mxu0 0.0
    %484 = vmatpush2.msra.mxu0 0.0
    %485 = vmatprep.subr.mxu0 0.0
    %486 = vmatpush2.msra.mxu0 0.0
    %487 = vmatprep.subr.mxu0 0.0
    %488 = vmatpush2.msra.mxu0 0.0
    %489 = vmatprep.subr.mxu0 0.0
    %490 = vmatpush2.msra.mxu0 0.0
    %491 = vmatprep.subr.mxu0 0.0
    %492 = vmatpush2.msra.mxu0 0.0
    %493 = vmatprep.subr.mxu0 0.0
    %494 = vmatpush2.msra.mxu0 0.0
    %495 = vmatprep.subr.mxu0 0.0
    %496 = vmatpush2.msra.mxu0 0.0
    %497 = vmatprep.mubr.f32.mxu0 0.0
    %498 = vmatmul.mubr.f32.gmra.mxu0 %v79
    %v499 = vpop.f32.mrf.mxu0
    %v500 = vadd.f32 %v172, %v499
    %v501 = vpop.f32.mrf.mxu0
    %502 = vmatprep.mubr.f32.mxu0 0.0
    %503 = vmatmul.mubr.f32.gmra.mxu0 %v80
    %v504 = vpop.f32.mrf.mxu0
    %v505 = vadd.f32 %v172, %v504
    %v506 = vpop.f32.mrf.mxu0
    %507 = vmatprep.mubr.f32.mxu0 0.0
    %508 = vmatmul.mubr.f32.gmra.mxu0 %v81
    %v509 = vpop.f32.mrf.mxu0
    %v510 = vadd.f32 %v172, %v509
    %v511 = vpop.f32.mrf.mxu0
    %512 = vmatprep.mubr.f32.mxu0 0.0
    %513 = vmatmul.mubr.f32.gmra.mxu0 %v82
    %v514 = vpop.f32.mrf.mxu0
    %v515 = vadd.f32 %v172, %v514
    %v516 = vpop.f32.mrf.mxu0
    %517 = vmatprep.mubr.f32.mxu0 0.0
    %518 = vmatmul.mubr.f32.gmra.mxu0 %v83
    %v519 = vpop.f32.mrf.mxu0
    %v520 = vadd.f32 %v172, %v519
    %v521 = vpop.f32.mrf.mxu0
    %522 = vmatprep.mubr.f32.mxu0 0.0
    %523 = vmatmul.mubr.f32.gmra.mxu0 %v84
    %v524 = vpop.f32.mrf.mxu0
    %v525 = vadd.f32 %v172, %v524
    %v526 = vpop.f32.mrf.mxu0
    %527 = vmatprep.mubr.f32.mxu0 0.0
    %528 = vmatmul.mubr.f32.gmra.mxu0 %v85
    %v529 = vpop.f32.mrf.mxu0
    %v530 = vadd.f32 %v172, %v529
    %v531 = vpop.f32.mrf.mxu0
    %532 = vmatprep.mubr.f32.mxu0 0.0
    %533 = vmatmul.mubr.f32.gmra.mxu0 %v86
    %v534 = vpop.f32.mrf.mxu0
    %v535 = vadd.f32 %v172, %v534
    %v536 = vpop.f32.mrf.mxu0
    %537 = vmatprep.mubr.f32.mxu0 0.0
    %538 = vmatmul.mubr.f32.gmra.mxu0 %v87
    %v539 = vpop.f32.mrf.mxu0
    %v540 = vadd.f32 %v172, %v539
    %v541 = vpop.f32.mrf.mxu0
    %542 = vmatprep.mubr.f32.mxu0 0.0
    %543 = vmatmul.mubr.f32.gmra.mxu0 %v88
    %v544 = vpop.f32.mrf.mxu0
    %v545 = vadd.f32 %v172, %v544
    %v546 = vpop.f32.mrf.mxu0
    %547 = vmatprep.mubr.f32.mxu0 0.0
    %548 = vmatmul.mubr.f32.gmra.mxu0 %v89
    %v549 = vpop.f32.mrf.mxu0
    %v550 = vadd.f32 %v172, %v549
    %v551 = vpop.f32.mrf.mxu0
    %552 = vmatprep.mubr.f32.mxu0 0.0
    %553 = vmatmul.mubr.f32.gmra.mxu0 %v90
    %v554 = vpop.f32.mrf.mxu0
    %v555 = vadd.f32 %v172, %v554
    %v556 = vpop.f32.mrf.mxu0
    %557 = vmatprep.mubr.f32.mxu0 0.0
    %558 = vmatmul.mubr.f32.gmra.mxu0 %v91
    %v559 = vpop.f32.mrf.mxu0
    %v560 = vadd.f32 %v172, %v559
    %v561 = vpop.f32.mrf.mxu0
    %562 = vmatprep.mubr.f32.mxu0 0.0
    %563 = vmatmul.mubr.f32.gmra.mxu0 %v92
    %v564 = vpop.f32.mrf.mxu0
    %v565 = vadd.f32 %v172, %v564
    %v566 = vpop.f32.mrf.mxu0
    %567 = vmatprep.mubr.f32.mxu0 0.0
    %568 = vmatmul.mubr.f32.gmra.mxu0 %v93
    %v569 = vpop.f32.mrf.mxu0
    %v570 = vadd.f32 %v172, %v569
    %v571 = vpop.f32.mrf.mxu0
    %572 = vmatprep.mubr.f32.mxu0 0.0
    %573 = vmatmul.mubr.f32.gmra.mxu0 %v94
    %v574 = vpop.f32.mrf.mxu0
    %v575 = vadd.f32 %v172, %v574
    %v576 = vpop.f32.mrf.mxu0
    %577 = vmatprep.mubr.f32.mxu0 0.0
    %578 = vmatmul.mubr.f32.gmra.mxu0 %v95
    %v579 = vpop.f32.mrf.mxu0
    %v580 = vadd.f32 %v172, %v579
    %v581 = vpop.f32.mrf.mxu0
    %582 = vmatprep.mubr.f32.mxu0 0.0
    %583 = vmatmul.mubr.f32.gmra.mxu0 %v96
    %v584 = vpop.f32.mrf.mxu0
    %v585 = vadd.f32 %v172, %v584
    %v586 = vpop.f32.mrf.mxu0
    %587 = vmatprep.mubr.f32.mxu0 0.0
    %588 = vmatmul.mubr.f32.gmra.mxu0 %v97
    %v589 = vpop.f32.mrf.mxu0
    %v590 = vadd.f32 %v172, %v589
    %v591 = vpop.f32.mrf.mxu0
    %592 = vmatprep.mubr.f32.mxu0 0.0
    %593 = vmatmul.mubr.f32.gmra.mxu0 %v98
    %v594 = vpop.f32.mrf.mxu0
    %v595 = vadd.f32 %v172, %v594
    %v596 = vpop.f32.mrf.mxu0
    %597 = vmatprep.mubr.f32.mxu0 0.0
    %598 = vmatmul.mubr.f32.gmra.mxu0 %v99
    %v599 = vpop.f32.mrf.mxu0
    %v600 = vadd.f32 %v172, %v599
    %v601 = vpop.f32.mrf.mxu0
    %602 = vmatprep.mubr.f32.mxu0 0.0
    %603 = vmatmul.mubr.f32.gmra.mxu0 %v100
    %v604 = vpop.f32.mrf.mxu0
    %v605 = vadd.f32 %v172, %v604
    %v606 = vpop.f32.mrf.mxu0
    %607 = vmatprep.mubr.f32.mxu0 0.0
    %608 = vmatmul.mubr.f32.gmra.mxu0 %v101
    %v609 = vpop.f32.mrf.mxu0
    %v610 = vadd.f32 %v172, %v609
    %v611 = vpop.f32.mrf.mxu0
    %612 = vmatprep.mubr.f32.mxu0 0.0
    %613 = vmatmul.mubr.f32.gmra.mxu0 %v102
    %v614 = vpop.f32.mrf.mxu0
    %v615 = vadd.f32 %v172, %v614
    %v616 = vpop.f32.mrf.mxu0
    %617 = vmatprep.mubr.f32.mxu0 0.0
    %618 = vmatmul.mubr.f32.gmra.mxu0 %v103
    %v619 = vpop.f32.mrf.mxu0
    %v620 = vadd.f32 %v172, %v619
    %v621 = vpop.f32.mrf.mxu0
    %622 = vmatprep.mubr.f32.mxu0 0.0
    %623 = vmatmul.mubr.f32.gmra.mxu0 %v104
    %v624 = vpop.f32.mrf.mxu0
    %v625 = vadd.f32 %v172, %v624
    %v626 = vpop.f32.mrf.mxu0
    %627 = vmatprep.mubr.f32.mxu0 0.0
    %628 = vmatmul.mubr.f32.gmra.mxu0 %v105
    %v629 = vpop.f32.mrf.mxu0
    %v630 = vadd.f32 %v172, %v629
    %v631 = vpop.f32.mrf.mxu0
    %632 = vmatprep.mubr.f32.mxu0 0.0
    %633 = vmatmul.mubr.f32.gmra.mxu0 %v106
    %v634 = vpop.f32.mrf.mxu0
    %v635 = vadd.f32 %v172, %v634
    %v636 = vpop.f32.mrf.mxu0
    %637 = vmatprep.mubr.f32.mxu0 0.0
    %638 = vmatmul.mubr.f32.gmra.mxu0 %v107
    %v639 = vpop.f32.mrf.mxu0
    %v640 = vadd.f32 %v172, %v639
    %v641 = vpop.f32.mrf.mxu0
    %642 = vmatprep.mubr.f32.mxu0 0.0
    %643 = vmatmul.mubr.f32.gmra.mxu0 %v108
    %v644 = vpop.f32.mrf.mxu0
    %v645 = vadd.f32 %v172, %v644
    %v646 = vpop.f32.mrf.mxu0
    %647 = vmatprep.mubr.f32.mxu0 0.0
    %648 = vmatmul.mubr.f32.gmra.mxu0 %v109
    %v649 = vpop.f32.mrf.mxu0
    %v650 = vadd.f32 %v172, %v649
    %v651 = vpop.f32.mrf.mxu0
    %652 = vmatprep.mubr.f32.mxu0 0.0
    %653 = vmatmul.mubr.f32.gmra.mxu0 %v110
    %v654 = vpop.f32.mrf.mxu0
    %v655 = vadd.f32 %v172, %v654
    %v656 = vpop.f32.mrf.mxu0
    %657 = vdwg.mxu0
    %vm658 = vcmp.ge.f32.partialorder %v243, 0.0
    %vm659 = vcmp.ge.f32.partialorder %v245, 0.0
    %vm660 = vcmp.ge.f32.partialorder %v500, 0.0
    %vm661 = vcmp.ge.f32.partialorder %v249, 0.0
    %vm662 = vcmp.ge.f32.partialorder %v251, 0.0
    %vm663 = vcmp.ge.f32.partialorder %v505, 0.0
    %vm664 = vcmp.ge.f32.partialorder %v255, 0.0
    %vm665 = vcmp.ge.f32.partialorder %v257, 0.0
    %vm666 = vcmp.ge.f32.partialorder %v510, 0.0
    %vm667 = vcmp.ge.f32.partialorder %v261, 0.0
    %vm668 = vcmp.ge.f32.partialorder %v263, 0.0
    %vm669 = vcmp.ge.f32.partialorder %v515, 0.0
    %vm670 = vcmp.ge.f32.partialorder %v267, 0.0
    %vm671 = vcmp.ge.f32.partialorder %v269, 0.0
    %vm672 = vcmp.ge.f32.partialorder %v520, 0.0
    %vm673 = vcmp.ge.f32.partialorder %v273, 0.0
    %vm674 = vcmp.ge.f32.partialorder %v275, 0.0
    %vm675 = vcmp.ge.f32.partialorder %v525, 0.0
    %vm676 = vcmp.ge.f32.partialorder %v279, 0.0
    %vm677 = vcmp.ge.f32.partialorder %v281, 0.0
    %vm678 = vcmp.ge.f32.partialorder %v530, 0.0
    %vm679 = vcmp.ge.f32.partialorder %v285, 0.0
    %vm680 = vcmp.ge.f32.partialorder %v287, 0.0
    %vm681 = vcmp.ge.f32.partialorder %v535, 0.0
    %vm682 = vcmp.ge.f32.partialorder %v291, 0.0
    %vm683 = vcmp.ge.f32.partialorder %v293, 0.0
    %vm684 = vcmp.ge.f32.partialorder %v540, 0.0
    %vm685 = vcmp.ge.f32.partialorder %v297, 0.0
    %vm686 = vcmp.ge.f32.partialorder %v299, 0.0
    %vm687 = vcmp.ge.f32.partialorder %v545, 0.0
    %vm688 = vcmp.ge.f32.partialorder %v303, 0.0
    %vm689 = vcmp.ge.f32.partialorder %v305, 0.0
    %vm690 = vcmp.ge.f32.partialorder %v550, 0.0
    %vm691 = vcmp.ge.f32.partialorder %v309, 0.0
    %vm692 = vcmp.ge.f32.partialorder %v311, 0.0
    %vm693 = vcmp.ge.f32.partialorder %v555, 0.0
    %vm694 = vcmp.ge.f32.partialorder %v315, 0.0
    %vm695 = vcmp.ge.f32.partialorder %v317, 0.0
    %vm696 = vcmp.ge.f32.partialorder %v560, 0.0
    %vm697 = vcmp.ge.f32.partialorder %v321, 0.0
    %vm698 = vcmp.ge.f32.partialorder %v323, 0.0
    %vm699 = vcmp.ge.f32.partialorder %v565, 0.0
    %vm700 = vcmp.ge.f32.partialorder %v327, 0.0
    %vm701 = vcmp.ge.f32.partialorder %v329, 0.0
    %vm702 = vcmp.ge.f32.partialorder %v570, 0.0
    %vm703 = vcmp.ge.f32.partialorder %v333, 0.0
    %vm704 = vcmp.ge.f32.partialorder %v335, 0.0
    %vm705 = vcmp.ge.f32.partialorder %v575, 0.0
    %vm706 = vcmp.ge.f32.partialorder %v339, 0.0
    %vm707 = vcmp.ge.f32.partialorder %v341, 0.0
    %vm708 = vcmp.ge.f32.partialorder %v580, 0.0
    %vm709 = vcmp.ge.f32.partialorder %v345, 0.0
    %vm710 = vcmp.ge.f32.partialorder %v347, 0.0
    %vm711 = vcmp.ge.f32.partialorder %v585, 0.0
    %vm712 = vcmp.ge.f32.partialorder %v351, 0.0
    %vm713 = vcmp.ge.f32.partialorder %v353, 0.0
    %vm714 = vcmp.ge.f32.partialorder %v590, 0.0
    %vm715 = vcmp.ge.f32.partialorder %v357, 0.0
    %vm716 = vcmp.ge.f32.partialorder %v359, 0.0
    %vm717 = vcmp.ge.f32.partialorder %v595, 0.0
    %vm718 = vcmp.ge.f32.partialorder %v363, 0.0
    %vm719 = vcmp.ge.f32.partialorder %v365, 0.0
    %vm720 = vcmp.ge.f32.partialorder %v600, 0.0
    %vm721 = vcmp.ge.f32.partialorder %v369, 0.0
    %vm722 = vcmp.ge.f32.partialorder %v371, 0.0
    %vm723 = vcmp.ge.f32.partialorder %v605, 0.0
    %vm724 = vcmp.ge.f32.partialorder %v375, 0.0
    %vm725 = vcmp.ge.f32.partialorder %v377, 0.0
    %vm726 = vcmp.ge.f32.partialorder %v610, 0.0
    %vm727 = vcmp.ge.f32.partialorder %v381, 0.0
    %vm728 = vcmp.ge.f32.partialorder %v383, 0.0
    %vm729 = vcmp.ge.f32.partialorder %v615, 0.0
    %vm730 = vcmp.ge.f32.partialorder %v387, 0.0
    %vm731 = vcmp.ge.f32.partialorder %v389, 0.0
    %vm732 = vcmp.ge.f32.partialorder %v620, 0.0
    %vm733 = vcmp.ge.f32.partialorder %v393, 0.0
    %vm734 = vcmp.ge.f32.partialorder %v395, 0.0
    %vm735 = vcmp.ge.f32.partialorder %v625, 0.0
    %vm736 = vcmp.ge.f32.partialorder %v399, 0.0
    %vm737 = vcmp.ge.f32.partialorder %v401, 0.0
    %vm738 = vcmp.ge.f32.partialorder %v630, 0.0
    %vm739 = vcmp.ge.f32.partialorder %v405, 0.0
    %vm740 = vcmp.ge.f32.partialorder %v407, 0.0
    %vm741 = vcmp.ge.f32.partialorder %v635, 0.0
    %vm742 = vcmp.ge.f32.partialorder %v411, 0.0
    %vm743 = vcmp.ge.f32.partialorder %v413, 0.0
    %vm744 = vcmp.ge.f32.partialorder %v640, 0.0
    %vm745 = vcmp.ge.f32.partialorder %v417, 0.0
    %vm746 = vcmp.ge.f32.partialorder %v419, 0.0
    %vm747 = vcmp.ge.f32.partialorder %v645, 0.0
    %vm748 = vcmp.ge.f32.partialorder %v423, 0.0
    %vm749 = vcmp.ge.f32.partialorder %v425, 0.0
    %vm750 = vcmp.ge.f32.partialorder %v650, 0.0
    %vm751 = vcmp.ge.f32.partialorder %v429, 0.0
    %vm752 = vcmp.ge.f32.partialorder %v431, 0.0
    %vm753 = vcmp.ge.f32.partialorder %v655, 0.0
    %v754 = vmul.f32 %v243, 0.01
    %v755 = vmul.f32 %v245, 0.01
    %v756 = vmul.f32 %v500, 0.01
    %v757 = vmul.f32 %v249, 0.01
    %v758 = vmul.f32 %v251, 0.01
    %v759 = vmul.f32 %v505, 0.01
    %v760 = vmul.f32 %v255, 0.01
    %v761 = vmul.f32 %v257, 0.01
    %v762 = vmul.f32 %v510, 0.01
    %v763 = vmul.f32 %v261, 0.01
    %v764 = vmul.f32 %v263, 0.01
    %v765 = vmul.f32 %v515, 0.01
    %v766 = vmul.f32 %v267, 0.01
    %v767 = vmul.f32 %v269, 0.01
    %v768 = vmul.f32 %v520, 0.01
    %v769 = vmul.f32 %v273, 0.01
    %v770 = vmul.f32 %v275, 0.01
    %v771 = vmul.f32 %v525, 0.01
    %v772 = vmul.f32 %v279, 0.01
    %v773 = vmul.f32 %v281, 0.01
    %v774 = vmul.f32 %v530, 0.01
    %v775 = vmul.f32 %v285, 0.01
    %v776 = vmul.f32 %v287, 0.01
    %v777 = vmul.f32 %v535, 0.01
    %v778 = vmul.f32 %v291, 0.01
    %v779 = vmul.f32 %v293, 0.01
    %v780 = vmul.f32 %v540, 0.01
    %v781 = vmul.f32 %v297, 0.01
    %v782 = vmul.f32 %v299, 0.01
    %v783 = vmul.f32 %v545, 0.01
    %v784 = vmul.f32 %v303, 0.01
    %v785 = vmul.f32 %v305, 0.01
    %v786 = vmul.f32 %v550, 0.01
    %v787 = vmul.f32 %v309, 0.01
    %v788 = vmul.f32 %v311, 0.01
    %v789 = vmul.f32 %v555, 0.01
    %v790 = vmul.f32 %v315, 0.01
    %v791 = vmul.f32 %v317, 0.01
    %v792 = vmul.f32 %v560, 0.01
    %v793 = vmul.f32 %v321, 0.01
    %v794 = vmul.f32 %v323, 0.01
    %v795 = vmul.f32 %v565, 0.01
    %v796 = vmul.f32 %v327, 0.01
    %v797 = vmul.f32 %v329, 0.01
    %v798 = vmul.f32 %v570, 0.01
    %v799 = vmul.f32 %v333, 0.01
    %v800 = vmul.f32 %v335, 0.01
    %v801 = vmul.f32 %v575, 0.01
    %v802 = vmul.f32 %v339, 0.01
    %v803 = vmul.f32 %v341, 0.01
    %v804 = vmul.f32 %v580, 0.01
    %v805 = vmul.f32 %v345, 0.01
    %v806 = vmul.f32 %v347, 0.01
    %v807 = vmul.f32 %v585, 0.01
    %v808 = vmul.f32 %v351, 0.01
    %v809 = vmul.f32 %v353, 0.01
    %v810 = vmul.f32 %v590, 0.01
    %v811 = vmul.f32 %v357, 0.01
    %v812 = vmul.f32 %v359, 0.01
    %v813 = vmul.f32 %v595, 0.01
    %v814 = vmul.f32 %v363, 0.01
    %v815 = vmul.f32 %v365, 0.01
    %v816 = vmul.f32 %v600, 0.01
    %v817 = vmul.f32 %v369, 0.01
    %v818 = vmul.f32 %v371, 0.01
    %v819 = vmul.f32 %v605, 0.01
    %v820 = vmul.f32 %v375, 0.01
    %v821 = vmul.f32 %v377, 0.01
    %v822 = vmul.f32 %v610, 0.01
    %v823 = vmul.f32 %v381, 0.01
    %v824 = vmul.f32 %v383, 0.01
    %v825 = vmul.f32 %v615, 0.01
    %v826 = vmul.f32 %v387, 0.01
    %v827 = vmul.f32 %v389, 0.01
    %v828 = vmul.f32 %v620, 0.01
    %v829 = vmul.f32 %v393, 0.01
    %v830 = vmul.f32 %v395, 0.01
    %v831 = vmul.f32 %v625, 0.01
    %v832 = vmul.f32 %v399, 0.01
    %v833 = vmul.f32 %v401, 0.01
    %v834 = vmul.f32 %v630, 0.01
    %v835 = vmul.f32 %v405, 0.01
    %v836 = vmul.f32 %v407, 0.01
    %v837 = vmul.f32 %v635, 0.01
    %v838 = vmul.f32 %v411, 0.01
    %v839 = vmul.f32 %v413, 0.01
    %v840 = vmul.f32 %v640, 0.01
    %v841 = vmul.f32 %v417, 0.01
    %v842 = vmul.f32 %v419, 0.01
    %v843 = vmul.f32 %v645, 0.01
    %v844 = vmul.f32 %v423, 0.01
    %v845 = vmul.f32 %v425, 0.01
    %v846 = vmul.f32 %v650, 0.01
    %v847 = vmul.f32 %v429, 0.01
    %v848 = vmul.f32 %v431, 0.01
    %v849 = vmul.f32 %v655, 0.01
    %v850 = vsel %vm658, %v243, %v754
    %v851 = vsel %vm659, %v245, %v755
    %v852 = vsel %vm660, %v500, %v756
    %v853 = vsel %vm661, %v249, %v757
    %v854 = vsel %vm662, %v251, %v758
    %v855 = vsel %vm663, %v505, %v759
    %v856 = vsel %vm664, %v255, %v760
    %v857 = vsel %vm665, %v257, %v761
    %v858 = vsel %vm666, %v510, %v762
    %v859 = vsel %vm667, %v261, %v763
    %v860 = vsel %vm668, %v263, %v764
    %v861 = vsel %vm669, %v515, %v765
    %v862 = vsel %vm670, %v267, %v766
    %v863 = vsel %vm671, %v269, %v767
    %v864 = vsel %vm672, %v520, %v768
    %v865 = vsel %vm673, %v273, %v769
    %v866 = vsel %vm674, %v275, %v770
    %v867 = vsel %vm675, %v525, %v771
    %v868 = vsel %vm676, %v279, %v772
    %v869 = vsel %vm677, %v281, %v773
    %v870 = vsel %vm678, %v530, %v774
    %v871 = vsel %vm679, %v285, %v775
    %v872 = vsel %vm680, %v287, %v776
    %v873 = vsel %vm681, %v535, %v777
    %v874 = vsel %vm682, %v291, %v778
    %v875 = vsel %vm683, %v293, %v779
    %v876 = vsel %vm684, %v540, %v780
    %v877 = vsel %vm685, %v297, %v781
    %v878 = vsel %vm686, %v299, %v782
    %v879 = vsel %vm687, %v545, %v783
    %v880 = vsel %vm688, %v303, %v784
    %v881 = vsel %vm689, %v305, %v785
    %v882 = vsel %vm690, %v550, %v786
    %v883 = vsel %vm691, %v309, %v787
    %v884 = vsel %vm692, %v311, %v788
    %v885 = vsel %vm693, %v555, %v789
    %v886 = vsel %vm694, %v315, %v790
    %v887 = vsel %vm695, %v317, %v791
    %v888 = vsel %vm696, %v560, %v792
    %v889 = vsel %vm697, %v321, %v793
    %v890 = vsel %vm698, %v323, %v794
    %v891 = vsel %vm699, %v565, %v795
    %v892 = vsel %vm700, %v327, %v796
    %v893 = vsel %vm701, %v329, %v797
    %v894 = vsel %vm702, %v570, %v798
    %v895 = vsel %vm703, %v333, %v799
    %v896 = vsel %vm704, %v335, %v800
    %v897 = vsel %vm705, %v575, %v801
    %v898 = vsel %vm706, %v339, %v802
    %v899 = vsel %vm707, %v341, %v803
    %v900 = vsel %vm708, %v580, %v804
    %v901 = vsel %vm709, %v345, %v805
    %v902 = vsel %vm710, %v347, %v806
    %v903 = vsel %vm711, %v585, %v807
    %v904 = vsel %vm712, %v351, %v808
    %v905 = vsel %vm713, %v353, %v809
    %v906 = vsel %vm714, %v590, %v810
    %v907 = vsel %vm715, %v357, %v811
    %v908 = vsel %vm716, %v359, %v812
    %v909 = vsel %vm717, %v595, %v813
    %v910 = vsel %vm718, %v363, %v814
    %v911 = vsel %vm719, %v365, %v815
    %v912 = vsel %vm720, %v600, %v816
    %v913 = vsel %vm721, %v369, %v817
    %v914 = vsel %vm722, %v371, %v818
    %v915 = vsel %vm723, %v605, %v819
    %v916 = vsel %vm724, %v375, %v820
    %v917 = vsel %vm725, %v377, %v821
    %v918 = vsel %vm726, %v610, %v822
    %v919 = vsel %vm727, %v381, %v823
    %v920 = vsel %vm728, %v383, %v824
    %v921 = vsel %vm729, %v615, %v825
    %v922 = vsel %vm730, %v387, %v826
    %v923 = vsel %vm731, %v389, %v827
    %v924 = vsel %vm732, %v620, %v828
    %v925 = vsel %vm733, %v393, %v829
    %v926 = vsel %vm734, %v395, %v830
    %v927 = vsel %vm735, %v625, %v831
    %v928 = vsel %vm736, %v399, %v832
    %v929 = vsel %vm737, %v401, %v833
    %v930 = vsel %vm738, %v630, %v834
    %v931 = vsel %vm739, %v405, %v835
    %v932 = vsel %vm740, %v407, %v836
    %v933 = vsel %vm741, %v635, %v837
    %v934 = vsel %vm742, %v411, %v838
    %v935 = vsel %vm743, %v413, %v839
    %v936 = vsel %vm744, %v640, %v840
    %v937 = vsel %vm745, %v417, %v841
    %v938 = vsel %vm746, %v419, %v842
    %v939 = vsel %vm747, %v645, %v843
    %v940 = vsel %vm748, %v423, %v844
    %v941 = vsel %vm749, %v425, %v845
    %v942 = vsel %vm750, %v650, %v846
    %v943 = vsel %vm751, %v429, %v847
    %v944 = vsel %vm752, %v431, %v848
    %v945 = vsel %vm753, %v655, %v849
    %v946 = vld [vmem:[#allocation4] sm:$0xff]
    %v947 = vld [vmem:[#allocation4 + $0x8] sm:$0xff]
    %v948 = vld [vmem:[#allocation4 + $0x10] sm:$0xff]
    %v949 = vld [vmem:[#allocation4 + $0x18] sm:$0xff]
    %v950 = vld [vmem:[#allocation4 + $0x20] sm:$0xff]
    %v951 = vld [vmem:[#allocation4 + $0x28] sm:$0xff]
    %v952 = vld [vmem:[#allocation4 + $0x30] sm:$0xff]
    %v953 = vld [vmem:[#allocation4 + $0x38] sm:$0xff]
    %v954 = vld [vmem:[#allocation4 + $0x40] sm:$0xff]
    %v955 = vld [vmem:[#allocation4 + $0x48] sm:$0xff]
    %v956 = vld [vmem:[#allocation4 + $0x50] sm:$0xff]
    %v957 = vld [vmem:[#allocation4 + $0x58] sm:$0xff]
    %v958 = vld [vmem:[#allocation4 + $0x60] sm:$0xff]
    %v959 = vld [vmem:[#allocation4 + $0x68] sm:$0xff]
    %v960 = vld [vmem:[#allocation4 + $0x70] sm:$0xff]
    %v961 = vld [vmem:[#allocation4 + $0x78] sm:$0xff]
    %v962 = vld [vmem:[#allocation4 + $0x80] sm:$0xff]
    %v963 = vld [vmem:[#allocation4 + $0x88] sm:$0xff]
    %v964 = vld [vmem:[#allocation4 + $0x90] sm:$0xff]
    %v965 = vld [vmem:[#allocation4 + $0x98] sm:$0xff]
    %v966 = vld [vmem:[#allocation4 + $0xa0] sm:$0xff]
    %v967 = vld [vmem:[#allocation4 + $0xa8] sm:$0xff]
    %v968 = vld [vmem:[#allocation4 + $0xb0] sm:$0xff]
    %v969 = vld [vmem:[#allocation4 + $0xb8] sm:$0xff]
    %v970 = vld [vmem:[#allocation4 + $0xc0] sm:$0xff]
    %v971 = vld [vmem:[#allocation4 + $0xc8] sm:$0xff]
    %v972 = vld [vmem:[#allocation4 + $0xd0] sm:$0xff]
    %v973 = vld [vmem:[#allocation4 + $0xd8] sm:$0xff]
    %v974 = vld [vmem:[#allocation4 + $0xe0] sm:$0xff]
    %v975 = vld [vmem:[#allocation4 + $0xe8] sm:$0xff]
    %v976 = vld [vmem:[#allocation4 + $0xf0] sm:$0xff]
    %v977 = vld [vmem:[#allocation4 + $0xf8] sm:$0xff]
    %v978 = vld [vmem:[#allocation4 + $0x100] sm:$0xff]
    %v979 = vld [vmem:[#allocation4 + $0x108] sm:$0xff]
    %v980 = vld [vmem:[#allocation4 + $0x110] sm:$0xff]
    %v981 = vld [vmem:[#allocation4 + $0x118] sm:$0xff]
    %v982 = vld [vmem:[#allocation4 + $0x120] sm:$0xff]
    %v983 = vld [vmem:[#allocation4 + $0x128] sm:$0xff]
    %v984 = vld [vmem:[#allocation4 + $0x130] sm:$0xff]
    %v985 = vld [vmem:[#allocation4 + $0x138] sm:$0xff]
    %v986 = vld [vmem:[#allocation4 + $0x140] sm:$0xff]
    %v987 = vld [vmem:[#allocation4 + $0x148] sm:$0xff]
    %v988 = vld [vmem:[#allocation4 + $0x150] sm:$0xff]
    %v989 = vld [vmem:[#allocation4 + $0x158] sm:$0xff]
    %v990 = vld [vmem:[#allocation4 + $0x160] sm:$0xff]
    %v991 = vld [vmem:[#allocation4 + $0x168] sm:$0xff]
    %v992 = vld [vmem:[#allocation4 + $0x170] sm:$0xff]
    %v993 = vld [vmem:[#allocation4 + $0x178] sm:$0xff]
    %v994 = vld [vmem:[#allocation4 + $0x180] sm:$0xff]
    %v995 = vld [vmem:[#allocation4 + $0x188] sm:$0xff]
    %v996 = vld [vmem:[#allocation4 + $0x190] sm:$0xff]
    %v997 = vld [vmem:[#allocation4 + $0x198] sm:$0xff]
    %v998 = vld [vmem:[#allocation4 + $0x1a0] sm:$0xff]
    %v999 = vld [vmem:[#allocation4 + $0x1a8] sm:$0xff]
    %v1000 = vld [vmem:[#allocation4 + $0x1b0] sm:$0xff]
    %v1001 = vld [vmem:[#allocation4 + $0x1b8] sm:$0xff]
    %v1002 = vld [vmem:[#allocation4 + $0x1c0] sm:$0xff]
    %v1003 = vld [vmem:[#allocation4 + $0x1c8] sm:$0xff]
    %v1004 = vld [vmem:[#allocation4 + $0x1d0] sm:$0xff]
    %v1005 = vld [vmem:[#allocation4 + $0x1d8] sm:$0xff]
    %v1006 = vld [vmem:[#allocation4 + $0x1e0] sm:$0xff]
    %v1007 = vld [vmem:[#allocation4 + $0x1e8] sm:$0xff]
    %v1008 = vld [vmem:[#allocation4 + $0x1f0] sm:$0xff]
    %v1009 = vld [vmem:[#allocation4 + $0x1f8] sm:$0xff]
    %v1010 = vld [vmem:[#allocation4 + $0x200] sm:$0xff]
    %v1011 = vld [vmem:[#allocation4 + $0x208] sm:$0xff]
    %v1012 = vld [vmem:[#allocation4 + $0x210] sm:$0xff]
    %v1013 = vld [vmem:[#allocation4 + $0x218] sm:$0xff]
    %v1014 = vld [vmem:[#allocation4 + $0x220] sm:$0xff]
    %v1015 = vld [vmem:[#allocation4 + $0x228] sm:$0xff]
    %v1016 = vld [vmem:[#allocation4 + $0x230] sm:$0xff]
    %v1017 = vld [vmem:[#allocation4 + $0x238] sm:$0xff]
    %v1018 = vld [vmem:[#allocation4 + $0x240] sm:$0xff]
    %v1019 = vld [vmem:[#allocation4 + $0x248] sm:$0xff]
    %v1020 = vld [vmem:[#allocation4 + $0x250] sm:$0xff]
    %v1021 = vld [vmem:[#allocation4 + $0x258] sm:$0xff]
    %v1022 = vld [vmem:[#allocation4 + $0x260] sm:$0xff]
    %v1023 = vld [vmem:[#allocation4 + $0x268] sm:$0xff]
    %v1024 = vld [vmem:[#allocation4 + $0x270] sm:$0xff]
    %v1025 = vld [vmem:[#allocation4 + $0x278] sm:$0xff]
    %v1026 = vld [vmem:[#allocation4 + $0x280] sm:$0xff]
    %v1027 = vld [vmem:[#allocation4 + $0x288] sm:$0xff]
    %v1028 = vld [vmem:[#allocation4 + $0x290] sm:$0xff]
    %v1029 = vld [vmem:[#allocation4 + $0x298] sm:$0xff]
    %v1030 = vld [vmem:[#allocation4 + $0x2a0] sm:$0xff]
    %v1031 = vld [vmem:[#allocation4 + $0x2a8] sm:$0xff]
    %v1032 = vld [vmem:[#allocation4 + $0x2b0] sm:$0xff]
    %v1033 = vld [vmem:[#allocation4 + $0x2b8] sm:$0xff]
    %v1034 = vld [vmem:[#allocation4 + $0x2c0] sm:$0xff]
    %v1035 = vld [vmem:[#allocation4 + $0x2c8] sm:$0xff]
    %v1036 = vld [vmem:[#allocation4 + $0x2d0] sm:$0xff]
    %v1037 = vld [vmem:[#allocation4 + $0x2d8] sm:$0xff]
    %v1038 = vld [vmem:[#allocation4 + $0x2e0] sm:$0xff]
    %v1039 = vld [vmem:[#allocation4 + $0x2e8] sm:$0xff]
    %v1040 = vld [vmem:[#allocation4 + $0x2f0] sm:$0xff]
    %v1041 = vld [vmem:[#allocation4 + $0x2f8] sm:$0xff]
    %v1042 = vld [vmem:[#allocation4 + $0x300] sm:$0xff]
    %v1043 = vld [vmem:[#allocation4 + $0x308] sm:$0xff]
    %v1044 = vld [vmem:[#allocation4 + $0x310] sm:$0xff]
    %v1045 = vld [vmem:[#allocation4 + $0x318] sm:$0xff]
    %v1046 = vld [vmem:[#allocation4 + $0x320] sm:$0xff]
    %v1047 = vld [vmem:[#allocation4 + $0x328] sm:$0xff]
    %v1048 = vld [vmem:[#allocation4 + $0x330] sm:$0xff]
    %v1049 = vld [vmem:[#allocation4 + $0x338] sm:$0xff]
    %v1050 = vld [vmem:[#allocation4 + $0x340] sm:$0xff]
    %v1051 = vld [vmem:[#allocation4 + $0x348] sm:$0xff]
    %v1052 = vld [vmem:[#allocation4 + $0x350] sm:$0xff]
    %v1053 = vld [vmem:[#allocation4 + $0x358] sm:$0xff]
    %v1054 = vld [vmem:[#allocation4 + $0x360] sm:$0xff]
    %v1055 = vld [vmem:[#allocation4 + $0x368] sm:$0xff]
    %v1056 = vld [vmem:[#allocation4 + $0x370] sm:$0xff]
    %v1057 = vld [vmem:[#allocation4 + $0x378] sm:$0xff]
    %v1058 = vld [vmem:[#allocation4 + $0x380] sm:$0xff]
    %v1059 = vld [vmem:[#allocation4 + $0x388] sm:$0xff]
    %v1060 = vld [vmem:[#allocation4 + $0x390] sm:$0xff]
    %v1061 = vld [vmem:[#allocation4 + $0x398] sm:$0xff]
    %v1062 = vld [vmem:[#allocation4 + $0x3a0] sm:$0xff]
    %v1063 = vld [vmem:[#allocation4 + $0x3a8] sm:$0xff]
    %v1064 = vld [vmem:[#allocation4 + $0x3b0] sm:$0xff]
    %v1065 = vld [vmem:[#allocation4 + $0x3b8] sm:$0xff]
    %v1066 = vld [vmem:[#allocation4 + $0x3c0] sm:$0xff]
    %v1067 = vld [vmem:[#allocation4 + $0x3c8] sm:$0xff]
    %v1068 = vld [vmem:[#allocation4 + $0x3d0] sm:$0xff]
    %v1069 = vld [vmem:[#allocation4 + $0x3d8] sm:$0xff]
    %v1070 = vld [vmem:[#allocation4 + $0x3e0] sm:$0xff]
    %v1071 = vld [vmem:[#allocation4 + $0x3e8] sm:$0xff]
    %v1072 = vld [vmem:[#allocation4 + $0x3f0] sm:$0xff]
    %v1073 = vld [vmem:[#allocation4 + $0x3f8] sm:$0xff]
    %v1074 = vld [vmem:[#allocation4 + $0x400] sm:$0xff]
    %v1075 = vld [vmem:[#allocation4 + $0x408] sm:$0xff]
    %v1076 = vld [vmem:[#allocation4 + $0x410] sm:$0xff]
    %v1077 = vld [vmem:[#allocation4 + $0x418] sm:$0xff]
    %v1078 = vld [vmem:[#allocation4 + $0x420] sm:$0xff]
    %v1079 = vld [vmem:[#allocation4 + $0x428] sm:$0xff]
    %v1080 = vld [vmem:[#allocation4 + $0x430] sm:$0xff]
    %v1081 = vld [vmem:[#allocation4 + $0x438] sm:$0xff]
    %v1082 = vld [vmem:[#allocation4 + $0x440] sm:$0xff]
    %v1083 = vld [vmem:[#allocation4 + $0x448] sm:$0xff]
    %v1084 = vld [vmem:[#allocation4 + $0x450] sm:$0xff]
    %v1085 = vld [vmem:[#allocation4 + $0x458] sm:$0xff]
    %v1086 = vld [vmem:[#allocation4 + $0x460] sm:$0xff]
    %v1087 = vld [vmem:[#allocation4 + $0x468] sm:$0xff]
    %v1088 = vld [vmem:[#allocation4 + $0x470] sm:$0xff]
    %v1089 = vld [vmem:[#allocation4 + $0x478] sm:$0xff]
    %v1090 = vld [vmem:[%s4] sm:$0x7]
    %v1092 = vlaneseq
    %v1093 = vshrl.u32 %v1092, 7
    %v1094 = vsub.s32 0, %v1093
    %v1095 = vrot.slane %v1090, %v1094
    %v1096 = vlaneseq
    %v1097 = vshrl.u32 %v1096, 7
    %v1098 = vsub.s32 1, %v1097
    %v1099 = vrot.slane %v1090, %v1098
    %v1100 = vlaneseq
    %v1101 = vshrl.u32 %v1100, 7
    %v1102 = vsub.s32 2, %v1101
    %v1103 = vrot.slane %v1090, %v1102
    %1107 = vmatprep.subr.mxu0 %v992
    %1108 = vmatpush1.msra.mxu0 %v991
    %1109 = vmatprep.subr.mxu0 %v989
    %1110 = vmatpush1.msra.mxu0 %v988
    %1111 = vmatprep.subr.mxu0 %v986
    %1112 = vmatpush1.msra.mxu0 %v985
    %1113 = vmatprep.subr.mxu0 %v983
    %1114 = vmatpush1.msra.mxu0 %v982
    %1115 = vmatprep.subr.mxu0 %v980
    %1116 = vmatpush1.msra.mxu0 %v979
    %1117 = vmatprep.subr.mxu0 %v977
    %1118 = vmatpush1.msra.mxu0 %v976
    %1119 = vmatprep.subr.mxu0 %v974
    %1120 = vmatpush1.msra.mxu0 %v973
    %1121 = vmatprep.subr.mxu0 %v971
    %1122 = vmatpush1.msra.mxu0 %v970
    %1123 = vmatprep.subr.mxu0 %v968
    %1124 = vmatpush1.msra.mxu0 %v967
    %1125 = vmatprep.subr.mxu0 %v965
    %1126 = vmatpush1.msra.mxu0 %v964
    %1127 = vmatprep.subr.mxu0 %v962
    %1128 = vmatpush1.msra.mxu0 %v961
    %1129 = vmatprep.subr.mxu0 %v959
    %1130 = vmatpush1.msra.mxu0 %v958
    %1131 = vmatprep.subr.mxu0 %v956
    %1132 = vmatpush1.msra.mxu0 %v955
    %1133 = vmatprep.subr.mxu0 %v953
    %1134 = vmatpush1.msra.mxu0 %v952
    %1135 = vmatprep.subr.mxu0 %v950
    %1136 = vmatpush1.msra.mxu0 %v949
    %1137 = vmatprep.subr.mxu0 %v947
    %1138 = vmatpush1.msra.mxu0 %v946
    %1139 = vmatprep.subr.mxu0 %v1040
    %1140 = vmatpush2.msra.mxu0 %v1039
    %1141 = vmatprep.subr.mxu0 %v1037
    %1142 = vmatpush2.msra.mxu0 %v1036
    %1143 = vmatprep.subr.mxu0 %v1034
    %1144 = vmatpush2.msra.mxu0 %v1033
    %1145 = vmatprep.subr.mxu0 %v1031
    %1146 = vmatpush2.msra.mxu0 %v1030
    %1147 = vmatprep.subr.mxu0 %v1028
    %1148 = vmatpush2.msra.mxu0 %v1027
    %1149 = vmatprep.subr.mxu0 %v1025
    %1150 = vmatpush2.msra.mxu0 %v1024
    %1151 = vmatprep.subr.mxu0 %v1022
    %1152 = vmatpush2.msra.mxu0 %v1021
    %1153 = vmatprep.subr.mxu0 %v1019
    %1154 = vmatpush2.msra.mxu0 %v1018
    %1155 = vmatprep.subr.mxu0 %v1016
    %1156 = vmatpush2.msra.mxu0 %v1015
    %1157 = vmatprep.subr.mxu0 %v1013
    %1158 = vmatpush2.msra.mxu0 %v1012
    %1159 = vmatprep.subr.mxu0 %v1010
    %1160 = vmatpush2.msra.mxu0 %v1009
    %1161 = vmatprep.subr.mxu0 %v1007
    %1162 = vmatpush2.msra.mxu0 %v1006
    %1163 = vmatprep.subr.mxu0 %v1004
    %1164 = vmatpush2.msra.mxu0 %v1003
    %1165 = vmatprep.subr.mxu0 %v1001
    %1166 = vmatpush2.msra.mxu0 %v1000
    %1167 = vmatprep.subr.mxu0 %v998
    %1168 = vmatpush2.msra.mxu0 %v997
    %1169 = vmatprep.subr.mxu0 %v995
    %1170 = vmatpush2.msra.mxu0 %v994
    %1171 = vmatprep.mubr.f32.mxu0 %v851
    %1172 = vmatmul.mubr.f32.gmra.mxu0 %v850
    %v1173 = vpop.f32.mrf.mxu0
    %v1174 = vadd.f32 %v1095, %v1173
    %v1175 = vpop.f32.mrf.mxu0
    %v1176 = vadd.f32 %v1099, %v1175
    %1177 = vmatprep.mubr.f32.mxu0 %v854
    %1178 = vmatmul.mubr.f32.gmra.mxu0 %v853
    %v1179 = vpop.f32.mrf.mxu0
    %v1180 = vadd.f32 %v1095, %v1179
    %v1181 = vpop.f32.mrf.mxu0
    %v1182 = vadd.f32 %v1099, %v1181
    %1183 = vmatprep.mubr.f32.mxu0 %v857
    %1184 = vmatmul.mubr.f32.gmra.mxu0 %v856
    %v1185 = vpop.f32.mrf.mxu0
    %v1186 = vadd.f32 %v1095, %v1185
    %v1187 = vpop.f32.mrf.mxu0
    %v1188 = vadd.f32 %v1099, %v1187
    %1189 = vmatprep.mubr.f32.mxu0 %v860
    %1190 = vmatmul.mubr.f32.gmra.mxu0 %v859
    %v1191 = vpop.f32.mrf.mxu0
    %v1192 = vadd.f32 %v1095, %v1191
    %v1193 = vpop.f32.mrf.mxu0
    %v1194 = vadd.f32 %v1099, %v1193
    %1195 = vmatprep.mubr.f32.mxu0 %v863
    %1196 = vmatmul.mubr.f32.gmra.mxu0 %v862
    %v1197 = vpop.f32.mrf.mxu0
    %v1198 = vadd.f32 %v1095, %v1197
    %v1199 = vpop.f32.mrf.mxu0
    %v1200 = vadd.f32 %v1099, %v1199
    %1201 = vmatprep.mubr.f32.mxu0 %v866
    %1202 = vmatmul.mubr.f32.gmra.mxu0 %v865
    %v1203 = vpop.f32.mrf.mxu0
    %v1204 = vadd.f32 %v1095, %v1203
    %v1205 = vpop.f32.mrf.mxu0
    %v1206 = vadd.f32 %v1099, %v1205
    %1207 = vmatprep.mubr.f32.mxu0 %v869
    %1208 = vmatmul.mubr.f32.gmra.mxu0 %v868
    %v1209 = vpop.f32.mrf.mxu0
    %v1210 = vadd.f32 %v1095, %v1209
    %v1211 = vpop.f32.mrf.mxu0
    %v1212 = vadd.f32 %v1099, %v1211
    %1213 = vmatprep.mubr.f32.mxu0 %v872
    %1214 = vmatmul.mubr.f32.gmra.mxu0 %v871
    %v1215 = vpop.f32.mrf.mxu0
    %v1216 = vadd.f32 %v1095, %v1215
    %v1217 = vpop.f32.mrf.mxu0
    %v1218 = vadd.f32 %v1099, %v1217
    %1219 = vmatprep.mubr.f32.mxu0 %v875
    %1220 = vmatmul.mubr.f32.gmra.mxu0 %v874
    %v1221 = vpop.f32.mrf.mxu0
    %v1222 = vadd.f32 %v1095, %v1221
    %v1223 = vpop.f32.mrf.mxu0
    %v1224 = vadd.f32 %v1099, %v1223
    %1225 = vmatprep.mubr.f32.mxu0 %v878
    %1226 = vmatmul.mubr.f32.gmra.mxu0 %v877
    %v1227 = vpop.f32.mrf.mxu0
    %v1228 = vadd.f32 %v1095, %v1227
    %v1229 = vpop.f32.mrf.mxu0
    %v1230 = vadd.f32 %v1099, %v1229
    %1231 = vmatprep.mubr.f32.mxu0 %v881
    %1232 = vmatmul.mubr.f32.gmra.mxu0 %v880
    %v1233 = vpop.f32.mrf.mxu0
    %v1234 = vadd.f32 %v1095, %v1233
    %v1235 = vpop.f32.mrf.mxu0
    %v1236 = vadd.f32 %v1099, %v1235
    %1237 = vmatprep.mubr.f32.mxu0 %v884
    %1238 = vmatmul.mubr.f32.gmra.mxu0 %v883
    %v1239 = vpop.f32.mrf.mxu0
    %v1240 = vadd.f32 %v1095, %v1239
    %v1241 = vpop.f32.mrf.mxu0
    %v1242 = vadd.f32 %v1099, %v1241
    %1243 = vmatprep.mubr.f32.mxu0 %v887
    %1244 = vmatmul.mubr.f32.gmra.mxu0 %v886
    %v1245 = vpop.f32.mrf.mxu0
    %v1246 = vadd.f32 %v1095, %v1245
    %v1247 = vpop.f32.mrf.mxu0
    %v1248 = vadd.f32 %v1099, %v1247
    %1249 = vmatprep.mubr.f32.mxu0 %v890
    %1250 = vmatmul.mubr.f32.gmra.mxu0 %v889
    %v1251 = vpop.f32.mrf.mxu0
    %v1252 = vadd.f32 %v1095, %v1251
    %v1253 = vpop.f32.mrf.mxu0
    %v1254 = vadd.f32 %v1099, %v1253
    %1255 = vmatprep.mubr.f32.mxu0 %v893
    %1256 = vmatmul.mubr.f32.gmra.mxu0 %v892
    %v1257 = vpop.f32.mrf.mxu0
    %v1258 = vadd.f32 %v1095, %v1257
    %v1259 = vpop.f32.mrf.mxu0
    %v1260 = vadd.f32 %v1099, %v1259
    %1261 = vmatprep.mubr.f32.mxu0 %v896
    %1262 = vmatmul.mubr.f32.gmra.mxu0 %v895
    %v1263 = vpop.f32.mrf.mxu0
    %v1264 = vadd.f32 %v1095, %v1263
    %v1265 = vpop.f32.mrf.mxu0
    %v1266 = vadd.f32 %v1099, %v1265
    %1267 = vmatprep.mubr.f32.mxu0 %v899
    %1268 = vmatmul.mubr.f32.gmra.mxu0 %v898
    %v1269 = vpop.f32.mrf.mxu0
    %v1270 = vadd.f32 %v1095, %v1269
    %v1271 = vpop.f32.mrf.mxu0
    %v1272 = vadd.f32 %v1099, %v1271
    %1273 = vmatprep.mubr.f32.mxu0 %v902
    %1274 = vmatmul.mubr.f32.gmra.mxu0 %v901
    %v1275 = vpop.f32.mrf.mxu0
    %v1276 = vadd.f32 %v1095, %v1275
    %v1277 = vpop.f32.mrf.mxu0
    %v1278 = vadd.f32 %v1099, %v1277
    %1279 = vmatprep.mubr.f32.mxu0 %v905
    %1280 = vmatmul.mubr.f32.gmra.mxu0 %v904
    %v1281 = vpop.f32.mrf.mxu0
    %v1282 = vadd.f32 %v1095, %v1281
    %v1283 = vpop.f32.mrf.mxu0
    %v1284 = vadd.f32 %v1099, %v1283
    %1285 = vmatprep.mubr.f32.mxu0 %v908
    %1286 = vmatmul.mubr.f32.gmra.mxu0 %v907
    %v1287 = vpop.f32.mrf.mxu0
    %v1288 = vadd.f32 %v1095, %v1287
    %v1289 = vpop.f32.mrf.mxu0
    %v1290 = vadd.f32 %v1099, %v1289
    %1291 = vmatprep.mubr.f32.mxu0 %v911
    %1292 = vmatmul.mubr.f32.gmra.mxu0 %v910
    %v1293 = vpop.f32.mrf.mxu0
    %v1294 = vadd.f32 %v1095, %v1293
    %v1295 = vpop.f32.mrf.mxu0
    %v1296 = vadd.f32 %v1099, %v1295
    %1297 = vmatprep.mubr.f32.mxu0 %v914
    %1298 = vmatmul.mubr.f32.gmra.mxu0 %v913
    %v1299 = vpop.f32.mrf.mxu0
    %v1300 = vadd.f32 %v1095, %v1299
    %v1301 = vpop.f32.mrf.mxu0
    %v1302 = vadd.f32 %v1099, %v1301
    %1303 = vmatprep.mubr.f32.mxu0 %v917
    %1304 = vmatmul.mubr.f32.gmra.mxu0 %v916
    %v1305 = vpop.f32.mrf.mxu0
    %v1306 = vadd.f32 %v1095, %v1305
    %v1307 = vpop.f32.mrf.mxu0
    %v1308 = vadd.f32 %v1099, %v1307
    %1309 = vmatprep.mubr.f32.mxu0 %v920
    %1310 = vmatmul.mubr.f32.gmra.mxu0 %v919
    %v1311 = vpop.f32.mrf.mxu0
    %v1312 = vadd.f32 %v1095, %v1311
    %v1313 = vpop.f32.mrf.mxu0
    %v1314 = vadd.f32 %v1099, %v1313
    %1315 = vmatprep.mubr.f32.mxu0 %v923
    %1316 = vmatmul.mubr.f32.gmra.mxu0 %v922
    %v1317 = vpop.f32.mrf.mxu0
    %v1318 = vadd.f32 %v1095, %v1317
    %v1319 = vpop.f32.mrf.mxu0
    %v1320 = vadd.f32 %v1099, %v1319
    %1321 = vmatprep.mubr.f32.mxu0 %v926
    %1322 = vmatmul.mubr.f32.gmra.mxu0 %v925
    %v1323 = vpop.f32.mrf.mxu0
    %v1324 = vadd.f32 %v1095, %v1323
    %v1325 = vpop.f32.mrf.mxu0
    %v1326 = vadd.f32 %v1099, %v1325
    %1327 = vmatprep.mubr.f32.mxu0 %v929
    %1328 = vmatmul.mubr.f32.gmra.mxu0 %v928
    %v1329 = vpop.f32.mrf.mxu0
    %v1330 = vadd.f32 %v1095, %v1329
    %v1331 = vpop.f32.mrf.mxu0
    %v1332 = vadd.f32 %v1099, %v1331
    %1333 = vmatprep.mubr.f32.mxu0 %v932
    %1334 = vmatmul.mubr.f32.gmra.mxu0 %v931
    %v1335 = vpop.f32.mrf.mxu0
    %v1336 = vadd.f32 %v1095, %v1335
    %v1337 = vpop.f32.mrf.mxu0
    %v1338 = vadd.f32 %v1099, %v1337
    %1339 = vmatprep.mubr.f32.mxu0 %v935
    %1340 = vmatmul.mubr.f32.gmra.mxu0 %v934
    %v1341 = vpop.f32.mrf.mxu0
    %v1342 = vadd.f32 %v1095, %v1341
    %v1343 = vpop.f32.mrf.mxu0
    %v1344 = vadd.f32 %v1099, %v1343
    %1345 = vmatprep.mubr.f32.mxu0 %v938
    %1346 = vmatmul.mubr.f32.gmra.mxu0 %v937
    %v1347 = vpop.f32.mrf.mxu0
    %v1348 = vadd.f32 %v1095, %v1347
    %v1349 = vpop.f32.mrf.mxu0
    %v1350 = vadd.f32 %v1099, %v1349
    %1351 = vmatprep.mubr.f32.mxu0 %v941
    %1352 = vmatmul.mubr.f32.gmra.mxu0 %v940
    %v1353 = vpop.f32.mrf.mxu0
    %v1354 = vadd.f32 %v1095, %v1353
    %v1355 = vpop.f32.mrf.mxu0
    %v1356 = vadd.f32 %v1099, %v1355
    %1357 = vmatprep.mubr.f32.mxu0 %v944
    %1358 = vmatmul.mubr.f32.gmra.mxu0 %v943
    %v1359 = vpop.f32.mrf.mxu0
    %v1360 = vadd.f32 %v1095, %v1359
    %v1361 = vpop.f32.mrf.mxu0
    %v1362 = vadd.f32 %v1099, %v1361
    %1363 = vdwg.mxu0
    %1364 = vmatprep.subr.mxu0 %v1088
    %1365 = vmatpush1.msra.mxu0 %v1087
    %1366 = vmatprep.subr.mxu0 %v1085
    %1367 = vmatpush1.msra.mxu0 %v1084
    %1368 = vmatprep.subr.mxu0 %v1082
    %1369 = vmatpush1.msra.mxu0 %v1081
    %1370 = vmatprep.subr.mxu0 %v1079
    %1371 = vmatpush1.msra.mxu0 %v1078
    %1372 = vmatprep.subr.mxu0 %v1076
    %1373 = vmatpush1.msra.mxu0 %v1075
    %1374 = vmatprep.subr.mxu0 %v1073
    %1375 = vmatpush1.msra.mxu0 %v1072
    %1376 = vmatprep.subr.mxu0 %v1070
    %1377 = vmatpush1.msra.mxu0 %v1069
    %1378 = vmatprep.subr.mxu0 %v1067
    %1379 = vmatpush1.msra.mxu0 %v1066
    %1380 = vmatprep.subr.mxu0 %v1064
    %1381 = vmatpush1.msra.mxu0 %v1063
    %1382 = vmatprep.subr.mxu0 %v1061
    %1383 = vmatpush1.msra.mxu0 %v1060
    %1384 = vmatprep.subr.mxu0 %v1058
    %1385 = vmatpush1.msra.mxu0 %v1057
    %1386 = vmatprep.subr.mxu0 %v1055
    %1387 = vmatpush1.msra.mxu0 %v1054
    %1388 = vmatprep.subr.mxu0 %v1052
    %1389 = vmatpush1.msra.mxu0 %v1051
    %1390 = vmatprep.subr.mxu0 %v1049
    %1391 = vmatpush1.msra.mxu0 %v1048
    %1392 = vmatprep.subr.mxu0 %v1046
    %1393 = vmatpush1.msra.mxu0 %v1045
    %1394 = vmatprep.subr.mxu0 %v1043
    %1395 = vmatpush1.msra.mxu0 %v1042
    %1396 = vmatprep.subr.mxu0 0.0
    %1397 = vmatpush2.msra.mxu0 0.0
    %1398 = vmatprep.subr.mxu0 0.0
    %1399 = vmatpush2.msra.mxu0 0.0
    %1400 = vmatprep.subr.mxu0 0.0
    %1401 = vmatpush2.msra.mxu0 0.0
    %1402 = vmatprep.subr.mxu0 0.0
    %1403 = vmatpush2.msra.mxu0 0.0
    %1404 = vmatprep.subr.mxu0 0.0
    %1405 = vmatpush2.msra.mxu0 0.0
    %1406 = vmatprep.subr.mxu0 0.0
    %1407 = vmatpush2.msra.mxu0 0.0
    %1408 = vmatprep.subr.mxu0 0.0
    %1409 = vmatpush2.msra.mxu0 0.0
    %1410 = vmatprep.subr.mxu0 0.0
    %1411 = vmatpush2.msra.mxu0 0.0
    %1412 = vmatprep.subr.mxu0 0.0
    %1413 = vmatpush2.msra.mxu0 0.0
    %1414 = vmatprep.subr.mxu0 0.0
    %1415 = vmatpush2.msra.mxu0 0.0
    %1416 = vmatprep.subr.mxu0 0.0
    %1417 = vmatpush2.msra.mxu0 0.0
    %1418 = vmatprep.subr.mxu0 0.0
    %1419 = vmatpush2.msra.mxu0 0.0
    %1420 = vmatprep.subr.mxu0 0.0
    %1421 = vmatpush2.msra.mxu0 0.0
    %1422 = vmatprep.subr.mxu0 0.0
    %1423 = vmatpush2.msra.mxu0 0.0
    %1424 = vmatprep.subr.mxu0 0.0
    %1425 = vmatpush2.msra.mxu0 0.0
    %1426 = vmatprep.subr.mxu0 0.0
    %1427 = vmatpush2.msra.mxu0 0.0
    %1428 = vmatprep.mubr.f32.mxu0 0.0
    %1429 = vmatmul.mubr.f32.gmra.mxu0 %v852
    %v1430 = vpop.f32.mrf.mxu0
    %v1431 = vadd.f32 %v1174, %v1430
    %v1432 = vpop.f32.mrf.mxu0
    %v1433 = vadd.f32 %v1176, %v1432
    %1434 = vmatprep.mubr.f32.mxu0 0.0
    %1435 = vmatmul.mubr.f32.gmra.mxu0 %v855
    %v1436 = vpop.f32.mrf.mxu0
    %v1437 = vadd.f32 %v1180, %v1436
    %v1438 = vpop.f32.mrf.mxu0
    %v1439 = vadd.f32 %v1182, %v1438
    %1440 = vmatprep.mubr.f32.mxu0 0.0
    %1441 = vmatmul.mubr.f32.gmra.mxu0 %v858
    %v1442 = vpop.f32.mrf.mxu0
    %v1443 = vadd.f32 %v1186, %v1442
    %v1444 = vpop.f32.mrf.mxu0
    %v1445 = vadd.f32 %v1188, %v1444
    %1446 = vmatprep.mubr.f32.mxu0 0.0
    %1447 = vmatmul.mubr.f32.gmra.mxu0 %v861
    %v1448 = vpop.f32.mrf.mxu0
    %v1449 = vadd.f32 %v1192, %v1448
    %v1450 = vpop.f32.mrf.mxu0
    %v1451 = vadd.f32 %v1194, %v1450
    %1452 = vmatprep.mubr.f32.mxu0 0.0
    %1453 = vmatmul.mubr.f32.gmra.mxu0 %v864
    %v1454 = vpop.f32.mrf.mxu0
    %v1455 = vadd.f32 %v1198, %v1454
    %v1456 = vpop.f32.mrf.mxu0
    %v1457 = vadd.f32 %v1200, %v1456
    %1458 = vmatprep.mubr.f32.mxu0 0.0
    %1459 = vmatmul.mubr.f32.gmra.mxu0 %v867
    %v1460 = vpop.f32.mrf.mxu0
    %v1461 = vadd.f32 %v1204, %v1460
    %v1462 = vpop.f32.mrf.mxu0
    %v1463 = vadd.f32 %v1206, %v1462
    %1464 = vmatprep.mubr.f32.mxu0 0.0
    %1465 = vmatmul.mubr.f32.gmra.mxu0 %v870
    %v1466 = vpop.f32.mrf.mxu0
    %v1467 = vadd.f32 %v1210, %v1466
    %v1468 = vpop.f32.mrf.mxu0
    %v1469 = vadd.f32 %v1212, %v1468
    %1470 = vmatprep.mubr.f32.mxu0 0.0
    %1471 = vmatmul.mubr.f32.gmra.mxu0 %v873
    %v1472 = vpop.f32.mrf.mxu0
    %v1473 = vadd.f32 %v1216, %v1472
    %v1474 = vpop.f32.mrf.mxu0
    %v1475 = vadd.f32 %v1218, %v1474
    %1476 = vmatprep.mubr.f32.mxu0 0.0
    %1477 = vmatmul.mubr.f32.gmra.mxu0 %v876
    %v1478 = vpop.f32.mrf.mxu0
    %v1479 = vadd.f32 %v1222, %v1478
    %v1480 = vpop.f32.mrf.mxu0
    %v1481 = vadd.f32 %v1224, %v1480
    %1482 = vmatprep.mubr.f32.mxu0 0.0
    %1483 = vmatmul.mubr.f32.gmra.mxu0 %v879
    %v1484 = vpop.f32.mrf.mxu0
    %v1485 = vadd.f32 %v1228, %v1484
    %v1486 = vpop.f32.mrf.mxu0
    %v1487 = vadd.f32 %v1230, %v1486
    %1488 = vmatprep.mubr.f32.mxu0 0.0
    %1489 = vmatmul.mubr.f32.gmra.mxu0 %v882
    %v1490 = vpop.f32.mrf.mxu0
    %v1491 = vadd.f32 %v1234, %v1490
    %v1492 = vpop.f32.mrf.mxu0
    %v1493 = vadd.f32 %v1236, %v1492
    %1494 = vmatprep.mubr.f32.mxu0 0.0
    %1495 = vmatmul.mubr.f32.gmra.mxu0 %v885
    %v1496 = vpop.f32.mrf.mxu0
    %v1497 = vadd.f32 %v1240, %v1496
    %v1498 = vpop.f32.mrf.mxu0
    %v1499 = vadd.f32 %v1242, %v1498
    %1500 = vmatprep.mubr.f32.mxu0 0.0
    %1501 = vmatmul.mubr.f32.gmra.mxu0 %v888
    %v1502 = vpop.f32.mrf.mxu0
    %v1503 = vadd.f32 %v1246, %v1502
    %v1504 = vpop.f32.mrf.mxu0
    %v1505 = vadd.f32 %v1248, %v1504
    %1506 = vmatprep.mubr.f32.mxu0 0.0
    %1507 = vmatmul.mubr.f32.gmra.mxu0 %v891
    %v1508 = vpop.f32.mrf.mxu0
    %v1509 = vadd.f32 %v1252, %v1508
    %v1510 = vpop.f32.mrf.mxu0
    %v1511 = vadd.f32 %v1254, %v1510
    %1512 = vmatprep.mubr.f32.mxu0 0.0
    %1513 = vmatmul.mubr.f32.gmra.mxu0 %v894
    %v1514 = vpop.f32.mrf.mxu0
    %v1515 = vadd.f32 %v1258, %v1514
    %v1516 = vpop.f32.mrf.mxu0
    %v1517 = vadd.f32 %v1260, %v1516
    %1518 = vmatprep.mubr.f32.mxu0 0.0
    %1519 = vmatmul.mubr.f32.gmra.mxu0 %v897
    %v1520 = vpop.f32.mrf.mxu0
    %v1521 = vadd.f32 %v1264, %v1520
    %v1522 = vpop.f32.mrf.mxu0
    %v1523 = vadd.f32 %v1266, %v1522
    %1524 = vmatprep.mubr.f32.mxu0 0.0
    %1525 = vmatmul.mubr.f32.gmra.mxu0 %v900
    %v1526 = vpop.f32.mrf.mxu0
    %v1527 = vadd.f32 %v1270, %v1526
    %v1528 = vpop.f32.mrf.mxu0
    %v1529 = vadd.f32 %v1272, %v1528
    %1530 = vmatprep.mubr.f32.mxu0 0.0
    %1531 = vmatmul.mubr.f32.gmra.mxu0 %v903
    %v1532 = vpop.f32.mrf.mxu0
    %v1533 = vadd.f32 %v1276, %v1532
    %v1534 = vpop.f32.mrf.mxu0
    %v1535 = vadd.f32 %v1278, %v1534
    %1536 = vmatprep.mubr.f32.mxu0 0.0
    %1537 = vmatmul.mubr.f32.gmra.mxu0 %v906
    %v1538 = vpop.f32.mrf.mxu0
    %v1539 = vadd.f32 %v1282, %v1538
    %v1540 = vpop.f32.mrf.mxu0
    %v1541 = vadd.f32 %v1284, %v1540
    %1542 = vmatprep.mubr.f32.mxu0 0.0
    %1543 = vmatmul.mubr.f32.gmra.mxu0 %v909
    %v1544 = vpop.f32.mrf.mxu0
    %v1545 = vadd.f32 %v1288, %v1544
    %v1546 = vpop.f32.mrf.mxu0
    %v1547 = vadd.f32 %v1290, %v1546
    %1548 = vmatprep.mubr.f32.mxu0 0.0
    %1549 = vmatmul.mubr.f32.gmra.mxu0 %v912
    %v1550 = vpop.f32.mrf.mxu0
    %v1551 = vadd.f32 %v1294, %v1550
    %v1552 = vpop.f32.mrf.mxu0
    %v1553 = vadd.f32 %v1296, %v1552
    %1554 = vmatprep.mubr.f32.mxu0 0.0
    %1555 = vmatmul.mubr.f32.gmra.mxu0 %v915
    %v1556 = vpop.f32.mrf.mxu0
    %v1557 = vadd.f32 %v1300, %v1556
    %v1558 = vpop.f32.mrf.mxu0
    %v1559 = vadd.f32 %v1302, %v1558
    %1560 = vmatprep.mubr.f32.mxu0 0.0
    %1561 = vmatmul.mubr.f32.gmra.mxu0 %v918
    %v1562 = vpop.f32.mrf.mxu0
    %v1563 = vadd.f32 %v1306, %v1562
    %v1564 = vpop.f32.mrf.mxu0
    %v1565 = vadd.f32 %v1308, %v1564
    %1566 = vmatprep.mubr.f32.mxu0 0.0
    %1567 = vmatmul.mubr.f32.gmra.mxu0 %v921
    %v1568 = vpop.f32.mrf.mxu0
    %v1569 = vadd.f32 %v1312, %v1568
    %v1570 = vpop.f32.mrf.mxu0
    %v1571 = vadd.f32 %v1314, %v1570
    %1572 = vmatprep.mubr.f32.mxu0 0.0
    %1573 = vmatmul.mubr.f32.gmra.mxu0 %v924
    %v1574 = vpop.f32.mrf.mxu0
    %v1575 = vadd.f32 %v1318, %v1574
    %v1576 = vpop.f32.mrf.mxu0
    %v1577 = vadd.f32 %v1320, %v1576
    %1578 = vmatprep.mubr.f32.mxu0 0.0
    %1579 = vmatmul.mubr.f32.gmra.mxu0 %v927
    %v1580 = vpop.f32.mrf.mxu0
    %v1581 = vadd.f32 %v1324, %v1580
    %v1582 = vpop.f32.mrf.mxu0
    %v1583 = vadd.f32 %v1326, %v1582
    %1584 = vmatprep.mubr.f32.mxu0 0.0
    %1585 = vmatmul.mubr.f32.gmra.mxu0 %v930
    %v1586 = vpop.f32.mrf.mxu0
    %v1587 = vadd.f32 %v1330, %v1586
    %v1588 = vpop.f32.mrf.mxu0
    %v1589 = vadd.f32 %v1332, %v1588
    %1590 = vmatprep.mubr.f32.mxu0 0.0
    %1591 = vmatmul.mubr.f32.gmra.mxu0 %v933
    %v1592 = vpop.f32.mrf.mxu0
    %v1593 = vadd.f32 %v1336, %v1592
    %v1594 = vpop.f32.mrf.mxu0
    %v1595 = vadd.f32 %v1338, %v1594
    %1596 = vmatprep.mubr.f32.mxu0 0.0
    %1597 = vmatmul.mubr.f32.gmra.mxu0 %v936
    %v1598 = vpop.f32.mrf.mxu0
    %v1599 = vadd.f32 %v1342, %v1598
    %v1600 = vpop.f32.mrf.mxu0
    %v1601 = vadd.f32 %v1344, %v1600
    %1602 = vmatprep.mubr.f32.mxu0 0.0
    %1603 = vmatmul.mubr.f32.gmra.mxu0 %v939
    %v1604 = vpop.f32.mrf.mxu0
    %v1605 = vadd.f32 %v1348, %v1604
    %v1606 = vpop.f32.mrf.mxu0
    %v1607 = vadd.f32 %v1350, %v1606
    %1608 = vmatprep.mubr.f32.mxu0 0.0
    %1609 = vmatmul.mubr.f32.gmra.mxu0 %v942
    %v1610 = vpop.f32.mrf.mxu0
    %v1611 = vadd.f32 %v1354, %v1610
    %v1612 = vpop.f32.mrf.mxu0
    %v1613 = vadd.f32 %v1356, %v1612
    %1614 = vmatprep.mubr.f32.mxu0 0.0
    %1615 = vmatmul.mubr.f32.gmra.mxu0 %v945
    %v1616 = vpop.f32.mrf.mxu0
    %v1617 = vadd.f32 %v1360, %v1616
    %v1618 = vpop.f32.mrf.mxu0
    %v1619 = vadd.f32 %v1362, %v1618
    %1620 = vdwg.mxu0
    %1621 = vmatprep.subr.mxu0 0.0
    %1622 = vmatpush1.msra.mxu0 %v993
    %1623 = vmatprep.subr.mxu0 0.0
    %1624 = vmatpush1.msra.mxu0 %v990
    %1625 = vmatprep.subr.mxu0 0.0
    %1626 = vmatpush1.msra.mxu0 %v987
    %1627 = vmatprep.subr.mxu0 0.0
    %1628 = vmatpush1.msra.mxu0 %v984
    %1629 = vmatprep.subr.mxu0 0.0
    %1630 = vmatpush1.msra.mxu0 %v981
    %1631 = vmatprep.subr.mxu0 0.0
    %1632 = vmatpush1.msra.mxu0 %v978
    %1633 = vmatprep.subr.mxu0 0.0
    %1634 = vmatpush1.msra.mxu0 %v975
    %1635 = vmatprep.subr.mxu0 0.0
    %1636 = vmatpush1.msra.mxu0 %v972
    %1637 = vmatprep.subr.mxu0 0.0
    %1638 = vmatpush1.msra.mxu0 %v969
    %1639 = vmatprep.subr.mxu0 0.0
    %1640 = vmatpush1.msra.mxu0 %v966
    %1641 = vmatprep.subr.mxu0 0.0
    %1642 = vmatpush1.msra.mxu0 %v963
    %1643 = vmatprep.subr.mxu0 0.0
    %1644 = vmatpush1.msra.mxu0 %v960
    %1645 = vmatprep.subr.mxu0 0.0
    %1646 = vmatpush1.msra.mxu0 %v957
    %1647 = vmatprep.subr.mxu0 0.0
    %1648 = vmatpush1.msra.mxu0 %v954
    %1649 = vmatprep.subr.mxu0 0.0
    %1650 = vmatpush1.msra.mxu0 %v951
    %1651 = vmatprep.subr.mxu0 0.0
    %1652 = vmatpush1.msra.mxu0 %v948
    %1653 = vmatprep.subr.mxu0 0.0
    %1654 = vmatpush2.msra.mxu0 %v1041
    %1655 = vmatprep.subr.mxu0 0.0
    %1656 = vmatpush2.msra.mxu0 %v1038
    %1657 = vmatprep.subr.mxu0 0.0
    %1658 = vmatpush2.msra.mxu0 %v1035
    %1659 = vmatprep.subr.mxu0 0.0
    %1660 = vmatpush2.msra.mxu0 %v1032
    %1661 = vmatprep.subr.mxu0 0.0
    %1662 = vmatpush2.msra.mxu0 %v1029
    %1663 = vmatprep.subr.mxu0 0.0
    %1664 = vmatpush2.msra.mxu0 %v1026
    %1665 = vmatprep.subr.mxu0 0.0
    %1666 = vmatpush2.msra.mxu0 %v1023
    %1667 = vmatprep.subr.mxu0 0.0
    %1668 = vmatpush2.msra.mxu0 %v1020
    %1669 = vmatprep.subr.mxu0 0.0
    %1670 = vmatpush2.msra.mxu0 %v1017
    %1671 = vmatprep.subr.mxu0 0.0
    %1672 = vmatpush2.msra.mxu0 %v1014
    %1673 = vmatprep.subr.mxu0 0.0
    %1674 = vmatpush2.msra.mxu0 %v1011
    %1675 = vmatprep.subr.mxu0 0.0
    %1676 = vmatpush2.msra.mxu0 %v1008
    %1677 = vmatprep.subr.mxu0 0.0
    %1678 = vmatpush2.msra.mxu0 %v1005
    %1679 = vmatprep.subr.mxu0 0.0
    %1680 = vmatpush2.msra.mxu0 %v1002
    %1681 = vmatprep.subr.mxu0 0.0
    %1682 = vmatpush2.msra.mxu0 %v999
    %1683 = vmatprep.subr.mxu0 0.0
    %1684 = vmatpush2.msra.mxu0 %v996
    %1685 = vmatprep.mubr.f32.mxu0 %v851
    %1686 = vmatmul.mubr.f32.gmra.mxu0 %v850
    %v1687 = vpop.f32.mrf.mxu0
    %v1688 = vadd.f32 %v1103, %v1687
    %v1689 = vpop.f32.mrf.mxu0
    %1690 = vmatprep.mubr.f32.mxu0 %v854
    %1691 = vmatmul.mubr.f32.gmra.mxu0 %v853
    %v1692 = vpop.f32.mrf.mxu0
    %v1693 = vadd.f32 %v1103, %v1692
    %v1694 = vpop.f32.mrf.mxu0
    %1695 = vmatprep.mubr.f32.mxu0 %v857
    %1696 = vmatmul.mubr.f32.gmra.mxu0 %v856
    %v1697 = vpop.f32.mrf.mxu0
    %v1698 = vadd.f32 %v1103, %v1697
    %v1699 = vpop.f32.mrf.mxu0
    %1700 = vmatprep.mubr.f32.mxu0 %v860
    %1701 = vmatmul.mubr.f32.gmra.mxu0 %v859
    %v1702 = vpop.f32.mrf.mxu0
    %v1703 = vadd.f32 %v1103, %v1702
    %v1704 = vpop.f32.mrf.mxu0
    %1705 = vmatprep.mubr.f32.mxu0 %v863
    %1706 = vmatmul.mubr.f32.gmra.mxu0 %v862
    %v1707 = vpop.f32.mrf.mxu0
    %v1708 = vadd.f32 %v1103, %v1707
    %v1709 = vpop.f32.mrf.mxu0
    %1710 = vmatprep.mubr.f32.mxu0 %v866
    %1711 = vmatmul.mubr.f32.gmra.mxu0 %v865
    %v1712 = vpop.f32.mrf.mxu0
    %v1713 = vadd.f32 %v1103, %v1712
    %v1714 = vpop.f32.mrf.mxu0
    %1715 = vmatprep.mubr.f32.mxu0 %v869
    %1716 = vmatmul.mubr.f32.gmra.mxu0 %v868
    %v1717 = vpop.f32.mrf.mxu0
    %v1718 = vadd.f32 %v1103, %v1717
    %v1719 = vpop.f32.mrf.mxu0
    %1720 = vmatprep.mubr.f32.mxu0 %v872
    %1721 = vmatmul.mubr.f32.gmra.mxu0 %v871
    %v1722 = vpop.f32.mrf.mxu0
    %v1723 = vadd.f32 %v1103, %v1722
    %v1724 = vpop.f32.mrf.mxu0
    %1725 = vmatprep.mubr.f32.mxu0 %v875
    %1726 = vmatmul.mubr.f32.gmra.mxu0 %v874
    %v1727 = vpop.f32.mrf.mxu0
    %v1728 = vadd.f32 %v1103, %v1727
    %v1729 = vpop.f32.mrf.mxu0
    %1730 = vmatprep.mubr.f32.mxu0 %v878
    %1731 = vmatmul.mubr.f32.gmra.mxu0 %v877
    %v1732 = vpop.f32.mrf.mxu0
    %v1733 = vadd.f32 %v1103, %v1732
    %v1734 = vpop.f32.mrf.mxu0
    %1735 = vmatprep.mubr.f32.mxu0 %v881
    %1736 = vmatmul.mubr.f32.gmra.mxu0 %v880
    %v1737 = vpop.f32.mrf.mxu0
    %v1738 = vadd.f32 %v1103, %v1737
    %v1739 = vpop.f32.mrf.mxu0
    %1740 = vmatprep.mubr.f32.mxu0 %v884
    %1741 = vmatmul.mubr.f32.gmra.mxu0 %v883
    %v1742 = vpop.f32.mrf.mxu0
    %v1743 = vadd.f32 %v1103, %v1742
    %v1744 = vpop.f32.mrf.mxu0
    %1745 = vmatprep.mubr.f32.mxu0 %v887
    %1746 = vmatmul.mubr.f32.gmra.mxu0 %v886
    %v1747 = vpop.f32.mrf.mxu0
    %v1748 = vadd.f32 %v1103, %v1747
    %v1749 = vpop.f32.mrf.mxu0
    %1750 = vmatprep.mubr.f32.mxu0 %v890
    %1751 = vmatmul.mubr.f32.gmra.mxu0 %v889
    %v1752 = vpop.f32.mrf.mxu0
    %v1753 = vadd.f32 %v1103, %v1752
    %v1754 = vpop.f32.mrf.mxu0
    %1755 = vmatprep.mubr.f32.mxu0 %v893
    %1756 = vmatmul.mubr.f32.gmra.mxu0 %v892
    %v1757 = vpop.f32.mrf.mxu0
    %v1758 = vadd.f32 %v1103, %v1757
    %v1759 = vpop.f32.mrf.mxu0
    %1760 = vmatprep.mubr.f32.mxu0 %v896
    %1761 = vmatmul.mubr.f32.gmra.mxu0 %v895
    %v1762 = vpop.f32.mrf.mxu0
    %v1763 = vadd.f32 %v1103, %v1762
    %v1764 = vpop.f32.mrf.mxu0
    %1765 = vmatprep.mubr.f32.mxu0 %v899
    %1766 = vmatmul.mubr.f32.gmra.mxu0 %v898
    %v1767 = vpop.f32.mrf.mxu0
    %v1768 = vadd.f32 %v1103, %v1767
    %v1769 = vpop.f32.mrf.mxu0
    %1770 = vmatprep.mubr.f32.mxu0 %v902
    %1771 = vmatmul.mubr.f32.gmra.mxu0 %v901
    %v1772 = vpop.f32.mrf.mxu0
    %v1773 = vadd.f32 %v1103, %v1772
    %v1774 = vpop.f32.mrf.mxu0
    %1775 = vmatprep.mubr.f32.mxu0 %v905
    %1776 = vmatmul.mubr.f32.gmra.mxu0 %v904
    %v1777 = vpop.f32.mrf.mxu0
    %v1778 = vadd.f32 %v1103, %v1777
    %v1779 = vpop.f32.mrf.mxu0
    %1780 = vmatprep.mubr.f32.mxu0 %v908
    %1781 = vmatmul.mubr.f32.gmra.mxu0 %v907
    %v1782 = vpop.f32.mrf.mxu0
    %v1783 = vadd.f32 %v1103, %v1782
    %v1784 = vpop.f32.mrf.mxu0
    %1785 = vmatprep.mubr.f32.mxu0 %v911
    %1786 = vmatmul.mubr.f32.gmra.mxu0 %v910
    %v1787 = vpop.f32.mrf.mxu0
    %v1788 = vadd.f32 %v1103, %v1787
    %v1789 = vpop.f32.mrf.mxu0
    %1790 = vmatprep.mubr.f32.mxu0 %v914
    %1791 = vmatmul.mubr.f32.gmra.mxu0 %v913
    %v1792 = vpop.f32.mrf.mxu0
    %v1793 = vadd.f32 %v1103, %v1792
    %v1794 = vpop.f32.mrf.mxu0
    %1795 = vmatprep.mubr.f32.mxu0 %v917
    %1796 = vmatmul.mubr.f32.gmra.mxu0 %v916
    %v1797 = vpop.f32.mrf.mxu0
    %v1798 = vadd.f32 %v1103, %v1797
    %v1799 = vpop.f32.mrf.mxu0
    %1800 = vmatprep.mubr.f32.mxu0 %v920
    %1801 = vmatmul.mubr.f32.gmra.mxu0 %v919
    %v1802 = vpop.f32.mrf.mxu0
    %v1803 = vadd.f32 %v1103, %v1802
    %v1804 = vpop.f32.mrf.mxu0
    %1805 = vmatprep.mubr.f32.mxu0 %v923
    %1806 = vmatmul.mubr.f32.gmra.mxu0 %v922
    %v1807 = vpop.f32.mrf.mxu0
    %v1808 = vadd.f32 %v1103, %v1807
    %v1809 = vpop.f32.mrf.mxu0
    %1810 = vmatprep.mubr.f32.mxu0 %v926
    %1811 = vmatmul.mubr.f32.gmra.mxu0 %v925
    %v1812 = vpop.f32.mrf.mxu0
    %v1813 = vadd.f32 %v1103, %v1812
    %v1814 = vpop.f32.mrf.mxu0
    %1815 = vmatprep.mubr.f32.mxu0 %v929
    %1816 = vmatmul.mubr.f32.gmra.mxu0 %v928
    %v1817 = vpop.f32.mrf.mxu0
    %v1818 = vadd.f32 %v1103, %v1817
    %v1819 = vpop.f32.mrf.mxu0
    %1820 = vmatprep.mubr.f32.mxu0 %v932
    %1821 = vmatmul.mubr.f32.gmra.mxu0 %v931
    %v1822 = vpop.f32.mrf.mxu0
    %v1823 = vadd.f32 %v1103, %v1822
    %v1824 = vpop.f32.mrf.mxu0
    %1825 = vmatprep.mubr.f32.mxu0 %v935
    %1826 = vmatmul.mubr.f32.gmra.mxu0 %v934
    %v1827 = vpop.f32.mrf.mxu0
    %v1828 = vadd.f32 %v1103, %v1827
    %v1829 = vpop.f32.mrf.mxu0
    %1830 = vmatprep.mubr.f32.mxu0 %v938
    %1831 = vmatmul.mubr.f32.gmra.mxu0 %v937
    %v1832 = vpop.f32.mrf.mxu0
    %v1833 = vadd.f32 %v1103, %v1832
    %v1834 = vpop.f32.mrf.mxu0
    %1835 = vmatprep.mubr.f32.mxu0 %v941
    %1836 = vmatmul.mubr.f32.gmra.mxu0 %v940
    %v1837 = vpop.f32.mrf.mxu0
    %v1838 = vadd.f32 %v1103, %v1837
    %v1839 = vpop.f32.mrf.mxu0
    %1840 = vmatprep.mubr.f32.mxu0 %v944
    %1841 = vmatmul.mubr.f32.gmra.mxu0 %v943
    %v1842 = vpop.f32.mrf.mxu0
    %v1843 = vadd.f32 %v1103, %v1842
    %v1844 = vpop.f32.mrf.mxu0
    %1845 = vdwg.mxu0
    %1846 = vmatprep.subr.mxu0 0.0
    %1847 = vmatpush1.msra.mxu0 %v1089
    %1848 = vmatprep.subr.mxu0 0.0
    %1849 = vmatpush1.msra.mxu0 %v1086
    %1850 = vmatprep.subr.mxu0 0.0
    %1851 = vmatpush1.msra.mxu0 %v1083
    %1852 = vmatprep.subr.mxu0 0.0
    %1853 = vmatpush1.msra.mxu0 %v1080
    %1854 = vmatprep.subr.mxu0 0.0
    %1855 = vmatpush1.msra.mxu0 %v1077
    %1856 = vmatprep.subr.mxu0 0.0
    %1857 = vmatpush1.msra.mxu0 %v1074
    %1858 = vmatprep.subr.mxu0 0.0
    %1859 = vmatpush1.msra.mxu0 %v1071
    %1860 = vmatprep.subr.mxu0 0.0
    %1861 = vmatpush1.msra.mxu0 %v1068
    %1862 = vmatprep.subr.mxu0 0.0
    %1863 = vmatpush1.msra.mxu0 %v1065
    %1864 = vmatprep.subr.mxu0 0.0
    %1865 = vmatpush1.msra.mxu0 %v1062
    %1866 = vmatprep.subr.mxu0 0.0
    %1867 = vmatpush1.msra.mxu0 %v1059
    %1868 = vmatprep.subr.mxu0 0.0
    %1869 = vmatpush1.msra.mxu0 %v1056
    %1870 = vmatprep.subr.mxu0 0.0
    %1871 = vmatpush1.msra.mxu0 %v1053
    %1872 = vmatprep.subr.mxu0 0.0
    %1873 = vmatpush1.msra.mxu0 %v1050
    %1874 = vmatprep.subr.mxu0 0.0
    %1875 = vmatpush1.msra.mxu0 %v1047
    %1876 = vmatprep.subr.mxu0 0.0
    %1877 = vmatpush1.msra.mxu0 %v1044
    %1878 = vmatprep.subr.mxu0 0.0
    %1879 = vmatpush2.msra.mxu0 0.0
    %1880 = vmatprep.subr.mxu0 0.0
    %1881 = vmatpush2.msra.mxu0 0.0
    %1882 = vmatprep.subr.mxu0 0.0
    %1883 = vmatpush2.msra.mxu0 0.0
    %1884 = vmatprep.subr.mxu0 0.0
    %1885 = vmatpush2.msra.mxu0 0.0
    %1886 = vmatprep.subr.mxu0 0.0
    %1887 = vmatpush2.msra.mxu0 0.0
    %1888 = vmatprep.subr.mxu0 0.0
    %1889 = vmatpush2.msra.mxu0 0.0
    %1890 = vmatprep.subr.mxu0 0.0
    %1891 = vmatpush2.msra.mxu0 0.0
    %1892 = vmatprep.subr.mxu0 0.0
    %1893 = vmatpush2.msra.mxu0 0.0
    %1894 = vmatprep.subr.mxu0 0.0
    %1895 = vmatpush2.msra.mxu0 0.0
    %1896 = vmatprep.subr.mxu0 0.0
    %1897 = vmatpush2.msra.mxu0 0.0
    %1898 = vmatprep.subr.mxu0 0.0
    %1899 = vmatpush2.msra.mxu0 0.0
    %1900 = vmatprep.subr.mxu0 0.0
    %1901 = vmatpush2.msra.mxu0 0.0
    %1902 = vmatprep.subr.mxu0 0.0
    %1903 = vmatpush2.msra.mxu0 0.0
    %1904 = vmatprep.subr.mxu0 0.0
    %1905 = vmatpush2.msra.mxu0 0.0
    %1906 = vmatprep.subr.mxu0 0.0
    %1907 = vmatpush2.msra.mxu0 0.0
    %1908 = vmatprep.subr.mxu0 0.0
    %1909 = vmatpush2.msra.mxu0 0.0
    %1910 = vmatprep.mubr.f32.mxu0 0.0
    %1911 = vmatmul.mubr.f32.gmra.mxu0 %v852
    %v1912 = vpop.f32.mrf.mxu0
    %v1913 = vadd.f32 %v1688, %v1912
    %v1914 = vpop.f32.mrf.mxu0
    %1915 = vmatprep.mubr.f32.mxu0 0.0
    %1916 = vmatmul.mubr.f32.gmra.mxu0 %v855
    %v1917 = vpop.f32.mrf.mxu0
    %v1918 = vadd.f32 %v1693, %v1917
    %v1919 = vpop.f32.mrf.mxu0
    %1920 = vmatprep.mubr.f32.mxu0 0.0
    %1921 = vmatmul.mubr.f32.gmra.mxu0 %v858
    %v1922 = vpop.f32.mrf.mxu0
    %v1923 = vadd.f32 %v1698, %v1922
    %v1924 = vpop.f32.mrf.mxu0
    %1925 = vmatprep.mubr.f32.mxu0 0.0
    %1926 = vmatmul.mubr.f32.gmra.mxu0 %v861
    %v1927 = vpop.f32.mrf.mxu0
    %v1928 = vadd.f32 %v1703, %v1927
    %v1929 = vpop.f32.mrf.mxu0
    %1930 = vmatprep.mubr.f32.mxu0 0.0
    %1931 = vmatmul.mubr.f32.gmra.mxu0 %v864
    %v1932 = vpop.f32.mrf.mxu0
    %v1933 = vadd.f32 %v1708, %v1932
    %v1934 = vpop.f32.mrf.mxu0
    %1935 = vmatprep.mubr.f32.mxu0 0.0
    %1936 = vmatmul.mubr.f32.gmra.mxu0 %v867
    %v1937 = vpop.f32.mrf.mxu0
    %v1938 = vadd.f32 %v1713, %v1937
    %v1939 = vpop.f32.mrf.mxu0
    %1940 = vmatprep.mubr.f32.mxu0 0.0
    %1941 = vmatmul.mubr.f32.gmra.mxu0 %v870
    %v1942 = vpop.f32.mrf.mxu0
    %v1943 = vadd.f32 %v1718, %v1942
    %v1944 = vpop.f32.mrf.mxu0
    %1945 = vmatprep.mubr.f32.mxu0 0.0
    %1946 = vmatmul.mubr.f32.gmra.mxu0 %v873
    %v1947 = vpop.f32.mrf.mxu0
    %v1948 = vadd.f32 %v1723, %v1947
    %v1949 = vpop.f32.mrf.mxu0
    %1950 = vmatprep.mubr.f32.mxu0 0.0
    %1951 = vmatmul.mubr.f32.gmra.mxu0 %v876
    %v1952 = vpop.f32.mrf.mxu0
    %v1953 = vadd.f32 %v1728, %v1952
    %v1954 = vpop.f32.mrf.mxu0
    %1955 = vmatprep.mubr.f32.mxu0 0.0
    %1956 = vmatmul.mubr.f32.gmra.mxu0 %v879
    %v1957 = vpop.f32.mrf.mxu0
    %v1958 = vadd.f32 %v1733, %v1957
    %v1959 = vpop.f32.mrf.mxu0
    %1960 = vmatprep.mubr.f32.mxu0 0.0
    %1961 = vmatmul.mubr.f32.gmra.mxu0 %v882
    %v1962 = vpop.f32.mrf.mxu0
    %v1963 = vadd.f32 %v1738, %v1962
    %v1964 = vpop.f32.mrf.mxu0
    %1965 = vmatprep.mubr.f32.mxu0 0.0
    %1966 = vmatmul.mubr.f32.gmra.mxu0 %v885
    %v1967 = vpop.f32.mrf.mxu0
    %v1968 = vadd.f32 %v1743, %v1967
    %v1969 = vpop.f32.mrf.mxu0
    %1970 = vmatprep.mubr.f32.mxu0 0.0
    %1971 = vmatmul.mubr.f32.gmra.mxu0 %v888
    %v1972 = vpop.f32.mrf.mxu0
    %v1973 = vadd.f32 %v1748, %v1972
    %v1974 = vpop.f32.mrf.mxu0
    %1975 = vmatprep.mubr.f32.mxu0 0.0
    %1976 = vmatmul.mubr.f32.gmra.mxu0 %v891
    %v1977 = vpop.f32.mrf.mxu0
    %v1978 = vadd.f32 %v1753, %v1977
    %v1979 = vpop.f32.mrf.mxu0
    %1980 = vmatprep.mubr.f32.mxu0 0.0
    %1981 = vmatmul.mubr.f32.gmra.mxu0 %v894
    %v1982 = vpop.f32.mrf.mxu0
    %v1983 = vadd.f32 %v1758, %v1982
    %v1984 = vpop.f32.mrf.mxu0
    %1985 = vmatprep.mubr.f32.mxu0 0.0
    %1986 = vmatmul.mubr.f32.gmra.mxu0 %v897
    %v1987 = vpop.f32.mrf.mxu0
    %v1988 = vadd.f32 %v1763, %v1987
    %v1989 = vpop.f32.mrf.mxu0
    %1990 = vmatprep.mubr.f32.mxu0 0.0
    %1991 = vmatmul.mubr.f32.gmra.mxu0 %v900
    %v1992 = vpop.f32.mrf.mxu0
    %v1993 = vadd.f32 %v1768, %v1992
    %v1994 = vpop.f32.mrf.mxu0
    %1995 = vmatprep.mubr.f32.mxu0 0.0
    %1996 = vmatmul.mubr.f32.gmra.mxu0 %v903
    %v1997 = vpop.f32.mrf.mxu0
    %v1998 = vadd.f32 %v1773, %v1997
    %v1999 = vpop.f32.mrf.mxu0
    %2000 = vmatprep.mubr.f32.mxu0 0.0
    %2001 = vmatmul.mubr.f32.gmra.mxu0 %v906
    %v2002 = vpop.f32.mrf.mxu0
    %v2003 = vadd.f32 %v1778, %v2002
    %v2004 = vpop.f32.mrf.mxu0
    %2005 = vmatprep.mubr.f32.mxu0 0.0
    %2006 = vmatmul.mubr.f32.gmra.mxu0 %v909
    %v2007 = vpop.f32.mrf.mxu0
    %v2008 = vadd.f32 %v1783, %v2007
    %v2009 = vpop.f32.mrf.mxu0
    %2010 = vmatprep.mubr.f32.mxu0 0.0
    %2011 = vmatmul.mubr.f32.gmra.mxu0 %v912
    %v2012 = vpop.f32.mrf.mxu0
    %v2013 = vadd.f32 %v1788, %v2012
    %v2014 = vpop.f32.mrf.mxu0
    %2015 = vmatprep.mubr.f32.mxu0 0.0
    %2016 = vmatmul.mubr.f32.gmra.mxu0 %v915
    %v2017 = vpop.f32.mrf.mxu0
    %v2018 = vadd.f32 %v1793, %v2017
    %v2019 = vpop.f32.mrf.mxu0
    %2020 = vmatprep.mubr.f32.mxu0 0.0
    %2021 = vmatmul.mubr.f32.gmra.mxu0 %v918
    %v2022 = vpop.f32.mrf.mxu0
    %v2023 = vadd.f32 %v1798, %v2022
    %v2024 = vpop.f32.mrf.mxu0
    %2025 = vmatprep.mubr.f32.mxu0 0.0
    %2026 = vmatmul.mubr.f32.gmra.mxu0 %v921
    %v2027 = vpop.f32.mrf.mxu0
    %v2028 = vadd.f32 %v1803, %v2027
    %v2029 = vpop.f32.mrf.mxu0
    %2030 = vmatprep.mubr.f32.mxu0 0.0
    %2031 = vmatmul.mubr.f32.gmra.mxu0 %v924
    %v2032 = vpop.f32.mrf.mxu0
    %v2033 = vadd.f32 %v1808, %v2032
    %v2034 = vpop.f32.mrf.mxu0
    %2035 = vmatprep.mubr.f32.mxu0 0.0
    %2036 = vmatmul.mubr.f32.gmra.mxu0 %v927
    %v2037 = vpop.f32.mrf.mxu0
    %v2038 = vadd.f32 %v1813, %v2037
    %v2039 = vpop.f32.mrf.mxu0
    %2040 = vmatprep.mubr.f32.mxu0 0.0
    %2041 = vmatmul.mubr.f32.gmra.mxu0 %v930
    %v2042 = vpop.f32.mrf.mxu0
    %v2043 = vadd.f32 %v1818, %v2042
    %v2044 = vpop.f32.mrf.mxu0
    %2045 = vmatprep.mubr.f32.mxu0 0.0
    %2046 = vmatmul.mubr.f32.gmra.mxu0 %v933
    %v2047 = vpop.f32.mrf.mxu0
    %v2048 = vadd.f32 %v1823, %v2047
    %v2049 = vpop.f32.mrf.mxu0
    %2050 = vmatprep.mubr.f32.mxu0 0.0
    %2051 = vmatmul.mubr.f32.gmra.mxu0 %v936
    %v2052 = vpop.f32.mrf.mxu0
    %v2053 = vadd.f32 %v1828, %v2052
    %v2054 = vpop.f32.mrf.mxu0
    %2055 = vmatprep.mubr.f32.mxu0 0.0
    %2056 = vmatmul.mubr.f32.gmra.mxu0 %v939
    %v2057 = vpop.f32.mrf.mxu0
    %v2058 = vadd.f32 %v1833, %v2057
    %v2059 = vpop.f32.mrf.mxu0
    %2060 = vmatprep.mubr.f32.mxu0 0.0
    %2061 = vmatmul.mubr.f32.gmra.mxu0 %v942
    %v2062 = vpop.f32.mrf.mxu0
    %v2063 = vadd.f32 %v1838, %v2062
    %v2064 = vpop.f32.mrf.mxu0
    %2065 = vmatprep.mubr.f32.mxu0 0.0
    %2066 = vmatmul.mubr.f32.gmra.mxu0 %v945
    %v2067 = vpop.f32.mrf.mxu0
    %v2068 = vadd.f32 %v1843, %v2067
    %v2069 = vpop.f32.mrf.mxu0
    %2070 = vdwg.mxu0
    %vm2071 = vcmp.ge.f32.partialorder %v1431, 0.0
    %vm2072 = vcmp.ge.f32.partialorder %v1433, 0.0
    %vm2073 = vcmp.ge.f32.partialorder %v1913, 0.0
    %vm2074 = vcmp.ge.f32.partialorder %v1437, 0.0
    %vm2075 = vcmp.ge.f32.partialorder %v1439, 0.0
    %vm2076 = vcmp.ge.f32.partialorder %v1918, 0.0
    %vm2077 = vcmp.ge.f32.partialorder %v1443, 0.0
    %vm2078 = vcmp.ge.f32.partialorder %v1445, 0.0
    %vm2079 = vcmp.ge.f32.partialorder %v1923, 0.0
    %vm2080 = vcmp.ge.f32.partialorder %v1449, 0.0
    %vm2081 = vcmp.ge.f32.partialorder %v1451, 0.0
    %vm2082 = vcmp.ge.f32.partialorder %v1928, 0.0
    %vm2083 = vcmp.ge.f32.partialorder %v1455, 0.0
    %vm2084 = vcmp.ge.f32.partialorder %v1457, 0.0
    %vm2085 = vcmp.ge.f32.partialorder %v1933, 0.0
    %vm2086 = vcmp.ge.f32.partialorder %v1461, 0.0
    %vm2087 = vcmp.ge.f32.partialorder %v1463, 0.0
    %vm2088 = vcmp.ge.f32.partialorder %v1938, 0.0
    %vm2089 = vcmp.ge.f32.partialorder %v1467, 0.0
    %vm2090 = vcmp.ge.f32.partialorder %v1469, 0.0
    %vm2091 = vcmp.ge.f32.partialorder %v1943, 0.0
    %vm2092 = vcmp.ge.f32.partialorder %v1473, 0.0
    %vm2093 = vcmp.ge.f32.partialorder %v1475, 0.0
    %vm2094 = vcmp.ge.f32.partialorder %v1948, 0.0
    %vm2095 = vcmp.ge.f32.partialorder %v1479, 0.0
    %vm2096 = vcmp.ge.f32.partialorder %v1481, 0.0
    %vm2097 = vcmp.ge.f32.partialorder %v1953, 0.0
    %vm2098 = vcmp.ge.f32.partialorder %v1485, 0.0
    %vm2099 = vcmp.ge.f32.partialorder %v1487, 0.0
    %vm2100 = vcmp.ge.f32.partialorder %v1958, 0.0
    %vm2101 = vcmp.ge.f32.partialorder %v1491, 0.0
    %vm2102 = vcmp.ge.f32.partialorder %v1493, 0.0
    %vm2103 = vcmp.ge.f32.partialorder %v1963, 0.0
    %vm2104 = vcmp.ge.f32.partialorder %v1497, 0.0
    %vm2105 = vcmp.ge.f32.partialorder %v1499, 0.0
    %vm2106 = vcmp.ge.f32.partialorder %v1968, 0.0
    %vm2107 = vcmp.ge.f32.partialorder %v1503, 0.0
    %vm2108 = vcmp.ge.f32.partialorder %v1505, 0.0
    %vm2109 = vcmp.ge.f32.partialorder %v1973, 0.0
    %vm2110 = vcmp.ge.f32.partialorder %v1509, 0.0
    %vm2111 = vcmp.ge.f32.partialorder %v1511, 0.0
    %vm2112 = vcmp.ge.f32.partialorder %v1978, 0.0
    %vm2113 = vcmp.ge.f32.partialorder %v1515, 0.0
    %vm2114 = vcmp.ge.f32.partialorder %v1517, 0.0
    %vm2115 = vcmp.ge.f32.partialorder %v1983, 0.0
    %vm2116 = vcmp.ge.f32.partialorder %v1521, 0.0
    %vm2117 = vcmp.ge.f32.partialorder %v1523, 0.0
    %vm2118 = vcmp.ge.f32.partialorder %v1988, 0.0
    %vm2119 = vcmp.ge.f32.partialorder %v1527, 0.0
    %vm2120 = vcmp.ge.f32.partialorder %v1529, 0.0
    %vm2121 = vcmp.ge.f32.partialorder %v1993, 0.0
    %vm2122 = vcmp.ge.f32.partialorder %v1533, 0.0
    %vm2123 = vcmp.ge.f32.partialorder %v1535, 0.0
    %vm2124 = vcmp.ge.f32.partialorder %v1998, 0.0
    %vm2125 = vcmp.ge.f32.partialorder %v1539, 0.0
    %vm2126 = vcmp.ge.f32.partialorder %v1541, 0.0
    %vm2127 = vcmp.ge.f32.partialorder %v2003, 0.0
    %vm2128 = vcmp.ge.f32.partialorder %v1545, 0.0
    %vm2129 = vcmp.ge.f32.partialorder %v1547, 0.0
    %vm2130 = vcmp.ge.f32.partialorder %v2008, 0.0
    %vm2131 = vcmp.ge.f32.partialorder %v1551, 0.0
    %vm2132 = vcmp.ge.f32.partialorder %v1553, 0.0
    %vm2133 = vcmp.ge.f32.partialorder %v2013, 0.0
    %vm2134 = vcmp.ge.f32.partialorder %v1557, 0.0
    %vm2135 = vcmp.ge.f32.partialorder %v1559, 0.0
    %vm2136 = vcmp.ge.f32.partialorder %v2018, 0.0
    %vm2137 = vcmp.ge.f32.partialorder %v1563, 0.0
    %vm2138 = vcmp.ge.f32.partialorder %v1565, 0.0
    %vm2139 = vcmp.ge.f32.partialorder %v2023, 0.0
    %vm2140 = vcmp.ge.f32.partialorder %v1569, 0.0
    %vm2141 = vcmp.ge.f32.partialorder %v1571, 0.0
    %vm2142 = vcmp.ge.f32.partialorder %v2028, 0.0
    %vm2143 = vcmp.ge.f32.partialorder %v1575, 0.0
    %vm2144 = vcmp.ge.f32.partialorder %v1577, 0.0
    %vm2145 = vcmp.ge.f32.partialorder %v2033, 0.0
    %vm2146 = vcmp.ge.f32.partialorder %v1581, 0.0
    %vm2147 = vcmp.ge.f32.partialorder %v1583, 0.0
    %vm2148 = vcmp.ge.f32.partialorder %v2038, 0.0
    %vm2149 = vcmp.ge.f32.partialorder %v1587, 0.0
    %vm2150 = vcmp.ge.f32.partialorder %v1589, 0.0
    %vm2151 = vcmp.ge.f32.partialorder %v2043, 0.0
    %vm2152 = vcmp.ge.f32.partialorder %v1593, 0.0
    %vm2153 = vcmp.ge.f32.partialorder %v1595, 0.0
    %vm2154 = vcmp.ge.f32.partialorder %v2048, 0.0
    %vm2155 = vcmp.ge.f32.partialorder %v1599, 0.0
    %vm2156 = vcmp.ge.f32.partialorder %v1601, 0.0
    %vm2157 = vcmp.ge.f32.partialorder %v2053, 0.0
    %vm2158 = vcmp.ge.f32.partialorder %v1605, 0.0
    %vm2159 = vcmp.ge.f32.partialorder %v1607, 0.0
    %vm2160 = vcmp.ge.f32.partialorder %v2058, 0.0
    %vm2161 = vcmp.ge.f32.partialorder %v1611, 0.0
    %vm2162 = vcmp.ge.f32.partialorder %v1613, 0.0
    %vm2163 = vcmp.ge.f32.partialorder %v2063, 0.0
    %vm2164 = vcmp.ge.f32.partialorder %v1617, 0.0
    %vm2165 = vcmp.ge.f32.partialorder %v1619, 0.0
    %vm2166 = vcmp.ge.f32.partialorder %v2068, 0.0
    %v2167 = vmul.f32 %v1431, 0.01
    %v2168 = vmul.f32 %v1433, 0.01
    %v2169 = vmul.f32 %v1913, 0.01
    %v2170 = vmul.f32 %v1437, 0.01
    %v2171 = vmul.f32 %v1439, 0.01
    %v2172 = vmul.f32 %v1918, 0.01
    %v2173 = vmul.f32 %v1443, 0.01
    %v2174 = vmul.f32 %v1445, 0.01
    %v2175 = vmul.f32 %v1923, 0.01
    %v2176 = vmul.f32 %v1449, 0.01
    %v2177 = vmul.f32 %v1451, 0.01
    %v2178 = vmul.f32 %v1928, 0.01
    %v2179 = vmul.f32 %v1455, 0.01
    %v2180 = vmul.f32 %v1457, 0.01
    %v2181 = vmul.f32 %v1933, 0.01
    %v2182 = vmul.f32 %v1461, 0.01
    %v2183 = vmul.f32 %v1463, 0.01
    %v2184 = vmul.f32 %v1938, 0.01
    %v2185 = vmul.f32 %v1467, 0.01
    %v2186 = vmul.f32 %v1469, 0.01
    %v2187 = vmul.f32 %v1943, 0.01
    %v2188 = vmul.f32 %v1473, 0.01
    %v2189 = vmul.f32 %v1475, 0.01
    %v2190 = vmul.f32 %v1948, 0.01
    %v2191 = vmul.f32 %v1479, 0.01
    %v2192 = vmul.f32 %v1481, 0.01
    %v2193 = vmul.f32 %v1953, 0.01
    %v2194 = vmul.f32 %v1485, 0.01
    %v2195 = vmul.f32 %v1487, 0.01
    %v2196 = vmul.f32 %v1958, 0.01
    %v2197 = vmul.f32 %v1491, 0.01
    %v2198 = vmul.f32 %v1493, 0.01
    %v2199 = vmul.f32 %v1963, 0.01
    %v2200 = vmul.f32 %v1497, 0.01
    %v2201 = vmul.f32 %v1499, 0.01
    %v2202 = vmul.f32 %v1968, 0.01
    %v2203 = vmul.f32 %v1503, 0.01
    %v2204 = vmul.f32 %v1505, 0.01
    %v2205 = vmul.f32 %v1973, 0.01
    %v2206 = vmul.f32 %v1509, 0.01
    %v2207 = vmul.f32 %v1511, 0.01
    %v2208 = vmul.f32 %v1978, 0.01
    %v2209 = vmul.f32 %v1515, 0.01
    %v2210 = vmul.f32 %v1517, 0.01
    %v2211 = vmul.f32 %v1983, 0.01
    %v2212 = vmul.f32 %v1521, 0.01
    %v2213 = vmul.f32 %v1523, 0.01
    %v2214 = vmul.f32 %v1988, 0.01
    %v2215 = vmul.f32 %v1527, 0.01
    %v2216 = vmul.f32 %v1529, 0.01
    %v2217 = vmul.f32 %v1993, 0.01
    %v2218 = vmul.f32 %v1533, 0.01
    %v2219 = vmul.f32 %v1535, 0.01
    %v2220 = vmul.f32 %v1998, 0.01
    %v2221 = vmul.f32 %v1539, 0.01
    %v2222 = vmul.f32 %v1541, 0.01
    %v2223 = vmul.f32 %v2003, 0.01
    %v2224 = vmul.f32 %v1545, 0.01
    %v2225 = vmul.f32 %v1547, 0.01
    %v2226 = vmul.f32 %v2008, 0.01
    %v2227 = vmul.f32 %v1551, 0.01
    %v2228 = vmul.f32 %v1553, 0.01
    %v2229 = vmul.f32 %v2013, 0.01
    %v2230 = vmul.f32 %v1557, 0.01
    %v2231 = vmul.f32 %v1559, 0.01
    %v2232 = vmul.f32 %v2018, 0.01
    %v2233 = vmul.f32 %v1563, 0.01
    %v2234 = vmul.f32 %v1565, 0.01
    %v2235 = vmul.f32 %v2023, 0.01
    %v2236 = vmul.f32 %v1569, 0.01
    %v2237 = vmul.f32 %v1571, 0.01
    %v2238 = vmul.f32 %v2028, 0.01
    %v2239 = vmul.f32 %v1575, 0.01
    %v2240 = vmul.f32 %v1577, 0.01
    %v2241 = vmul.f32 %v2033, 0.01
    %v2242 = vmul.f32 %v1581, 0.01
    %v2243 = vmul.f32 %v1583, 0.01
    %v2244 = vmul.f32 %v2038, 0.01
    %v2245 = vmul.f32 %v1587, 0.01
    %v2246 = vmul.f32 %v1589, 0.01
    %v2247 = vmul.f32 %v2043, 0.01
    %v2248 = vmul.f32 %v1593, 0.01
    %v2249 = vmul.f32 %v1595, 0.01
    %v2250 = vmul.f32 %v2048, 0.01
    %v2251 = vmul.f32 %v1599, 0.01
    %v2252 = vmul.f32 %v1601, 0.01
    %v2253 = vmul.f32 %v2053, 0.01
    %v2254 = vmul.f32 %v1605, 0.01
    %v2255 = vmul.f32 %v1607, 0.01
    %v2256 = vmul.f32 %v2058, 0.01
    %v2257 = vmul.f32 %v1611, 0.01
    %v2258 = vmul.f32 %v1613, 0.01
    %v2259 = vmul.f32 %v2063, 0.01
    %v2260 = vmul.f32 %v1617, 0.01
    %v2261 = vmul.f32 %v1619, 0.01
    %v2262 = vmul.f32 %v2068, 0.01
    %v2263 = vsel %vm2071, %v1431, %v2167
    %v2264 = vsel %vm2072, %v1433, %v2168
    %v2265 = vsel %vm2073, %v1913, %v2169
    %v2266 = vsel %vm2074, %v1437, %v2170
    %v2267 = vsel %vm2075, %v1439, %v2171
    %v2268 = vsel %vm2076, %v1918, %v2172
    %v2269 = vsel %vm2077, %v1443, %v2173
    %v2270 = vsel %vm2078, %v1445, %v2174
    %v2271 = vsel %vm2079, %v1923, %v2175
    %v2272 = vsel %vm2080, %v1449, %v2176
    %v2273 = vsel %vm2081, %v1451, %v2177
    %v2274 = vsel %vm2082, %v1928, %v2178
    %v2275 = vsel %vm2083, %v1455, %v2179
    %v2276 = vsel %vm2084, %v1457, %v2180
    %v2277 = vsel %vm2085, %v1933, %v2181
    %v2278 = vsel %vm2086, %v1461, %v2182
    %v2279 = vsel %vm2087, %v1463, %v2183
    %v2280 = vsel %vm2088, %v1938, %v2184
    %v2281 = vsel %vm2089, %v1467, %v2185
    %v2282 = vsel %vm2090, %v1469, %v2186
    %v2283 = vsel %vm2091, %v1943, %v2187
    %v2284 = vsel %vm2092, %v1473, %v2188
    %v2285 = vsel %vm2093, %v1475, %v2189
    %v2286 = vsel %vm2094, %v1948, %v2190
    %v2287 = vsel %vm2095, %v1479, %v2191
    %v2288 = vsel %vm2096, %v1481, %v2192
    %v2289 = vsel %vm2097, %v1953, %v2193
    %v2290 = vsel %vm2098, %v1485, %v2194
    %v2291 = vsel %vm2099, %v1487, %v2195
    %v2292 = vsel %vm2100, %v1958, %v2196
    %v2293 = vsel %vm2101, %v1491, %v2197
    %v2294 = vsel %vm2102, %v1493, %v2198
    %v2295 = vsel %vm2103, %v1963, %v2199
    %v2296 = vsel %vm2104, %v1497, %v2200
    %v2297 = vsel %vm2105, %v1499, %v2201
    %v2298 = vsel %vm2106, %v1968, %v2202
    %v2299 = vsel %vm2107, %v1503, %v2203
    %v2300 = vsel %vm2108, %v1505, %v2204
    %v2301 = vsel %vm2109, %v1973, %v2205
    %v2302 = vsel %vm2110, %v1509, %v2206
    %v2303 = vsel %vm2111, %v1511, %v2207
    %v2304 = vsel %vm2112, %v1978, %v2208
    %v2305 = vsel %vm2113, %v1515, %v2209
    %v2306 = vsel %vm2114, %v1517, %v2210
    %v2307 = vsel %vm2115, %v1983, %v2211
    %v2308 = vsel %vm2116, %v1521, %v2212
    %v2309 = vsel %vm2117, %v1523, %v2213
    %v2310 = vsel %vm2118, %v1988, %v2214
    %v2311 = vsel %vm2119, %v1527, %v2215
    %v2312 = vsel %vm2120, %v1529, %v2216
    %v2313 = vsel %vm2121, %v1993, %v2217
    %v2314 = vsel %vm2122, %v1533, %v2218
    %v2315 = vsel %vm2123, %v1535, %v2219
    %v2316 = vsel %vm2124, %v1998, %v2220
    %v2317 = vsel %vm2125, %v1539, %v2221
    %v2318 = vsel %vm2126, %v1541, %v2222
    %v2319 = vsel %vm2127, %v2003, %v2223
    %v2320 = vsel %vm2128, %v1545, %v2224
    %v2321 = vsel %vm2129, %v1547, %v2225
    %v2322 = vsel %vm2130, %v2008, %v2226
    %v2323 = vsel %vm2131, %v1551, %v2227
    %v2324 = vsel %vm2132, %v1553, %v2228
    %v2325 = vsel %vm2133, %v2013, %v2229
    %v2326 = vsel %vm2134, %v1557, %v2230
    %v2327 = vsel %vm2135, %v1559, %v2231
    %v2328 = vsel %vm2136, %v2018, %v2232
    %v2329 = vsel %vm2137, %v1563, %v2233
    %v2330 = vsel %vm2138, %v1565, %v2234
    %v2331 = vsel %vm2139, %v2023, %v2235
    %v2332 = vsel %vm2140, %v1569, %v2236
    %v2333 = vsel %vm2141, %v1571, %v2237
    %v2334 = vsel %vm2142, %v2028, %v2238
    %v2335 = vsel %vm2143, %v1575, %v2239
    %v2336 = vsel %vm2144, %v1577, %v2240
    %v2337 = vsel %vm2145, %v2033, %v2241
    %v2338 = vsel %vm2146, %v1581, %v2242
    %v2339 = vsel %vm2147, %v1583, %v2243
    %v2340 = vsel %vm2148, %v2038, %v2244
    %v2341 = vsel %vm2149, %v1587, %v2245
    %v2342 = vsel %vm2150, %v1589, %v2246
    %v2343 = vsel %vm2151, %v2043, %v2247
    %v2344 = vsel %vm2152, %v1593, %v2248
    %v2345 = vsel %vm2153, %v1595, %v2249
    %v2346 = vsel %vm2154, %v2048, %v2250
    %v2347 = vsel %vm2155, %v1599, %v2251
    %v2348 = vsel %vm2156, %v1601, %v2252
    %v2349 = vsel %vm2157, %v2053, %v2253
    %v2350 = vsel %vm2158, %v1605, %v2254
    %v2351 = vsel %vm2159, %v1607, %v2255
    %v2352 = vsel %vm2160, %v2058, %v2256
    %v2353 = vsel %vm2161, %v1611, %v2257
    %v2354 = vsel %vm2162, %v1613, %v2258
    %v2355 = vsel %vm2163, %v2063, %v2259
    %v2356 = vsel %vm2164, %v1617, %v2260
    %v2357 = vsel %vm2165, %v1619, %v2261
    %v2358 = vsel %vm2166, %v2068, %v2262
    %v2359 = vld [vmem:[#allocation6] sm:$0xff]
    %v2360 = vld [vmem:[#allocation6 + $0x8] sm:$0xff]
    %v2361 = vld [vmem:[#allocation6 + $0x10] sm:$0xff]
    %v2362 = vld [vmem:[#allocation6 + $0x18] sm:$0xff]
    %v2363 = vld [vmem:[#allocation6 + $0x20] sm:$0xff]
    %v2364 = vld [vmem:[#allocation6 + $0x28] sm:$0xff]
    %v2365 = vld [vmem:[#allocation6 + $0x30] sm:$0xff]
    %v2366 = vld [vmem:[#allocation6 + $0x38] sm:$0xff]
    %v2367 = vld [vmem:[#allocation6 + $0x40] sm:$0xff]
    %v2368 = vld [vmem:[#allocation6 + $0x48] sm:$0xff]
    %v2369 = vld [vmem:[#allocation6 + $0x50] sm:$0xff]
    %v2370 = vld [vmem:[#allocation6 + $0x58] sm:$0xff]
    %v2371 = vld [vmem:[#allocation6 + $0x60] sm:$0xff]
    %v2372 = vld [vmem:[#allocation6 + $0x68] sm:$0xff]
    %v2373 = vld [vmem:[#allocation6 + $0x70] sm:$0xff]
    %v2374 = vld [vmem:[#allocation6 + $0x78] sm:$0xff]
    %v2375 = vld [vmem:[#allocation6 + $0x80] sm:$0xff]
    %v2376 = vld [vmem:[#allocation6 + $0x88] sm:$0xff]
    %v2377 = vld [vmem:[#allocation6 + $0x90] sm:$0xff]
    %v2378 = vld [vmem:[#allocation6 + $0x98] sm:$0xff]
    %v2379 = vld [vmem:[#allocation6 + $0xa0] sm:$0xff]
    %v2380 = vld [vmem:[#allocation6 + $0xa8] sm:$0xff]
    %v2381 = vld [vmem:[#allocation6 + $0xb0] sm:$0xff]
    %v2382 = vld [vmem:[#allocation6 + $0xb8] sm:$0xff]
    %v2383 = vld [vmem:[#allocation6 + $0xc0] sm:$0xff]
    %v2384 = vld [vmem:[#allocation6 + $0xc8] sm:$0xff]
    %v2385 = vld [vmem:[#allocation6 + $0xd0] sm:$0xff]
    %v2386 = vld [vmem:[#allocation6 + $0xd8] sm:$0xff]
    %v2387 = vld [vmem:[#allocation6 + $0xe0] sm:$0xff]
    %v2388 = vld [vmem:[#allocation6 + $0xe8] sm:$0xff]
    %v2389 = vld [vmem:[#allocation6 + $0xf0] sm:$0xff]
    %v2390 = vld [vmem:[#allocation6 + $0xf8] sm:$0xff]
    %v2391 = vld [vmem:[#allocation6 + $0x100] sm:$0xff]
    %v2392 = vld [vmem:[#allocation6 + $0x108] sm:$0xff]
    %v2393 = vld [vmem:[#allocation6 + $0x110] sm:$0xff]
    %v2394 = vld [vmem:[#allocation6 + $0x118] sm:$0xff]
    %v2395 = vld [vmem:[#allocation6 + $0x120] sm:$0xff]
    %v2396 = vld [vmem:[#allocation6 + $0x128] sm:$0xff]
    %v2397 = vld [vmem:[#allocation6 + $0x130] sm:$0xff]
    %v2398 = vld [vmem:[#allocation6 + $0x138] sm:$0xff]
    %v2399 = vld [vmem:[#allocation6 + $0x140] sm:$0xff]
    %v2400 = vld [vmem:[#allocation6 + $0x148] sm:$0xff]
    %v2401 = vld [vmem:[#allocation6 + $0x150] sm:$0xff]
    %v2402 = vld [vmem:[#allocation6 + $0x158] sm:$0xff]
    %v2403 = vld [vmem:[#allocation6 + $0x160] sm:$0xff]
    %v2404 = vld [vmem:[#allocation6 + $0x168] sm:$0xff]
    %v2405 = vld [vmem:[#allocation6 + $0x170] sm:$0xff]
    %v2406 = vld [vmem:[#allocation6 + $0x178] sm:$0xff]
    %v2407 = vld [vmem:[%s6] sm:$0x1]
    %v2409 = vlaneseq
    %v2410 = vshrl.u32 %v2409, 7
    %v2411 = vsub.s32 0, %v2410
    %v2412 = vrot.slane %v2407, %v2411
    %2414 = vmatprep.subr.mxu0 0.0
    %2415 = vmatpush1.msra.mxu0 %v2374
    %2416 = vmatprep.subr.mxu0 0.0
    %2417 = vmatpush1.msra.mxu0 %v2373
    %2418 = vmatprep.subr.mxu0 0.0
    %2419 = vmatpush1.msra.mxu0 %v2372
    %2420 = vmatprep.subr.mxu0 0.0
    %2421 = vmatpush1.msra.mxu0 %v2371
    %2422 = vmatprep.subr.mxu0 0.0
    %2423 = vmatpush1.msra.mxu0 %v2370
    %2424 = vmatprep.subr.mxu0 0.0
    %2425 = vmatpush1.msra.mxu0 %v2369
    %2426 = vmatprep.subr.mxu0 0.0
    %2427 = vmatpush1.msra.mxu0 %v2368
    %2428 = vmatprep.subr.mxu0 0.0
    %2429 = vmatpush1.msra.mxu0 %v2367
    %2430 = vmatprep.subr.mxu0 0.0
    %2431 = vmatpush1.msra.mxu0 %v2366
    %2432 = vmatprep.subr.mxu0 0.0
    %2433 = vmatpush1.msra.mxu0 %v2365
    %2434 = vmatprep.subr.mxu0 0.0
    %2435 = vmatpush1.msra.mxu0 %v2364
    %2436 = vmatprep.subr.mxu0 0.0
    %2437 = vmatpush1.msra.mxu0 %v2363
    %2438 = vmatprep.subr.mxu0 0.0
    %2439 = vmatpush1.msra.mxu0 %v2362
    %2440 = vmatprep.subr.mxu0 0.0
    %2441 = vmatpush1.msra.mxu0 %v2361
    %2442 = vmatprep.subr.mxu0 0.0
    %2443 = vmatpush1.msra.mxu0 %v2360
    %2444 = vmatprep.subr.mxu0 0.0
    %2445 = vmatpush1.msra.mxu0 %v2359
    %2446 = vmatprep.subr.mxu0 0.0
    %2447 = vmatpush2.msra.mxu0 %v2390
    %2448 = vmatprep.subr.mxu0 0.0
    %2449 = vmatpush2.msra.mxu0 %v2389
    %2450 = vmatprep.subr.mxu0 0.0
    %2451 = vmatpush2.msra.mxu0 %v2388
    %2452 = vmatprep.subr.mxu0 0.0
    %2453 = vmatpush2.msra.mxu0 %v2387
    %2454 = vmatprep.subr.mxu0 0.0
    %2455 = vmatpush2.msra.mxu0 %v2386
    %2456 = vmatprep.subr.mxu0 0.0
    %2457 = vmatpush2.msra.mxu0 %v2385
    %2458 = vmatprep.subr.mxu0 0.0
    %2459 = vmatpush2.msra.mxu0 %v2384
    %2460 = vmatprep.subr.mxu0 0.0
    %2461 = vmatpush2.msra.mxu0 %v2383
    %2462 = vmatprep.subr.mxu0 0.0
    %2463 = vmatpush2.msra.mxu0 %v2382
    %2464 = vmatprep.subr.mxu0 0.0
    %2465 = vmatpush2.msra.mxu0 %v2381
    %2466 = vmatprep.subr.mxu0 0.0
    %2467 = vmatpush2.msra.mxu0 %v2380
    %2468 = vmatprep.subr.mxu0 0.0
    %2469 = vmatpush2.msra.mxu0 %v2379
    %2470 = vmatprep.subr.mxu0 0.0
    %2471 = vmatpush2.msra.mxu0 %v2378
    %2472 = vmatprep.subr.mxu0 0.0
    %2473 = vmatpush2.msra.mxu0 %v2377
    %2474 = vmatprep.subr.mxu0 0.0
    %2475 = vmatpush2.msra.mxu0 %v2376
    %2476 = vmatprep.subr.mxu0 0.0
    %2477 = vmatpush2.msra.mxu0 %v2375
    %2478 = vmatprep.mubr.f32.mxu0 %v2264
    %2479 = vmatmul.mubr.f32.gmra.mxu0 %v2263
    %v2480 = vpop.f32.mrf.mxu0
    %v2481 = vadd.f32 %v2412, %v2480
    %v2482 = vpop.f32.mrf.mxu0
    %2483 = vmatprep.mubr.f32.mxu0 %v2267
    %2484 = vmatmul.mubr.f32.gmra.mxu0 %v2266
    %v2485 = vpop.f32.mrf.mxu0
    %v2486 = vadd.f32 %v2412, %v2485
    %v2487 = vpop.f32.mrf.mxu0
    %2488 = vmatprep.mubr.f32.mxu0 %v2270
    %2489 = vmatmul.mubr.f32.gmra.mxu0 %v2269
    %v2490 = vpop.f32.mrf.mxu0
    %v2491 = vadd.f32 %v2412, %v2490
    %v2492 = vpop.f32.mrf.mxu0
    %2493 = vmatprep.mubr.f32.mxu0 %v2273
    %2494 = vmatmul.mubr.f32.gmra.mxu0 %v2272
    %v2495 = vpop.f32.mrf.mxu0
    %v2496 = vadd.f32 %v2412, %v2495
    %v2497 = vpop.f32.mrf.mxu0
    %2498 = vmatprep.mubr.f32.mxu0 %v2276
    %2499 = vmatmul.mubr.f32.gmra.mxu0 %v2275
    %v2500 = vpop.f32.mrf.mxu0
    %v2501 = vadd.f32 %v2412, %v2500
    %v2502 = vpop.f32.mrf.mxu0
    %2503 = vmatprep.mubr.f32.mxu0 %v2279
    %2504 = vmatmul.mubr.f32.gmra.mxu0 %v2278
    %v2505 = vpop.f32.mrf.mxu0
    %v2506 = vadd.f32 %v2412, %v2505
    %v2507 = vpop.f32.mrf.mxu0
    %2508 = vmatprep.mubr.f32.mxu0 %v2282
    %2509 = vmatmul.mubr.f32.gmra.mxu0 %v2281
    %v2510 = vpop.f32.mrf.mxu0
    %v2511 = vadd.f32 %v2412, %v2510
    %v2512 = vpop.f32.mrf.mxu0
    %2513 = vmatprep.mubr.f32.mxu0 %v2285
    %2514 = vmatmul.mubr.f32.gmra.mxu0 %v2284
    %v2515 = vpop.f32.mrf.mxu0
    %v2516 = vadd.f32 %v2412, %v2515
    %v2517 = vpop.f32.mrf.mxu0
    %2518 = vmatprep.mubr.f32.mxu0 %v2288
    %2519 = vmatmul.mubr.f32.gmra.mxu0 %v2287
    %v2520 = vpop.f32.mrf.mxu0
    %v2521 = vadd.f32 %v2412, %v2520
    %v2522 = vpop.f32.mrf.mxu0
    %2523 = vmatprep.mubr.f32.mxu0 %v2291
    %2524 = vmatmul.mubr.f32.gmra.mxu0 %v2290
    %v2525 = vpop.f32.mrf.mxu0
    %v2526 = vadd.f32 %v2412, %v2525
    %v2527 = vpop.f32.mrf.mxu0
    %2528 = vmatprep.mubr.f32.mxu0 %v2294
    %2529 = vmatmul.mubr.f32.gmra.mxu0 %v2293
    %v2530 = vpop.f32.mrf.mxu0
    %v2531 = vadd.f32 %v2412, %v2530
    %v2532 = vpop.f32.mrf.mxu0
    %2533 = vmatprep.mubr.f32.mxu0 %v2297
    %2534 = vmatmul.mubr.f32.gmra.mxu0 %v2296
    %v2535 = vpop.f32.mrf.mxu0
    %v2536 = vadd.f32 %v2412, %v2535
    %v2537 = vpop.f32.mrf.mxu0
    %2538 = vmatprep.mubr.f32.mxu0 %v2300
    %2539 = vmatmul.mubr.f32.gmra.mxu0 %v2299
    %v2540 = vpop.f32.mrf.mxu0
    %v2541 = vadd.f32 %v2412, %v2540
    %v2542 = vpop.f32.mrf.mxu0
    %2543 = vmatprep.mubr.f32.mxu0 %v2303
    %2544 = vmatmul.mubr.f32.gmra.mxu0 %v2302
    %v2545 = vpop.f32.mrf.mxu0
    %v2546 = vadd.f32 %v2412, %v2545
    %v2547 = vpop.f32.mrf.mxu0
    %2548 = vmatprep.mubr.f32.mxu0 %v2306
    %2549 = vmatmul.mubr.f32.gmra.mxu0 %v2305
    %v2550 = vpop.f32.mrf.mxu0
    %v2551 = vadd.f32 %v2412, %v2550
    %v2552 = vpop.f32.mrf.mxu0
    %2553 = vmatprep.mubr.f32.mxu0 %v2309
    %2554 = vmatmul.mubr.f32.gmra.mxu0 %v2308
    %v2555 = vpop.f32.mrf.mxu0
    %v2556 = vadd.f32 %v2412, %v2555
    %v2557 = vpop.f32.mrf.mxu0
    %2558 = vmatprep.mubr.f32.mxu0 %v2312
    %2559 = vmatmul.mubr.f32.gmra.mxu0 %v2311
    %v2560 = vpop.f32.mrf.mxu0
    %v2561 = vadd.f32 %v2412, %v2560
    %v2562 = vpop.f32.mrf.mxu0
    %2563 = vmatprep.mubr.f32.mxu0 %v2315
    %2564 = vmatmul.mubr.f32.gmra.mxu0 %v2314
    %v2565 = vpop.f32.mrf.mxu0
    %v2566 = vadd.f32 %v2412, %v2565
    %v2567 = vpop.f32.mrf.mxu0
    %2568 = vmatprep.mubr.f32.mxu0 %v2318
    %2569 = vmatmul.mubr.f32.gmra.mxu0 %v2317
    %v2570 = vpop.f32.mrf.mxu0
    %v2571 = vadd.f32 %v2412, %v2570
    %v2572 = vpop.f32.mrf.mxu0
    %2573 = vmatprep.mubr.f32.mxu0 %v2321
    %2574 = vmatmul.mubr.f32.gmra.mxu0 %v2320
    %v2575 = vpop.f32.mrf.mxu0
    %v2576 = vadd.f32 %v2412, %v2575
    %v2577 = vpop.f32.mrf.mxu0
    %2578 = vmatprep.mubr.f32.mxu0 %v2324
    %2579 = vmatmul.mubr.f32.gmra.mxu0 %v2323
    %v2580 = vpop.f32.mrf.mxu0
    %v2581 = vadd.f32 %v2412, %v2580
    %v2582 = vpop.f32.mrf.mxu0
    %2583 = vmatprep.mubr.f32.mxu0 %v2327
    %2584 = vmatmul.mubr.f32.gmra.mxu0 %v2326
    %v2585 = vpop.f32.mrf.mxu0
    %v2586 = vadd.f32 %v2412, %v2585
    %v2587 = vpop.f32.mrf.mxu0
    %2588 = vmatprep.mubr.f32.mxu0 %v2330
    %2589 = vmatmul.mubr.f32.gmra.mxu0 %v2329
    %v2590 = vpop.f32.mrf.mxu0
    %v2591 = vadd.f32 %v2412, %v2590
    %v2592 = vpop.f32.mrf.mxu0
    %2593 = vmatprep.mubr.f32.mxu0 %v2333
    %2594 = vmatmul.mubr.f32.gmra.mxu0 %v2332
    %v2595 = vpop.f32.mrf.mxu0
    %v2596 = vadd.f32 %v2412, %v2595
    %v2597 = vpop.f32.mrf.mxu0
    %2598 = vmatprep.mubr.f32.mxu0 %v2336
    %2599 = vmatmul.mubr.f32.gmra.mxu0 %v2335
    %v2600 = vpop.f32.mrf.mxu0
    %v2601 = vadd.f32 %v2412, %v2600
    %v2602 = vpop.f32.mrf.mxu0
    %2603 = vmatprep.mubr.f32.mxu0 %v2339
    %2604 = vmatmul.mubr.f32.gmra.mxu0 %v2338
    %v2605 = vpop.f32.mrf.mxu0
    %v2606 = vadd.f32 %v2412, %v2605
    %v2607 = vpop.f32.mrf.mxu0
    %2608 = vmatprep.mubr.f32.mxu0 %v2342
    %2609 = vmatmul.mubr.f32.gmra.mxu0 %v2341
    %v2610 = vpop.f32.mrf.mxu0
    %v2611 = vadd.f32 %v2412, %v2610
    %v2612 = vpop.f32.mrf.mxu0
    %2613 = vmatprep.mubr.f32.mxu0 %v2345
    %2614 = vmatmul.mubr.f32.gmra.mxu0 %v2344
    %v2615 = vpop.f32.mrf.mxu0
    %v2616 = vadd.f32 %v2412, %v2615
    %v2617 = vpop.f32.mrf.mxu0
    %2618 = vmatprep.mubr.f32.mxu0 %v2348
    %2619 = vmatmul.mubr.f32.gmra.mxu0 %v2347
    %v2620 = vpop.f32.mrf.mxu0
    %v2621 = vadd.f32 %v2412, %v2620
    %v2622 = vpop.f32.mrf.mxu0
    %2623 = vmatprep.mubr.f32.mxu0 %v2351
    %2624 = vmatmul.mubr.f32.gmra.mxu0 %v2350
    %v2625 = vpop.f32.mrf.mxu0
    %v2626 = vadd.f32 %v2412, %v2625
    %v2627 = vpop.f32.mrf.mxu0
    %2628 = vmatprep.mubr.f32.mxu0 %v2354
    %2629 = vmatmul.mubr.f32.gmra.mxu0 %v2353
    %v2630 = vpop.f32.mrf.mxu0
    %v2631 = vadd.f32 %v2412, %v2630
    %v2632 = vpop.f32.mrf.mxu0
    %2633 = vmatprep.mubr.f32.mxu0 %v2357
    %2634 = vmatmul.mubr.f32.gmra.mxu0 %v2356
    %v2635 = vpop.f32.mrf.mxu0
    %v2636 = vadd.f32 %v2412, %v2635
    %v2637 = vpop.f32.mrf.mxu0
    %2638 = vdwg.mxu0
    %2639 = vmatprep.subr.mxu0 0.0
    %2640 = vmatpush1.msra.mxu0 %v2406
    %2641 = vmatprep.subr.mxu0 0.0
    %2642 = vmatpush1.msra.mxu0 %v2405
    %2643 = vmatprep.subr.mxu0 0.0
    %2644 = vmatpush1.msra.mxu0 %v2404
    %2645 = vmatprep.subr.mxu0 0.0
    %2646 = vmatpush1.msra.mxu0 %v2403
    %2647 = vmatprep.subr.mxu0 0.0
    %2648 = vmatpush1.msra.mxu0 %v2402
    %2649 = vmatprep.subr.mxu0 0.0
    %2650 = vmatpush1.msra.mxu0 %v2401
    %2651 = vmatprep.subr.mxu0 0.0
    %2652 = vmatpush1.msra.mxu0 %v2400
    %2653 = vmatprep.subr.mxu0 0.0
    %2654 = vmatpush1.msra.mxu0 %v2399
    %2655 = vmatprep.subr.mxu0 0.0
    %2656 = vmatpush1.msra.mxu0 %v2398
    %2657 = vmatprep.subr.mxu0 0.0
    %2658 = vmatpush1.msra.mxu0 %v2397
    %2659 = vmatprep.subr.mxu0 0.0
    %2660 = vmatpush1.msra.mxu0 %v2396
    %2661 = vmatprep.subr.mxu0 0.0
    %2662 = vmatpush1.msra.mxu0 %v2395
    %2663 = vmatprep.subr.mxu0 0.0
    %2664 = vmatpush1.msra.mxu0 %v2394
    %2665 = vmatprep.subr.mxu0 0.0
    %2666 = vmatpush1.msra.mxu0 %v2393
    %2667 = vmatprep.subr.mxu0 0.0
    %2668 = vmatpush1.msra.mxu0 %v2392
    %2669 = vmatprep.subr.mxu0 0.0
    %2670 = vmatpush1.msra.mxu0 %v2391
    %2671 = vmatprep.subr.mxu0 0.0
    %2672 = vmatpush2.msra.mxu0 0.0
    %2673 = vmatprep.subr.mxu0 0.0
    %2674 = vmatpush2.msra.mxu0 0.0
    %2675 = vmatprep.subr.mxu0 0.0
    %2676 = vmatpush2.msra.mxu0 0.0
    %2677 = vmatprep.subr.mxu0 0.0
    %2678 = vmatpush2.msra.mxu0 0.0
    %2679 = vmatprep.subr.mxu0 0.0
    %2680 = vmatpush2.msra.mxu0 0.0
    %2681 = vmatprep.subr.mxu0 0.0
    %2682 = vmatpush2.msra.mxu0 0.0
    %2683 = vmatprep.subr.mxu0 0.0
    %2684 = vmatpush2.msra.mxu0 0.0
    %2685 = vmatprep.subr.mxu0 0.0
    %2686 = vmatpush2.msra.mxu0 0.0
    %2687 = vmatprep.subr.mxu0 0.0
    %2688 = vmatpush2.msra.mxu0 0.0
    %2689 = vmatprep.subr.mxu0 0.0
    %2690 = vmatpush2.msra.mxu0 0.0
    %2691 = vmatprep.subr.mxu0 0.0
    %2692 = vmatpush2.msra.mxu0 0.0
    %2693 = vmatprep.subr.mxu0 0.0
    %2694 = vmatpush2.msra.mxu0 0.0
    %2695 = vmatprep.subr.mxu0 0.0
    %2696 = vmatpush2.msra.mxu0 0.0
    %2697 = vmatprep.subr.mxu0 0.0
    %2698 = vmatpush2.msra.mxu0 0.0
    %2699 = vmatprep.subr.mxu0 0.0
    %2700 = vmatpush2.msra.mxu0 0.0
    %2701 = vmatprep.subr.mxu0 0.0
    %2702 = vmatpush2.msra.mxu0 0.0
    %2703 = vmatprep.mubr.f32.mxu0 0.0
    %2704 = vmatmul.mubr.f32.gmra.mxu0 %v2265
    %v2705 = vpop.f32.mrf.mxu0
    %v2706 = vadd.f32 %v2481, %v2705
    %v2707 = vpop.f32.mrf.mxu0
    %2708 = vmatprep.mubr.f32.mxu0 0.0
    %2709 = vmatmul.mubr.f32.gmra.mxu0 %v2268
    %v2710 = vpop.f32.mrf.mxu0
    %v2711 = vadd.f32 %v2486, %v2710
    %v2712 = vpop.f32.mrf.mxu0
    %2713 = vmatprep.mubr.f32.mxu0 0.0
    %2714 = vmatmul.mubr.f32.gmra.mxu0 %v2271
    %v2715 = vpop.f32.mrf.mxu0
    %v2716 = vadd.f32 %v2491, %v2715
    %v2717 = vpop.f32.mrf.mxu0
    %2718 = vmatprep.mubr.f32.mxu0 0.0
    %2719 = vmatmul.mubr.f32.gmra.mxu0 %v2274
    %v2720 = vpop.f32.mrf.mxu0
    %v2721 = vadd.f32 %v2496, %v2720
    %v2722 = vpop.f32.mrf.mxu0
    %2723 = vmatprep.mubr.f32.mxu0 0.0
    %2724 = vmatmul.mubr.f32.gmra.mxu0 %v2277
    %v2725 = vpop.f32.mrf.mxu0
    %v2726 = vadd.f32 %v2501, %v2725
    %v2727 = vpop.f32.mrf.mxu0
    %2728 = vmatprep.mubr.f32.mxu0 0.0
    %2729 = vmatmul.mubr.f32.gmra.mxu0 %v2280
    %v2730 = vpop.f32.mrf.mxu0
    %v2731 = vadd.f32 %v2506, %v2730
    %v2732 = vpop.f32.mrf.mxu0
    %2733 = vmatprep.mubr.f32.mxu0 0.0
    %2734 = vmatmul.mubr.f32.gmra.mxu0 %v2283
    %v2735 = vpop.f32.mrf.mxu0
    %v2736 = vadd.f32 %v2511, %v2735
    %v2737 = vpop.f32.mrf.mxu0
    %2738 = vmatprep.mubr.f32.mxu0 0.0
    %2739 = vmatmul.mubr.f32.gmra.mxu0 %v2286
    %v2740 = vpop.f32.mrf.mxu0
    %v2741 = vadd.f32 %v2516, %v2740
    %v2742 = vpop.f32.mrf.mxu0
    %2743 = vmatprep.mubr.f32.mxu0 0.0
    %2744 = vmatmul.mubr.f32.gmra.mxu0 %v2289
    %v2745 = vpop.f32.mrf.mxu0
    %v2746 = vadd.f32 %v2521, %v2745
    %v2747 = vpop.f32.mrf.mxu0
    %2748 = vmatprep.mubr.f32.mxu0 0.0
    %2749 = vmatmul.mubr.f32.gmra.mxu0 %v2292
    %v2750 = vpop.f32.mrf.mxu0
    %v2751 = vadd.f32 %v2526, %v2750
    %v2752 = vpop.f32.mrf.mxu0
    %2753 = vmatprep.mubr.f32.mxu0 0.0
    %2754 = vmatmul.mubr.f32.gmra.mxu0 %v2295
    %v2755 = vpop.f32.mrf.mxu0
    %v2756 = vadd.f32 %v2531, %v2755
    %v2757 = vpop.f32.mrf.mxu0
    %2758 = vmatprep.mubr.f32.mxu0 0.0
    %2759 = vmatmul.mubr.f32.gmra.mxu0 %v2298
    %v2760 = vpop.f32.mrf.mxu0
    %v2761 = vadd.f32 %v2536, %v2760
    %v2762 = vpop.f32.mrf.mxu0
    %2763 = vmatprep.mubr.f32.mxu0 0.0
    %2764 = vmatmul.mubr.f32.gmra.mxu0 %v2301
    %v2765 = vpop.f32.mrf.mxu0
    %v2766 = vadd.f32 %v2541, %v2765
    %v2767 = vpop.f32.mrf.mxu0
    %2768 = vmatprep.mubr.f32.mxu0 0.0
    %2769 = vmatmul.mubr.f32.gmra.mxu0 %v2304
    %v2770 = vpop.f32.mrf.mxu0
    %v2771 = vadd.f32 %v2546, %v2770
    %v2772 = vpop.f32.mrf.mxu0
    %2773 = vmatprep.mubr.f32.mxu0 0.0
    %2774 = vmatmul.mubr.f32.gmra.mxu0 %v2307
    %v2775 = vpop.f32.mrf.mxu0
    %v2776 = vadd.f32 %v2551, %v2775
    %v2777 = vpop.f32.mrf.mxu0
    %2778 = vmatprep.mubr.f32.mxu0 0.0
    %2779 = vmatmul.mubr.f32.gmra.mxu0 %v2310
    %v2780 = vpop.f32.mrf.mxu0
    %v2781 = vadd.f32 %v2556, %v2780
    %v2782 = vpop.f32.mrf.mxu0
    %2783 = vmatprep.mubr.f32.mxu0 0.0
    %2784 = vmatmul.mubr.f32.gmra.mxu0 %v2313
    %v2785 = vpop.f32.mrf.mxu0
    %v2786 = vadd.f32 %v2561, %v2785
    %v2787 = vpop.f32.mrf.mxu0
    %2788 = vmatprep.mubr.f32.mxu0 0.0
    %2789 = vmatmul.mubr.f32.gmra.mxu0 %v2316
    %v2790 = vpop.f32.mrf.mxu0
    %v2791 = vadd.f32 %v2566, %v2790
    %v2792 = vpop.f32.mrf.mxu0
    %2793 = vmatprep.mubr.f32.mxu0 0.0
    %2794 = vmatmul.mubr.f32.gmra.mxu0 %v2319
    %v2795 = vpop.f32.mrf.mxu0
    %v2796 = vadd.f32 %v2571, %v2795
    %v2797 = vpop.f32.mrf.mxu0
    %2798 = vmatprep.mubr.f32.mxu0 0.0
    %2799 = vmatmul.mubr.f32.gmra.mxu0 %v2322
    %v2800 = vpop.f32.mrf.mxu0
    %v2801 = vadd.f32 %v2576, %v2800
    %v2802 = vpop.f32.mrf.mxu0
    %2803 = vmatprep.mubr.f32.mxu0 0.0
    %2804 = vmatmul.mubr.f32.gmra.mxu0 %v2325
    %v2805 = vpop.f32.mrf.mxu0
    %v2806 = vadd.f32 %v2581, %v2805
    %v2807 = vpop.f32.mrf.mxu0
    %2808 = vmatprep.mubr.f32.mxu0 0.0
    %2809 = vmatmul.mubr.f32.gmra.mxu0 %v2328
    %v2810 = vpop.f32.mrf.mxu0
    %v2811 = vadd.f32 %v2586, %v2810
    %v2812 = vpop.f32.mrf.mxu0
    %2813 = vmatprep.mubr.f32.mxu0 0.0
    %2814 = vmatmul.mubr.f32.gmra.mxu0 %v2331
    %v2815 = vpop.f32.mrf.mxu0
    %v2816 = vadd.f32 %v2591, %v2815
    %v2817 = vpop.f32.mrf.mxu0
    %2818 = vmatprep.mubr.f32.mxu0 0.0
    %2819 = vmatmul.mubr.f32.gmra.mxu0 %v2334
    %v2820 = vpop.f32.mrf.mxu0
    %v2821 = vadd.f32 %v2596, %v2820
    %v2822 = vpop.f32.mrf.mxu0
    %2823 = vmatprep.mubr.f32.mxu0 0.0
    %2824 = vmatmul.mubr.f32.gmra.mxu0 %v2337
    %v2825 = vpop.f32.mrf.mxu0
    %v2826 = vadd.f32 %v2601, %v2825
    %v2827 = vpop.f32.mrf.mxu0
    %2828 = vmatprep.mubr.f32.mxu0 0.0
    %2829 = vmatmul.mubr.f32.gmra.mxu0 %v2340
    %v2830 = vpop.f32.mrf.mxu0
    %v2831 = vadd.f32 %v2606, %v2830
    %v2832 = vpop.f32.mrf.mxu0
    %2833 = vmatprep.mubr.f32.mxu0 0.0
    %2834 = vmatmul.mubr.f32.gmra.mxu0 %v2343
    %v2835 = vpop.f32.mrf.mxu0
    %v2836 = vadd.f32 %v2611, %v2835
    %v2837 = vpop.f32.mrf.mxu0
    %2838 = vmatprep.mubr.f32.mxu0 0.0
    %2839 = vmatmul.mubr.f32.gmra.mxu0 %v2346
    %v2840 = vpop.f32.mrf.mxu0
    %v2841 = vadd.f32 %v2616, %v2840
    %v2842 = vpop.f32.mrf.mxu0
    %2843 = vmatprep.mubr.f32.mxu0 0.0
    %2844 = vmatmul.mubr.f32.gmra.mxu0 %v2349
    %v2845 = vpop.f32.mrf.mxu0
    %v2846 = vadd.f32 %v2621, %v2845
    %v2847 = vpop.f32.mrf.mxu0
    %2848 = vmatprep.mubr.f32.mxu0 0.0
    %2849 = vmatmul.mubr.f32.gmra.mxu0 %v2352
    %v2850 = vpop.f32.mrf.mxu0
    %v2851 = vadd.f32 %v2626, %v2850
    %v2852 = vpop.f32.mrf.mxu0
    %2853 = vmatprep.mubr.f32.mxu0 0.0
    %2854 = vmatmul.mubr.f32.gmra.mxu0 %v2355
    %v2855 = vpop.f32.mrf.mxu0
    %v2856 = vadd.f32 %v2631, %v2855
    %v2857 = vpop.f32.mrf.mxu0
    %2858 = vmatprep.mubr.f32.mxu0 0.0
    %2859 = vmatmul.mubr.f32.gmra.mxu0 %v2358
    %v2860 = vpop.f32.mrf.mxu0
    %v2861 = vadd.f32 %v2636, %v2860
    %v2862 = vpop.f32.mrf.mxu0
    %2863 = vdwg.mxu0
    %vm2864 = vcmp.ge.f32.partialorder %v2706, 0.0
    %vm2865 = vcmp.ge.f32.partialorder %v2711, 0.0
    %vm2866 = vcmp.ge.f32.partialorder %v2716, 0.0
    %vm2867 = vcmp.ge.f32.partialorder %v2721, 0.0
    %vm2868 = vcmp.ge.f32.partialorder %v2726, 0.0
    %vm2869 = vcmp.ge.f32.partialorder %v2731, 0.0
    %vm2870 = vcmp.ge.f32.partialorder %v2736, 0.0
    %vm2871 = vcmp.ge.f32.partialorder %v2741, 0.0
    %vm2872 = vcmp.ge.f32.partialorder %v2746, 0.0
    %vm2873 = vcmp.ge.f32.partialorder %v2751, 0.0
    %vm2874 = vcmp.ge.f32.partialorder %v2756, 0.0
    %vm2875 = vcmp.ge.f32.partialorder %v2761, 0.0
    %vm2876 = vcmp.ge.f32.partialorder %v2766, 0.0
    %vm2877 = vcmp.ge.f32.partialorder %v2771, 0.0
    %vm2878 = vcmp.ge.f32.partialorder %v2776, 0.0
    %vm2879 = vcmp.ge.f32.partialorder %v2781, 0.0
    %vm2880 = vcmp.ge.f32.partialorder %v2786, 0.0
    %vm2881 = vcmp.ge.f32.partialorder %v2791, 0.0
    %vm2882 = vcmp.ge.f32.partialorder %v2796, 0.0
    %vm2883 = vcmp.ge.f32.partialorder %v2801, 0.0
    %vm2884 = vcmp.ge.f32.partialorder %v2806, 0.0
    %vm2885 = vcmp.ge.f32.partialorder %v2811, 0.0
    %vm2886 = vcmp.ge.f32.partialorder %v2816, 0.0
    %vm2887 = vcmp.ge.f32.partialorder %v2821, 0.0
    %vm2888 = vcmp.ge.f32.partialorder %v2826, 0.0
    %vm2889 = vcmp.ge.f32.partialorder %v2831, 0.0
    %vm2890 = vcmp.ge.f32.partialorder %v2836, 0.0
    %vm2891 = vcmp.ge.f32.partialorder %v2841, 0.0
    %vm2892 = vcmp.ge.f32.partialorder %v2846, 0.0
    %vm2893 = vcmp.ge.f32.partialorder %v2851, 0.0
    %vm2894 = vcmp.ge.f32.partialorder %v2856, 0.0
    %vm2895 = vcmp.ge.f32.partialorder %v2861, 0.0
    %v2896 = vmul.f32 %v2706, 0.01
    %v2897 = vmul.f32 %v2711, 0.01
    %v2898 = vmul.f32 %v2716, 0.01
    %v2899 = vmul.f32 %v2721, 0.01
    %v2900 = vmul.f32 %v2726, 0.01
    %v2901 = vmul.f32 %v2731, 0.01
    %v2902 = vmul.f32 %v2736, 0.01
    %v2903 = vmul.f32 %v2741, 0.01
    %v2904 = vmul.f32 %v2746, 0.01
    %v2905 = vmul.f32 %v2751, 0.01
    %v2906 = vmul.f32 %v2756, 0.01
    %v2907 = vmul.f32 %v2761, 0.01
    %v2908 = vmul.f32 %v2766, 0.01
    %v2909 = vmul.f32 %v2771, 0.01
    %v2910 = vmul.f32 %v2776, 0.01
    %v2911 = vmul.f32 %v2781, 0.01
    %v2912 = vmul.f32 %v2786, 0.01
    %v2913 = vmul.f32 %v2791, 0.01
    %v2914 = vmul.f32 %v2796, 0.01
    %v2915 = vmul.f32 %v2801, 0.01
    %v2916 = vmul.f32 %v2806, 0.01
    %v2917 = vmul.f32 %v2811, 0.01
    %v2918 = vmul.f32 %v2816, 0.01
    %v2919 = vmul.f32 %v2821, 0.01
    %v2920 = vmul.f32 %v2826, 0.01
    %v2921 = vmul.f32 %v2831, 0.01
    %v2922 = vmul.f32 %v2836, 0.01
    %v2923 = vmul.f32 %v2841, 0.01
    %v2924 = vmul.f32 %v2846, 0.01
    %v2925 = vmul.f32 %v2851, 0.01
    %v2926 = vmul.f32 %v2856, 0.01
    %v2927 = vmul.f32 %v2861, 0.01
    %v2928 = vsel %vm2864, %v2706, %v2896
    %v2929 = vsel %vm2865, %v2711, %v2897
    %v2930 = vsel %vm2866, %v2716, %v2898
    %v2931 = vsel %vm2867, %v2721, %v2899
    %v2932 = vsel %vm2868, %v2726, %v2900
    %v2933 = vsel %vm2869, %v2731, %v2901
    %v2934 = vsel %vm2870, %v2736, %v2902
    %v2935 = vsel %vm2871, %v2741, %v2903
    %v2936 = vsel %vm2872, %v2746, %v2904
    %v2937 = vsel %vm2873, %v2751, %v2905
    %v2938 = vsel %vm2874, %v2756, %v2906
    %v2939 = vsel %vm2875, %v2761, %v2907
    %v2940 = vsel %vm2876, %v2766, %v2908
    %v2941 = vsel %vm2877, %v2771, %v2909
    %v2942 = vsel %vm2878, %v2776, %v2910
    %v2943 = vsel %vm2879, %v2781, %v2911
    %v2944 = vsel %vm2880, %v2786, %v2912
    %v2945 = vsel %vm2881, %v2791, %v2913
    %v2946 = vsel %vm2882, %v2796, %v2914
    %v2947 = vsel %vm2883, %v2801, %v2915
    %v2948 = vsel %vm2884, %v2806, %v2916
    %v2949 = vsel %vm2885, %v2811, %v2917
    %v2950 = vsel %vm2886, %v2816, %v2918
    %v2951 = vsel %vm2887, %v2821, %v2919
    %v2952 = vsel %vm2888, %v2826, %v2920
    %v2953 = vsel %vm2889, %v2831, %v2921
    %v2954 = vsel %vm2890, %v2836, %v2922
    %v2955 = vsel %vm2891, %v2841, %v2923
    %v2956 = vsel %vm2892, %v2846, %v2924
    %v2957 = vsel %vm2893, %v2851, %v2925
    %v2958 = vsel %vm2894, %v2856, %v2926
    %v2959 = vsel %vm2895, %v2861, %v2927
    %v2960 = vld [vmem:[%s7] sm:$0xff]
    %v2961 = vld [vmem:[%s7 + $0x8] sm:$0xff]
    %v2962 = vld [vmem:[%s7 + $0x10] sm:$0xff]
    %v2963 = vld [vmem:[%s7 + $0x18] sm:$0xff]
    %v2964 = vld [vmem:[%s7 + $0x20] sm:$0xff]
    %v2965 = vld [vmem:[%s7 + $0x28] sm:$0xff]
    %v2966 = vld [vmem:[%s7 + $0x30] sm:$0xff]
    %v2967 = vld [vmem:[%s7 + $0x38] sm:$0xff]
    %v2968 = vld [vmem:[%s7 + $0x40] sm:$0xff]
    %v2969 = vld [vmem:[%s7 + $0x48] sm:$0xff]
    %v2970 = vld [vmem:[%s7 + $0x50] sm:$0xff]
    %v2971 = vld [vmem:[%s7 + $0x58] sm:$0xff]
    %v2972 = vld [vmem:[%s7 + $0x60] sm:$0xff]
    %v2973 = vld [vmem:[%s7 + $0x68] sm:$0xff]
    %v2974 = vld [vmem:[%s7 + $0x70] sm:$0xff]
    %v2975 = vld [vmem:[%s7 + $0x78] sm:$0xff]
    %v2976 = vld [vmem:[%s8] sm:$0x1]
    %v2978 = vlaneseq
    %v2979 = vshrl.u32 %v2978, 7
    %v2980 = vsub.s32 0, %v2979
    %v2981 = vrot.slane %v2976, %v2980
    %2983 = vmatprep.subr.mxu0 0.0
    %2984 = vmatpush1.msra.mxu0 %v2975
    %2985 = vmatprep.subr.mxu0 0.0
    %2986 = vmatpush1.msra.mxu0 %v2974
    %2987 = vmatprep.subr.mxu0 0.0
    %2988 = vmatpush1.msra.mxu0 %v2973
    %2989 = vmatprep.subr.mxu0 0.0
    %2990 = vmatpush1.msra.mxu0 %v2972
    %2991 = vmatprep.subr.mxu0 0.0
    %2992 = vmatpush1.msra.mxu0 %v2971
    %2993 = vmatprep.subr.mxu0 0.0
    %2994 = vmatpush1.msra.mxu0 %v2970
    %2995 = vmatprep.subr.mxu0 0.0
    %2996 = vmatpush1.msra.mxu0 %v2969
    %2997 = vmatprep.subr.mxu0 0.0
    %2998 = vmatpush1.msra.mxu0 %v2968
    %2999 = vmatprep.subr.mxu0 0.0
    %3000 = vmatpush1.msra.mxu0 %v2967
    %3001 = vmatprep.subr.mxu0 0.0
    %3002 = vmatpush1.msra.mxu0 %v2966
    %3003 = vmatprep.subr.mxu0 0.0
    %3004 = vmatpush1.msra.mxu0 %v2965
    %3005 = vmatprep.subr.mxu0 0.0
    %3006 = vmatpush1.msra.mxu0 %v2964
    %3007 = vmatprep.subr.mxu0 0.0
    %3008 = vmatpush1.msra.mxu0 %v2963
    %3009 = vmatprep.subr.mxu0 0.0
    %3010 = vmatpush1.msra.mxu0 %v2962
    %3011 = vmatprep.subr.mxu0 0.0
    %3012 = vmatpush1.msra.mxu0 %v2961
    %3013 = vmatprep.subr.mxu0 0.0
    %3014 = vmatpush1.msra.mxu0 %v2960
    %3015 = vmatprep.subr.mxu0 0.0
    %3016 = vmatpush2.msra.mxu0 0.0
    %3017 = vmatprep.subr.mxu0 0.0
    %3018 = vmatpush2.msra.mxu0 0.0
    %3019 = vmatprep.subr.mxu0 0.0
    %3020 = vmatpush2.msra.mxu0 0.0
    %3021 = vmatprep.subr.mxu0 0.0
    %3022 = vmatpush2.msra.mxu0 0.0
    %3023 = vmatprep.subr.mxu0 0.0
    %3024 = vmatpush2.msra.mxu0 0.0
    %3025 = vmatprep.subr.mxu0 0.0
    %3026 = vmatpush2.msra.mxu0 0.0
    %3027 = vmatprep.subr.mxu0 0.0
    %3028 = vmatpush2.msra.mxu0 0.0
    %3029 = vmatprep.subr.mxu0 0.0
    %3030 = vmatpush2.msra.mxu0 0.0
    %3031 = vmatprep.subr.mxu0 0.0
    %3032 = vmatpush2.msra.mxu0 0.0
    %3033 = vmatprep.subr.mxu0 0.0
    %3034 = vmatpush2.msra.mxu0 0.0
    %3035 = vmatprep.subr.mxu0 0.0
    %3036 = vmatpush2.msra.mxu0 0.0
    %3037 = vmatprep.subr.mxu0 0.0
    %3038 = vmatpush2.msra.mxu0 0.0
    %3039 = vmatprep.subr.mxu0 0.0
    %3040 = vmatpush2.msra.mxu0 0.0
    %3041 = vmatprep.subr.mxu0 0.0
    %3042 = vmatpush2.msra.mxu0 0.0
    %3043 = vmatprep.subr.mxu0 0.0
    %3044 = vmatpush2.msra.mxu0 0.0
    %3045 = vmatprep.subr.mxu0 0.0
    %3046 = vmatpush2.msra.mxu0 0.0
    %3047 = vmatprep.mubr.f32.mxu0 0.0
    %3048 = vmatmul.mubr.f32.gmra.mxu0 %v2928
    %v3049 = vpop.f32.mrf.mxu0
    %v3050 = vadd.f32 %v2981, %v3049
    %v3051 = vpop.f32.mrf.mxu0
    %3052 = vmatprep.mubr.f32.mxu0 0.0
    %3053 = vmatmul.mubr.f32.gmra.mxu0 %v2929
    %v3054 = vpop.f32.mrf.mxu0
    %v3055 = vadd.f32 %v2981, %v3054
    %v3056 = vpop.f32.mrf.mxu0
    %3057 = vmatprep.mubr.f32.mxu0 0.0
    %3058 = vmatmul.mubr.f32.gmra.mxu0 %v2930
    %v3059 = vpop.f32.mrf.mxu0
    %v3060 = vadd.f32 %v2981, %v3059
    %v3061 = vpop.f32.mrf.mxu0
    %3062 = vmatprep.mubr.f32.mxu0 0.0
    %3063 = vmatmul.mubr.f32.gmra.mxu0 %v2931
    %v3064 = vpop.f32.mrf.mxu0
    %v3065 = vadd.f32 %v2981, %v3064
    %v3066 = vpop.f32.mrf.mxu0
    %3067 = vmatprep.mubr.f32.mxu0 0.0
    %3068 = vmatmul.mubr.f32.gmra.mxu0 %v2932
    %v3069 = vpop.f32.mrf.mxu0
    %v3070 = vadd.f32 %v2981, %v3069
    %v3071 = vpop.f32.mrf.mxu0
    %3072 = vmatprep.mubr.f32.mxu0 0.0
    %3073 = vmatmul.mubr.f32.gmra.mxu0 %v2933
    %v3074 = vpop.f32.mrf.mxu0
    %v3075 = vadd.f32 %v2981, %v3074
    %v3076 = vpop.f32.mrf.mxu0
    %3077 = vmatprep.mubr.f32.mxu0 0.0
    %3078 = vmatmul.mubr.f32.gmra.mxu0 %v2934
    %v3079 = vpop.f32.mrf.mxu0
    %v3080 = vadd.f32 %v2981, %v3079
    %v3081 = vpop.f32.mrf.mxu0
    %3082 = vmatprep.mubr.f32.mxu0 0.0
    %3083 = vmatmul.mubr.f32.gmra.mxu0 %v2935
    %v3084 = vpop.f32.mrf.mxu0
    %v3085 = vadd.f32 %v2981, %v3084
    %v3086 = vpop.f32.mrf.mxu0
    %3087 = vmatprep.mubr.f32.mxu0 0.0
    %3088 = vmatmul.mubr.f32.gmra.mxu0 %v2936
    %v3089 = vpop.f32.mrf.mxu0
    %v3090 = vadd.f32 %v2981, %v3089
    %v3091 = vpop.f32.mrf.mxu0
    %3092 = vmatprep.mubr.f32.mxu0 0.0
    %3093 = vmatmul.mubr.f32.gmra.mxu0 %v2937
    %v3094 = vpop.f32.mrf.mxu0
    %v3095 = vadd.f32 %v2981, %v3094
    %v3096 = vpop.f32.mrf.mxu0
    %3097 = vmatprep.mubr.f32.mxu0 0.0
    %3098 = vmatmul.mubr.f32.gmra.mxu0 %v2938
    %v3099 = vpop.f32.mrf.mxu0
    %v3100 = vadd.f32 %v2981, %v3099
    %v3101 = vpop.f32.mrf.mxu0
    %3102 = vmatprep.mubr.f32.mxu0 0.0
    %3103 = vmatmul.mubr.f32.gmra.mxu0 %v2939
    %v3104 = vpop.f32.mrf.mxu0
    %v3105 = vadd.f32 %v2981, %v3104
    %v3106 = vpop.f32.mrf.mxu0
    %3107 = vmatprep.mubr.f32.mxu0 0.0
    %3108 = vmatmul.mubr.f32.gmra.mxu0 %v2940
    %v3109 = vpop.f32.mrf.mxu0
    %v3110 = vadd.f32 %v2981, %v3109
    %v3111 = vpop.f32.mrf.mxu0
    %3112 = vmatprep.mubr.f32.mxu0 0.0
    %3113 = vmatmul.mubr.f32.gmra.mxu0 %v2941
    %v3114 = vpop.f32.mrf.mxu0
    %v3115 = vadd.f32 %v2981, %v3114
    %v3116 = vpop.f32.mrf.mxu0
    %3117 = vmatprep.mubr.f32.mxu0 0.0
    %3118 = vmatmul.mubr.f32.gmra.mxu0 %v2942
    %v3119 = vpop.f32.mrf.mxu0
    %v3120 = vadd.f32 %v2981, %v3119
    %v3121 = vpop.f32.mrf.mxu0
    %3122 = vmatprep.mubr.f32.mxu0 0.0
    %3123 = vmatmul.mubr.f32.gmra.mxu0 %v2943
    %v3124 = vpop.f32.mrf.mxu0
    %v3125 = vadd.f32 %v2981, %v3124
    %v3126 = vpop.f32.mrf.mxu0
    %3127 = vmatprep.mubr.f32.mxu0 0.0
    %3128 = vmatmul.mubr.f32.gmra.mxu0 %v2944
    %v3129 = vpop.f32.mrf.mxu0
    %v3130 = vadd.f32 %v2981, %v3129
    %v3131 = vpop.f32.mrf.mxu0
    %3132 = vmatprep.mubr.f32.mxu0 0.0
    %3133 = vmatmul.mubr.f32.gmra.mxu0 %v2945
    %v3134 = vpop.f32.mrf.mxu0
    %v3135 = vadd.f32 %v2981, %v3134
    %v3136 = vpop.f32.mrf.mxu0
    %3137 = vmatprep.mubr.f32.mxu0 0.0
    %3138 = vmatmul.mubr.f32.gmra.mxu0 %v2946
    %v3139 = vpop.f32.mrf.mxu0
    %v3140 = vadd.f32 %v2981, %v3139
    %v3141 = vpop.f32.mrf.mxu0
    %3142 = vmatprep.mubr.f32.mxu0 0.0
    %3143 = vmatmul.mubr.f32.gmra.mxu0 %v2947
    %v3144 = vpop.f32.mrf.mxu0
    %v3145 = vadd.f32 %v2981, %v3144
    %v3146 = vpop.f32.mrf.mxu0
    %3147 = vmatprep.mubr.f32.mxu0 0.0
    %3148 = vmatmul.mubr.f32.gmra.mxu0 %v2948
    %v3149 = vpop.f32.mrf.mxu0
    %v3150 = vadd.f32 %v2981, %v3149
    %v3151 = vpop.f32.mrf.mxu0
    %3152 = vmatprep.mubr.f32.mxu0 0.0
    %3153 = vmatmul.mubr.f32.gmra.mxu0 %v2949
    %v3154 = vpop.f32.mrf.mxu0
    %v3155 = vadd.f32 %v2981, %v3154
    %v3156 = vpop.f32.mrf.mxu0
    %3157 = vmatprep.mubr.f32.mxu0 0.0
    %3158 = vmatmul.mubr.f32.gmra.mxu0 %v2950
    %v3159 = vpop.f32.mrf.mxu0
    %v3160 = vadd.f32 %v2981, %v3159
    %v3161 = vpop.f32.mrf.mxu0
    %3162 = vmatprep.mubr.f32.mxu0 0.0
    %3163 = vmatmul.mubr.f32.gmra.mxu0 %v2951
    %v3164 = vpop.f32.mrf.mxu0
    %v3165 = vadd.f32 %v2981, %v3164
    %v3166 = vpop.f32.mrf.mxu0
    %3167 = vmatprep.mubr.f32.mxu0 0.0
    %3168 = vmatmul.mubr.f32.gmra.mxu0 %v2952
    %v3169 = vpop.f32.mrf.mxu0
    %v3170 = vadd.f32 %v2981, %v3169
    %v3171 = vpop.f32.mrf.mxu0
    %3172 = vmatprep.mubr.f32.mxu0 0.0
    %3173 = vmatmul.mubr.f32.gmra.mxu0 %v2953
    %v3174 = vpop.f32.mrf.mxu0
    %v3175 = vadd.f32 %v2981, %v3174
    %v3176 = vpop.f32.mrf.mxu0
    %3177 = vmatprep.mubr.f32.mxu0 0.0
    %3178 = vmatmul.mubr.f32.gmra.mxu0 %v2954
    %v3179 = vpop.f32.mrf.mxu0
    %v3180 = vadd.f32 %v2981, %v3179
    %v3181 = vpop.f32.mrf.mxu0
    %3182 = vmatprep.mubr.f32.mxu0 0.0
    %3183 = vmatmul.mubr.f32.gmra.mxu0 %v2955
    %v3184 = vpop.f32.mrf.mxu0
    %v3185 = vadd.f32 %v2981, %v3184
    %v3186 = vpop.f32.mrf.mxu0
    %3187 = vmatprep.mubr.f32.mxu0 0.0
    %3188 = vmatmul.mubr.f32.gmra.mxu0 %v2956
    %v3189 = vpop.f32.mrf.mxu0
    %v3190 = vadd.f32 %v2981, %v3189
    %v3191 = vpop.f32.mrf.mxu0
    %3192 = vmatprep.mubr.f32.mxu0 0.0
    %3193 = vmatmul.mubr.f32.gmra.mxu0 %v2957
    %v3194 = vpop.f32.mrf.mxu0
    %v3195 = vadd.f32 %v2981, %v3194
    %v3196 = vpop.f32.mrf.mxu0
    %3197 = vmatprep.mubr.f32.mxu0 0.0
    %3198 = vmatmul.mubr.f32.gmra.mxu0 %v2958
    %v3199 = vpop.f32.mrf.mxu0
    %v3200 = vadd.f32 %v2981, %v3199
    %v3201 = vpop.f32.mrf.mxu0
    %3202 = vmatprep.mubr.f32.mxu0 0.0
    %3203 = vmatmul.mubr.f32.gmra.mxu0 %v2959
    %v3204 = vpop.f32.mrf.mxu0
    %v3205 = vadd.f32 %v2981, %v3204
    %v3206 = vpop.f32.mrf.mxu0
    %3207 = vdwg.mxu0
    %vm3208 = vcmp.ge.f32.partialorder %v3050, 0.0
    %vm3209 = vcmp.ge.f32.partialorder %v3055, 0.0
    %vm3210 = vcmp.ge.f32.partialorder %v3060, 0.0
    %vm3211 = vcmp.ge.f32.partialorder %v3065, 0.0
    %vm3212 = vcmp.ge.f32.partialorder %v3070, 0.0
    %vm3213 = vcmp.ge.f32.partialorder %v3075, 0.0
    %vm3214 = vcmp.ge.f32.partialorder %v3080, 0.0
    %vm3215 = vcmp.ge.f32.partialorder %v3085, 0.0
    %vm3216 = vcmp.ge.f32.partialorder %v3090, 0.0
    %vm3217 = vcmp.ge.f32.partialorder %v3095, 0.0
    %vm3218 = vcmp.ge.f32.partialorder %v3100, 0.0
    %vm3219 = vcmp.ge.f32.partialorder %v3105, 0.0
    %vm3220 = vcmp.ge.f32.partialorder %v3110, 0.0
    %vm3221 = vcmp.ge.f32.partialorder %v3115, 0.0
    %vm3222 = vcmp.ge.f32.partialorder %v3120, 0.0
    %vm3223 = vcmp.ge.f32.partialorder %v3125, 0.0
    %vm3224 = vcmp.ge.f32.partialorder %v3130, 0.0
    %vm3225 = vcmp.ge.f32.partialorder %v3135, 0.0
    %vm3226 = vcmp.ge.f32.partialorder %v3140, 0.0
    %vm3227 = vcmp.ge.f32.partialorder %v3145, 0.0
    %vm3228 = vcmp.ge.f32.partialorder %v3150, 0.0
    %vm3229 = vcmp.ge.f32.partialorder %v3155, 0.0
    %vm3230 = vcmp.ge.f32.partialorder %v3160, 0.0
    %vm3231 = vcmp.ge.f32.partialorder %v3165, 0.0
    %vm3232 = vcmp.ge.f32.partialorder %v3170, 0.0
    %vm3233 = vcmp.ge.f32.partialorder %v3175, 0.0
    %vm3234 = vcmp.ge.f32.partialorder %v3180, 0.0
    %vm3235 = vcmp.ge.f32.partialorder %v3185, 0.0
    %vm3236 = vcmp.ge.f32.partialorder %v3190, 0.0
    %vm3237 = vcmp.ge.f32.partialorder %v3195, 0.0
    %vm3238 = vcmp.ge.f32.partialorder %v3200, 0.0
    %vm3239 = vcmp.ge.f32.partialorder %v3205, 0.0
    %v3240 = vmul.f32 %v3050, 0.01
    %v3241 = vmul.f32 %v3055, 0.01
    %v3242 = vmul.f32 %v3060, 0.01
    %v3243 = vmul.f32 %v3065, 0.01
    %v3244 = vmul.f32 %v3070, 0.01
    %v3245 = vmul.f32 %v3075, 0.01
    %v3246 = vmul.f32 %v3080, 0.01
    %v3247 = vmul.f32 %v3085, 0.01
    %v3248 = vmul.f32 %v3090, 0.01
    %v3249 = vmul.f32 %v3095, 0.01
    %v3250 = vmul.f32 %v3100, 0.01
    %v3251 = vmul.f32 %v3105, 0.01
    %v3252 = vmul.f32 %v3110, 0.01
    %v3253 = vmul.f32 %v3115, 0.01
    %v3254 = vmul.f32 %v3120, 0.01
    %v3255 = vmul.f32 %v3125, 0.01
    %v3256 = vmul.f32 %v3130, 0.01
    %v3257 = vmul.f32 %v3135, 0.01
    %v3258 = vmul.f32 %v3140, 0.01
    %v3259 = vmul.f32 %v3145, 0.01
    %v3260 = vmul.f32 %v3150, 0.01
    %v3261 = vmul.f32 %v3155, 0.01
    %v3262 = vmul.f32 %v3160, 0.01
    %v3263 = vmul.f32 %v3165, 0.01
    %v3264 = vmul.f32 %v3170, 0.01
    %v3265 = vmul.f32 %v3175, 0.01
    %v3266 = vmul.f32 %v3180, 0.01
    %v3267 = vmul.f32 %v3185, 0.01
    %v3268 = vmul.f32 %v3190, 0.01
    %v3269 = vmul.f32 %v3195, 0.01
    %v3270 = vmul.f32 %v3200, 0.01
    %v3271 = vmul.f32 %v3205, 0.01
    %v3272 = vsel %vm3208, %v3050, %v3240
    %v3273 = vsel %vm3209, %v3055, %v3241
    %v3274 = vsel %vm3210, %v3060, %v3242
    %v3275 = vsel %vm3211, %v3065, %v3243
    %v3276 = vsel %vm3212, %v3070, %v3244
    %v3277 = vsel %vm3213, %v3075, %v3245
    %v3278 = vsel %vm3214, %v3080, %v3246
    %v3279 = vsel %vm3215, %v3085, %v3247
    %v3280 = vsel %vm3216, %v3090, %v3248
    %v3281 = vsel %vm3217, %v3095, %v3249
    %v3282 = vsel %vm3218, %v3100, %v3250
    %v3283 = vsel %vm3219, %v3105, %v3251
    %v3284 = vsel %vm3220, %v3110, %v3252
    %v3285 = vsel %vm3221, %v3115, %v3253
    %v3286 = vsel %vm3222, %v3120, %v3254
    %v3287 = vsel %vm3223, %v3125, %v3255
    %v3288 = vsel %vm3224, %v3130, %v3256
    %v3289 = vsel %vm3225, %v3135, %v3257
    %v3290 = vsel %vm3226, %v3140, %v3258
    %v3291 = vsel %vm3227, %v3145, %v3259
    %v3292 = vsel %vm3228, %v3150, %v3260
    %v3293 = vsel %vm3229, %v3155, %v3261
    %v3294 = vsel %vm3230, %v3160, %v3262
    %v3295 = vsel %vm3231, %v3165, %v3263
    %v3296 = vsel %vm3232, %v3170, %v3264
    %v3297 = vsel %vm3233, %v3175, %v3265
    %v3298 = vsel %vm3234, %v3180, %v3266
    %v3299 = vsel %vm3235, %v3185, %v3267
    %v3300 = vsel %vm3236, %v3190, %v3268
    %v3301 = vsel %vm3237, %v3195, %v3269
    %v3302 = vsel %vm3238, %v3200, %v3270
    %v3303 = vsel %vm3239, %v3205, %v3271
    %v3304 = vld [vmem:[%s9] sm:$0xff]
    %v3305 = vld [vmem:[%s9 + $0x8] sm:$0xff]
    %v3306 = vld [vmem:[%s9 + $0x10] sm:$0xff]
    %v3307 = vld [vmem:[%s9 + $0x18] sm:$0xff]
    %v3308 = vld [vmem:[%s9 + $0x20] sm:$0xff]
    %v3309 = vld [vmem:[%s9 + $0x28] sm:$0xff]
    %v3310 = vld [vmem:[%s9 + $0x30] sm:$0xff]
    %v3311 = vld [vmem:[%s9 + $0x38] sm:$0xff]
    %v3312 = vld [vmem:[%s9 + $0x40] sm:$0xff]
    %v3313 = vld [vmem:[%s9 + $0x48] sm:$0xff]
    %v3314 = vld [vmem:[%s9 + $0x50] sm:$0xff]
    %v3315 = vld [vmem:[%s9 + $0x58] sm:$0xff]
    %v3316 = vld [vmem:[%s9 + $0x60] sm:$0xff]
    %v3317 = vld [vmem:[%s9 + $0x68] sm:$0xff]
    %v3318 = vld [vmem:[%s9 + $0x70] sm:$0xff]
    %v3319 = vld [vmem:[%s9 + $0x78] sm:$0xff]
    %v3320 = vld [vmem:[%s10] sm:$0x1]
    %v3322 = vlaneseq
    %v3323 = vshrl.u32 %v3322, 7
    %v3324 = vsub.s32 0, %v3323
    %v3325 = vrot.slane %v3320, %v3324
    %3327 = vmatprep.subr.mxu0 0.0
    %3328 = vmatpush1.msra.mxu0 %v3319
    %3329 = vmatprep.subr.mxu0 0.0
    %3330 = vmatpush1.msra.mxu0 %v3318
    %3331 = vmatprep.subr.mxu0 0.0
    %3332 = vmatpush1.msra.mxu0 %v3317
    %3333 = vmatprep.subr.mxu0 0.0
    %3334 = vmatpush1.msra.mxu0 %v3316
    %3335 = vmatprep.subr.mxu0 0.0
    %3336 = vmatpush1.msra.mxu0 %v3315
    %3337 = vmatprep.subr.mxu0 0.0
    %3338 = vmatpush1.msra.mxu0 %v3314
    %3339 = vmatprep.subr.mxu0 0.0
    %3340 = vmatpush1.msra.mxu0 %v3313
    %3341 = vmatprep.subr.mxu0 0.0
    %3342 = vmatpush1.msra.mxu0 %v3312
    %3343 = vmatprep.subr.mxu0 0.0
    %3344 = vmatpush1.msra.mxu0 %v3311
    %3345 = vmatprep.subr.mxu0 0.0
    %3346 = vmatpush1.msra.mxu0 %v3310
    %3347 = vmatprep.subr.mxu0 0.0
    %3348 = vmatpush1.msra.mxu0 %v3309
    %3349 = vmatprep.subr.mxu0 0.0
    %3350 = vmatpush1.msra.mxu0 %v3308
    %3351 = vmatprep.subr.mxu0 0.0
    %3352 = vmatpush1.msra.mxu0 %v3307
    %3353 = vmatprep.subr.mxu0 0.0
    %3354 = vmatpush1.msra.mxu0 %v3306
    %3355 = vmatprep.subr.mxu0 0.0
    %3356 = vmatpush1.msra.mxu0 %v3305
    %3357 = vmatprep.subr.mxu0 0.0
    %3358 = vmatpush1.msra.mxu0 %v3304
    %3359 = vmatprep.subr.mxu0 0.0
    %3360 = vmatpush2.msra.mxu0 0.0
    %3361 = vmatprep.subr.mxu0 0.0
    %3362 = vmatpush2.msra.mxu0 0.0
    %3363 = vmatprep.subr.mxu0 0.0
    %3364 = vmatpush2.msra.mxu0 0.0
    %3365 = vmatprep.subr.mxu0 0.0
    %3366 = vmatpush2.msra.mxu0 0.0
    %3367 = vmatprep.subr.mxu0 0.0
    %3368 = vmatpush2.msra.mxu0 0.0
    %3369 = vmatprep.subr.mxu0 0.0
    %3370 = vmatpush2.msra.mxu0 0.0
    %3371 = vmatprep.subr.mxu0 0.0
    %3372 = vmatpush2.msra.mxu0 0.0
    %3373 = vmatprep.subr.mxu0 0.0
    %3374 = vmatpush2.msra.mxu0 0.0
    %3375 = vmatprep.subr.mxu0 0.0
    %3376 = vmatpush2.msra.mxu0 0.0
    %3377 = vmatprep.subr.mxu0 0.0
    %3378 = vmatpush2.msra.mxu0 0.0
    %3379 = vmatprep.subr.mxu0 0.0
    %3380 = vmatpush2.msra.mxu0 0.0
    %3381 = vmatprep.subr.mxu0 0.0
    %3382 = vmatpush2.msra.mxu0 0.0
    %3383 = vmatprep.subr.mxu0 0.0
    %3384 = vmatpush2.msra.mxu0 0.0
    %3385 = vmatprep.subr.mxu0 0.0
    %3386 = vmatpush2.msra.mxu0 0.0
    %3387 = vmatprep.subr.mxu0 0.0
    %3388 = vmatpush2.msra.mxu0 0.0
    %3389 = vmatprep.subr.mxu0 0.0
    %3390 = vmatpush2.msra.mxu0 0.0
    %3391 = vmatprep.mubr.f32.mxu0 0.0
    %3392 = vmatmul.mubr.f32.gmra.mxu0 %v3272
    %v3393 = vpop.f32.mrf.mxu0
    %v3394 = vadd.f32 %v3325, %v3393
    %v3395 = vpop.f32.mrf.mxu0
    %3396 = vmatprep.mubr.f32.mxu0 0.0
    %3397 = vmatmul.mubr.f32.gmra.mxu0 %v3273
    %v3398 = vpop.f32.mrf.mxu0
    %v3399 = vadd.f32 %v3325, %v3398
    %v3400 = vpop.f32.mrf.mxu0
    %3401 = vmatprep.mubr.f32.mxu0 0.0
    %3402 = vmatmul.mubr.f32.gmra.mxu0 %v3274
    %v3403 = vpop.f32.mrf.mxu0
    %v3404 = vadd.f32 %v3325, %v3403
    %v3405 = vpop.f32.mrf.mxu0
    %3406 = vmatprep.mubr.f32.mxu0 0.0
    %3407 = vmatmul.mubr.f32.gmra.mxu0 %v3275
    %v3408 = vpop.f32.mrf.mxu0
    %v3409 = vadd.f32 %v3325, %v3408
    %v3410 = vpop.f32.mrf.mxu0
    %3411 = vmatprep.mubr.f32.mxu0 0.0
    %3412 = vmatmul.mubr.f32.gmra.mxu0 %v3276
    %v3413 = vpop.f32.mrf.mxu0
    %v3414 = vadd.f32 %v3325, %v3413
    %v3415 = vpop.f32.mrf.mxu0
    %3416 = vmatprep.mubr.f32.mxu0 0.0
    %3417 = vmatmul.mubr.f32.gmra.mxu0 %v3277
    %v3418 = vpop.f32.mrf.mxu0
    %v3419 = vadd.f32 %v3325, %v3418
    %v3420 = vpop.f32.mrf.mxu0
    %3421 = vmatprep.mubr.f32.mxu0 0.0
    %3422 = vmatmul.mubr.f32.gmra.mxu0 %v3278
    %v3423 = vpop.f32.mrf.mxu0
    %v3424 = vadd.f32 %v3325, %v3423
    %v3425 = vpop.f32.mrf.mxu0
    %3426 = vmatprep.mubr.f32.mxu0 0.0
    %3427 = vmatmul.mubr.f32.gmra.mxu0 %v3279
    %v3428 = vpop.f32.mrf.mxu0
    %v3429 = vadd.f32 %v3325, %v3428
    %v3430 = vpop.f32.mrf.mxu0
    %3431 = vmatprep.mubr.f32.mxu0 0.0
    %3432 = vmatmul.mubr.f32.gmra.mxu0 %v3280
    %v3433 = vpop.f32.mrf.mxu0
    %v3434 = vadd.f32 %v3325, %v3433
    %v3435 = vpop.f32.mrf.mxu0
    %3436 = vmatprep.mubr.f32.mxu0 0.0
    %3437 = vmatmul.mubr.f32.gmra.mxu0 %v3281
    %v3438 = vpop.f32.mrf.mxu0
    %v3439 = vadd.f32 %v3325, %v3438
    %v3440 = vpop.f32.mrf.mxu0
    %3441 = vmatprep.mubr.f32.mxu0 0.0
    %3442 = vmatmul.mubr.f32.gmra.mxu0 %v3282
    %v3443 = vpop.f32.mrf.mxu0
    %v3444 = vadd.f32 %v3325, %v3443
    %v3445 = vpop.f32.mrf.mxu0
    %3446 = vmatprep.mubr.f32.mxu0 0.0
    %3447 = vmatmul.mubr.f32.gmra.mxu0 %v3283
    %v3448 = vpop.f32.mrf.mxu0
    %v3449 = vadd.f32 %v3325, %v3448
    %v3450 = vpop.f32.mrf.mxu0
    %3451 = vmatprep.mubr.f32.mxu0 0.0
    %3452 = vmatmul.mubr.f32.gmra.mxu0 %v3284
    %v3453 = vpop.f32.mrf.mxu0
    %v3454 = vadd.f32 %v3325, %v3453
    %v3455 = vpop.f32.mrf.mxu0
    %3456 = vmatprep.mubr.f32.mxu0 0.0
    %3457 = vmatmul.mubr.f32.gmra.mxu0 %v3285
    %v3458 = vpop.f32.mrf.mxu0
    %v3459 = vadd.f32 %v3325, %v3458
    %v3460 = vpop.f32.mrf.mxu0
    %3461 = vmatprep.mubr.f32.mxu0 0.0
    %3462 = vmatmul.mubr.f32.gmra.mxu0 %v3286
    %v3463 = vpop.f32.mrf.mxu0
    %v3464 = vadd.f32 %v3325, %v3463
    %v3465 = vpop.f32.mrf.mxu0
    %3466 = vmatprep.mubr.f32.mxu0 0.0
    %3467 = vmatmul.mubr.f32.gmra.mxu0 %v3287
    %v3468 = vpop.f32.mrf.mxu0
    %v3469 = vadd.f32 %v3325, %v3468
    %v3470 = vpop.f32.mrf.mxu0
    %3471 = vmatprep.mubr.f32.mxu0 0.0
    %3472 = vmatmul.mubr.f32.gmra.mxu0 %v3288
    %v3473 = vpop.f32.mrf.mxu0
    %v3474 = vadd.f32 %v3325, %v3473
    %v3475 = vpop.f32.mrf.mxu0
    %3476 = vmatprep.mubr.f32.mxu0 0.0
    %3477 = vmatmul.mubr.f32.gmra.mxu0 %v3289
    %v3478 = vpop.f32.mrf.mxu0
    %v3479 = vadd.f32 %v3325, %v3478
    %v3480 = vpop.f32.mrf.mxu0
    %3481 = vmatprep.mubr.f32.mxu0 0.0
    %3482 = vmatmul.mubr.f32.gmra.mxu0 %v3290
    %v3483 = vpop.f32.mrf.mxu0
    %v3484 = vadd.f32 %v3325, %v3483
    %v3485 = vpop.f32.mrf.mxu0
    %3486 = vmatprep.mubr.f32.mxu0 0.0
    %3487 = vmatmul.mubr.f32.gmra.mxu0 %v3291
    %v3488 = vpop.f32.mrf.mxu0
    %v3489 = vadd.f32 %v3325, %v3488
    %v3490 = vpop.f32.mrf.mxu0
    %3491 = vmatprep.mubr.f32.mxu0 0.0
    %3492 = vmatmul.mubr.f32.gmra.mxu0 %v3292
    %v3493 = vpop.f32.mrf.mxu0
    %v3494 = vadd.f32 %v3325, %v3493
    %v3495 = vpop.f32.mrf.mxu0
    %3496 = vmatprep.mubr.f32.mxu0 0.0
    %3497 = vmatmul.mubr.f32.gmra.mxu0 %v3293
    %v3498 = vpop.f32.mrf.mxu0
    %v3499 = vadd.f32 %v3325, %v3498
    %v3500 = vpop.f32.mrf.mxu0
    %3501 = vmatprep.mubr.f32.mxu0 0.0
    %3502 = vmatmul.mubr.f32.gmra.mxu0 %v3294
    %v3503 = vpop.f32.mrf.mxu0
    %v3504 = vadd.f32 %v3325, %v3503
    %v3505 = vpop.f32.mrf.mxu0
    %3506 = vmatprep.mubr.f32.mxu0 0.0
    %3507 = vmatmul.mubr.f32.gmra.mxu0 %v3295
    %v3508 = vpop.f32.mrf.mxu0
    %v3509 = vadd.f32 %v3325, %v3508
    %v3510 = vpop.f32.mrf.mxu0
    %3511 = vmatprep.mubr.f32.mxu0 0.0
    %3512 = vmatmul.mubr.f32.gmra.mxu0 %v3296
    %v3513 = vpop.f32.mrf.mxu0
    %v3514 = vadd.f32 %v3325, %v3513
    %v3515 = vpop.f32.mrf.mxu0
    %3516 = vmatprep.mubr.f32.mxu0 0.0
    %3517 = vmatmul.mubr.f32.gmra.mxu0 %v3297
    %v3518 = vpop.f32.mrf.mxu0
    %v3519 = vadd.f32 %v3325, %v3518
    %v3520 = vpop.f32.mrf.mxu0
    %3521 = vmatprep.mubr.f32.mxu0 0.0
    %3522 = vmatmul.mubr.f32.gmra.mxu0 %v3298
    %v3523 = vpop.f32.mrf.mxu0
    %v3524 = vadd.f32 %v3325, %v3523
    %v3525 = vpop.f32.mrf.mxu0
    %3526 = vmatprep.mubr.f32.mxu0 0.0
    %3527 = vmatmul.mubr.f32.gmra.mxu0 %v3299
    %v3528 = vpop.f32.mrf.mxu0
    %v3529 = vadd.f32 %v3325, %v3528
    %v3530 = vpop.f32.mrf.mxu0
    %3531 = vmatprep.mubr.f32.mxu0 0.0
    %3532 = vmatmul.mubr.f32.gmra.mxu0 %v3300
    %v3533 = vpop.f32.mrf.mxu0
    %v3534 = vadd.f32 %v3325, %v3533
    %v3535 = vpop.f32.mrf.mxu0
    %3536 = vmatprep.mubr.f32.mxu0 0.0
    %3537 = vmatmul.mubr.f32.gmra.mxu0 %v3301
    %v3538 = vpop.f32.mrf.mxu0
    %v3539 = vadd.f32 %v3325, %v3538
    %v3540 = vpop.f32.mrf.mxu0
    %3541 = vmatprep.mubr.f32.mxu0 0.0
    %3542 = vmatmul.mubr.f32.gmra.mxu0 %v3302
    %v3543 = vpop.f32.mrf.mxu0
    %v3544 = vadd.f32 %v3325, %v3543
    %v3545 = vpop.f32.mrf.mxu0
    %3546 = vmatprep.mubr.f32.mxu0 0.0
    %3547 = vmatmul.mubr.f32.gmra.mxu0 %v3303
    %v3548 = vpop.f32.mrf.mxu0
    %v3549 = vadd.f32 %v3325, %v3548
    %v3550 = vpop.f32.mrf.mxu0
    %3551 = vdwg.mxu0
    %v3552 = vsub.f32 0.0, %v3394
    %v3553 = vsub.f32 0.0, %v3399
    %v3554 = vsub.f32 0.0, %v3404
    %v3555 = vsub.f32 0.0, %v3409
    %v3556 = vsub.f32 0.0, %v3414
    %v3557 = vsub.f32 0.0, %v3419
    %v3558 = vsub.f32 0.0, %v3424
    %v3559 = vsub.f32 0.0, %v3429
    %v3560 = vsub.f32 0.0, %v3434
    %v3561 = vsub.f32 0.0, %v3439
    %v3562 = vsub.f32 0.0, %v3444
    %v3563 = vsub.f32 0.0, %v3449
    %v3564 = vsub.f32 0.0, %v3454
    %v3565 = vsub.f32 0.0, %v3459
    %v3566 = vsub.f32 0.0, %v3464
    %v3567 = vsub.f32 0.0, %v3469
    %v3568 = vsub.f32 0.0, %v3474
    %v3569 = vsub.f32 0.0, %v3479
    %v3570 = vsub.f32 0.0, %v3484
    %v3571 = vsub.f32 0.0, %v3489
    %v3572 = vsub.f32 0.0, %v3494
    %v3573 = vsub.f32 0.0, %v3499
    %v3574 = vsub.f32 0.0, %v3504
    %v3575 = vsub.f32 0.0, %v3509
    %v3576 = vsub.f32 0.0, %v3514
    %v3577 = vsub.f32 0.0, %v3519
    %v3578 = vsub.f32 0.0, %v3524
    %v3579 = vsub.f32 0.0, %v3529
    %v3580 = vsub.f32 0.0, %v3534
    %v3581 = vsub.f32 0.0, %v3539
    %v3582 = vsub.f32 0.0, %v3544
    %v3583 = vsub.f32 0.0, %v3549
    %v3584 = vmul.f32 %v3552, 1.442695
    %v3585 = vpow.pop %v3584
    %v3586 = vmul.f32 %v3553, 1.442695
    %v3587 = vpow.pop %v3586
    %v3588 = vmul.f32 %v3554, 1.442695
    %v3589 = vpow.pop %v3588
    %v3590 = vmul.f32 %v3555, 1.442695
    %v3591 = vpow.pop %v3590
    %v3592 = vmul.f32 %v3556, 1.442695
    %v3593 = vpow.pop %v3592
    %v3594 = vmul.f32 %v3557, 1.442695
    %v3595 = vpow.pop %v3594
    %v3596 = vmul.f32 %v3558, 1.442695
    %v3597 = vpow.pop %v3596
    %v3598 = vmul.f32 %v3559, 1.442695
    %v3599 = vpow.pop %v3598
    %v3600 = vmul.f32 %v3560, 1.442695
    %v3601 = vpow.pop %v3600
    %v3602 = vmul.f32 %v3561, 1.442695
    %v3603 = vpow.pop %v3602
    %v3604 = vmul.f32 %v3562, 1.442695
    %v3605 = vpow.pop %v3604
    %v3606 = vmul.f32 %v3563, 1.442695
    %v3607 = vpow.pop %v3606
    %v3608 = vmul.f32 %v3564, 1.442695
    %v3609 = vpow.pop %v3608
    %v3610 = vmul.f32 %v3565, 1.442695
    %v3611 = vpow.pop %v3610
    %v3612 = vmul.f32 %v3566, 1.442695
    %v3613 = vpow.pop %v3612
    %v3614 = vmul.f32 %v3567, 1.442695
    %v3615 = vpow.pop %v3614
    %v3616 = vmul.f32 %v3568, 1.442695
    %v3617 = vpow.pop %v3616
    %v3618 = vmul.f32 %v3569, 1.442695
    %v3619 = vpow.pop %v3618
    %v3620 = vmul.f32 %v3570, 1.442695
    %v3621 = vpow.pop %v3620
    %v3622 = vmul.f32 %v3571, 1.442695
    %v3623 = vpow.pop %v3622
    %v3624 = vmul.f32 %v3572, 1.442695
    %v3625 = vpow.pop %v3624
    %v3626 = vmul.f32 %v3573, 1.442695
    %v3627 = vpow.pop %v3626
    %v3628 = vmul.f32 %v3574, 1.442695
    %v3629 = vpow.pop %v3628
    %v3630 = vmul.f32 %v3575, 1.442695
    %v3631 = vpow.pop %v3630
    %v3632 = vmul.f32 %v3576, 1.442695
    %v3633 = vpow.pop %v3632
    %v3634 = vmul.f32 %v3577, 1.442695
    %v3635 = vpow.pop %v3634
    %v3636 = vmul.f32 %v3578, 1.442695
    %v3637 = vpow.pop %v3636
    %v3638 = vmul.f32 %v3579, 1.442695
    %v3639 = vpow.pop %v3638
    %v3640 = vmul.f32 %v3580, 1.442695
    %v3641 = vpow.pop %v3640
    %v3642 = vmul.f32 %v3581, 1.442695
    %v3643 = vpow.pop %v3642
    %v3644 = vmul.f32 %v3582, 1.442695
    %v3645 = vpow.pop %v3644
    %v3646 = vmul.f32 %v3583, 1.442695
    %v3647 = vpow.pop %v3646
    %v3648 = vadd.f32 %v3585, 1.0
    %v3649 = vadd.f32 %v3587, 1.0
    %v3650 = vadd.f32 %v3589, 1.0
    %v3651 = vadd.f32 %v3591, 1.0
    %v3652 = vadd.f32 %v3593, 1.0
    %v3653 = vadd.f32 %v3595, 1.0
    %v3654 = vadd.f32 %v3597, 1.0
    %v3655 = vadd.f32 %v3599, 1.0
    %v3656 = vadd.f32 %v3601, 1.0
    %v3657 = vadd.f32 %v3603, 1.0
    %v3658 = vadd.f32 %v3605, 1.0
    %v3659 = vadd.f32 %v3607, 1.0
    %v3660 = vadd.f32 %v3609, 1.0
    %v3661 = vadd.f32 %v3611, 1.0
    %v3662 = vadd.f32 %v3613, 1.0
    %v3663 = vadd.f32 %v3615, 1.0
    %v3664 = vadd.f32 %v3617, 1.0
    %v3665 = vadd.f32 %v3619, 1.0
    %v3666 = vadd.f32 %v3621, 1.0
    %v3667 = vadd.f32 %v3623, 1.0
    %v3668 = vadd.f32 %v3625, 1.0
    %v3669 = vadd.f32 %v3627, 1.0
    %v3670 = vadd.f32 %v3629, 1.0
    %v3671 = vadd.f32 %v3631, 1.0
    %v3672 = vadd.f32 %v3633, 1.0
    %v3673 = vadd.f32 %v3635, 1.0
    %v3674 = vadd.f32 %v3637, 1.0
    %v3675 = vadd.f32 %v3639, 1.0
    %v3676 = vadd.f32 %v3641, 1.0
    %v3677 = vadd.f32 %v3643, 1.0
    %v3678 = vadd.f32 %v3645, 1.0
    %v3679 = vadd.f32 %v3647, 1.0
    %v3680 = vrcp.pop %v3648
    %v3681 = vrcp.pop %v3649
    %v3682 = vrcp.pop %v3650
    %v3683 = vrcp.pop %v3651
    %v3684 = vrcp.pop %v3652
    %v3685 = vrcp.pop %v3653
    %v3686 = vrcp.pop %v3654
    %v3687 = vrcp.pop %v3655
    %v3688 = vrcp.pop %v3656
    %v3689 = vrcp.pop %v3657
    %v3690 = vrcp.pop %v3658
    %v3691 = vrcp.pop %v3659
    %v3692 = vrcp.pop %v3660
    %v3693 = vrcp.pop %v3661
    %v3694 = vrcp.pop %v3662
    %v3695 = vrcp.pop %v3663
    %v3696 = vrcp.pop %v3664
    %v3697 = vrcp.pop %v3665
    %v3698 = vrcp.pop %v3666
    %v3699 = vrcp.pop %v3667
    %v3700 = vrcp.pop %v3668
    %v3701 = vrcp.pop %v3669
    %v3702 = vrcp.pop %v3670
    %v3703 = vrcp.pop %v3671
    %v3704 = vrcp.pop %v3672
    %v3705 = vrcp.pop %v3673
    %v3706 = vrcp.pop %v3674
    %v3707 = vrcp.pop %v3675
    %v3708 = vrcp.pop %v3676
    %v3709 = vrcp.pop %v3677
    %v3710 = vrcp.pop %v3678
    %v3711 = vrcp.pop %v3679
    %3712 = vst [vmem:[%s11] sm:$0xff] %v3680
    %3713 = vst [vmem:[%s11 + $0x8] sm:$0xff] %v3681
    %3714 = vst [vmem:[%s11 + $0x10] sm:$0xff] %v3682
    %3715 = vst [vmem:[%s11 + $0x18] sm:$0xff] %v3683
    %3716 = vst [vmem:[%s11 + $0x20] sm:$0xff] %v3684
    %3717 = vst [vmem:[%s11 + $0x28] sm:$0xff] %v3685
    %3718 = vst [vmem:[%s11 + $0x30] sm:$0xff] %v3686
    %3719 = vst [vmem:[%s11 + $0x38] sm:$0xff] %v3687
    %3720 = vst [vmem:[%s11 + $0x40] sm:$0xff] %v3688
    %3721 = vst [vmem:[%s11 + $0x48] sm:$0xff] %v3689
    %3722 = vst [vmem:[%s11 + $0x50] sm:$0xff] %v3690
    %3723 = vst [vmem:[%s11 + $0x58] sm:$0xff] %v3691
    %3724 = vst [vmem:[%s11 + $0x60] sm:$0xff] %v3692
    %3725 = vst [vmem:[%s11 + $0x68] sm:$0xff] %v3693
    %3726 = vst [vmem:[%s11 + $0x70] sm:$0xff] %v3694
    %3727 = vst [vmem:[%s11 + $0x78] sm:$0xff] %v3695
    %3728 = vst [vmem:[%s11 + $0x80] sm:$0xff] %v3696
    %3729 = vst [vmem:[%s11 + $0x88] sm:$0xff] %v3697
    %3730 = vst [vmem:[%s11 + $0x90] sm:$0xff] %v3698
    %3731 = vst [vmem:[%s11 + $0x98] sm:$0xff] %v3699
    %3732 = vst [vmem:[%s11 + $0xa0] sm:$0xff] %v3700
    %3733 = vst [vmem:[%s11 + $0xa8] sm:$0xff] %v3701
    %3734 = vst [vmem:[%s11 + $0xb0] sm:$0xff] %v3702
    %3735 = vst [vmem:[%s11 + $0xb8] sm:$0xff] %v3703
    %3736 = vst [vmem:[%s11 + $0xc0] sm:$0xff] %v3704
    %3737 = vst [vmem:[%s11 + $0xc8] sm:$0xff] %v3705
    %3738 = vst [vmem:[%s11 + $0xd0] sm:$0xff] %v3706
    %3739 = vst [vmem:[%s11 + $0xd8] sm:$0xff] %v3707
    %3740 = vst [vmem:[%s11 + $0xe0] sm:$0xff] %v3708
    %3741 = vst [vmem:[%s11 + $0xe8] sm:$0xff] %v3709
    %3742 = vst [vmem:[%s11 + $0xf0] sm:$0xff] %v3710
    %3743 = vst [vmem:[%s11 + $0xf8] sm:$0xff] %v3711
    // Predicated region
    $region58: #{temperature_tcn_forward.1} parent=1 // pred_check
      _
    $region59: #{temperature_tcn_forward.1} parent=1 // pred_check_branch
      %3745 = sbr.rel (0) target = $region61
    $region60: #{temperature_tcn_forward.1} parent=1 // pred_region
      _
    $region61: #{temperature_tcn_forward.1} parent=1 // pred_fallthru
      _
    // Predicated region
    $region62: #{temperature_tcn_forward.1} parent=1 // pred_check
      _
    $region63: #{temperature_tcn_forward.1} parent=1 // pred_check_branch
      %3747 = sbr.rel (0) target = $region65
    $region64: #{temperature_tcn_forward.1} parent=1 // pred_region
      _
    $region65: #{temperature_tcn_forward.1} parent=1 // pred_fallthru
      _
    %3748 = vsyncpa [#allocation3], 1
    %3749 = vsyncpa [#allocation5], 1

</llo_original>
